<compile_context>
chip_gen: v7x
topology: tpu7x:2x2x1
jax: 0.10.0
libtpu: 0.0.40
codegen_flags: <defaults>
</compile_context>

<pallas_src>
import jax
import jax.numpy as jnp
from jax.experimental import pallas as pl
from jax.experimental.pallas import tpu as pltpu

BN_EPS = 1e-5
Z_DIM = 128                       # args.z_dim == bottleneck_size
NUM_POINTS = 256                  # small synthetic setting
NB_PRIMITIVES = 2                 # args.atlas_baseline
BATCH = 2
PTS_PER_PRIM = NUM_POINTS // NB_PRIMITIVES   # 128

# Zero-padded decoder channel widths (real widths: 130 / 65 / 32)
DEC_C1 = 256
DEC_C2 = 128
DEC_C3 = 128


# ----------------------------------------------------------------------------
# Fused Pallas kernel: encoder + NB_PRIMITIVES decoders, one batch element/step
# ----------------------------------------------------------------------------
def _vae_kernel(x_ref, rg_ref,
                e_w1, e_b1, e_w2, e_b2, e_w3, e_b3, e_wf, e_bf,
                d_w1rg, d_w1z, d_b1, d_w2, d_b2, d_w3, d_b3, d_w4t, d_b4t,
                o_ref):
    # ---------------- encoder: PointNetfeat_ + Linear(1024, z) + BN + ReLU ----
    x = x_ref[0]                                            # (N, 3) f32
    # conv1 (3 -> 64): K=3, do it on the VPU as broadcast-FMAs (BN folded).
    h = (x[:, 0:1] * e_w1[0:1, :]
         + x[:, 1:2] * e_w1[1:2, :]
         + x[:, 2:3] * e_w1[2:3, :]) + e_b1[...]
    h = jnp.maximum(h, 0.0)                                 # (N, 64)
    h = jnp.dot(h.astype(jnp.bfloat16), e_w2[...],
                preferred_element_type=jnp.float32) + e_b2[...]
    h = jnp.maximum(h, 0.0)                                 # (N, 128)
    h = jnp.dot(h.astype(jnp.bfloat16), e_w3[...],
                preferred_element_type=jnp.float32) + e_b3[...]   # (N, 1024), bn3, no relu
    g = jnp.max(h, axis=0, keepdims=True)                   # (1, 1024) global max-pool
    z = jnp.dot(g.astype(jnp.bfloat16), e_wf[...],
                preferred_element_type=jnp.float32) + e_bf[...]
    z = jnp.maximum(z, 0.0)                                 # (1, Z_DIM)
    zb = z.astype(jnp.bfloat16)

    # ---------------- NB_PRIMITIVES x PointGenCon, unrolled --------------------
    for p in range(NB_PRIMITIVES):
        # z-dependent part of conv1: computed once per batch elem, broadcast over P rows.
        h1z = jnp.dot(zb, d_w1z[p],
                      preferred_element_type=jnp.float32) + d_b1[p]       # (1, C1)

        # rand_grid ~ U[0, 1), generated host-side, streamed in per batch element.
        rg = rg_ref[0, p]                                                 # (P, 2) f32

        w1rg = d_w1rg[p]                                                  # (2, C1)
        h1 = (rg[:, 0:1] * w1rg[0:1, :]
              + rg[:, 1:2] * w1rg[1:2, :]) + h1z                          # (P, C1)
        h1 = jnp.maximum(h1, 0.0)
        h2 = jnp.dot(h1.astype(jnp.bfloat16), d_w2[p],
                     preferred_element_type=jnp.float32) + d_b2[p]
        h2 = jnp.maximum(h2, 0.0)                                         # (P, C2)
        h3 = jnp.dot(h2.astype(jnp.bfloat16), d_w3[p],
                     preferred_element_type=jnp.float32) + d_b3[p]
        h3 = jnp.maximum(h3, 0.0)                                         # (P, C3)
        # conv4 + tanh, computed transposed so the store is lane-dense (3, P).
        o = jnp.dot(d_w4t[p], h3.T,
                    preferred_element_type=jnp.float32) + d_b4t[p]        # (3, P)
        o = jnp.tanh(o)
        o_ref[0, :, p * PTS_PER_PRIM:(p + 1) * PTS_PER_PRIM] = o


# ----------------------------------------------------------------------------
# pallas_call wrapper (the whole forward pass = one kernel launch)
# ----------------------------------------------------------------------------
def _rep_spec(shape):
    nd = len(shape)
    return pl.BlockSpec(shape, lambda b, _nd=nd: (0,) * _nd)


def vae_forward(x, rng_key, params):
    """x: (B, N, 3) f32, rng_key: PRNG key  ->  ((B, NUM_POINTS, 3), None)."""
    B, N, _ = x.shape
    enc, dec = params["enc"], params["dec"]

    # rand_grid ~ U[0, 1), same distribution as torch's .uniform_(0, 1).
    rand_grid = jax.random.uniform(
        rng_key, (B, NB_PRIMITIVES, PTS_PER_PRIM, 2), jnp.float32)

    args = [x, rand_grid,
            enc["w1"], enc["b1"], enc["w2"], enc["b2"],
            enc["w3"], enc["b3"], enc["wf"], enc["bf"],
            dec["w1rg"], dec["w1z"], dec["b1"], dec["w2"], dec["b2"],
            dec["w3"], dec["b3"], dec["w4t"], dec["b4t"]]
    in_specs = ([pl.BlockSpec((1, N, 3), lambda b: (b, 0, 0)),
                 pl.BlockSpec((1, NB_PRIMITIVES, PTS_PER_PRIM, 2),
                              lambda b: (b, 0, 0, 0))]
                + [_rep_spec(a.shape) for a in args[2:]])
    out = pl.pallas_call(
        _vae_kernel,
        out_shape=jax.ShapeDtypeStruct((B, 3, NUM_POINTS), jnp.float32),
        grid=(B,),
        in_specs=in_specs,
        out_specs=pl.BlockSpec((1, 3, NUM_POINTS), lambda b: (b, 0, 0)),
        compiler_params=pltpu.CompilerParams(dimension_semantics=("parallel",)),
    )(*args)
    # (B, 3, num_points) -> (B, num_points, 3), matching torch's .transpose(2, 1)
    return jnp.transpose(out, (0, 2, 1)), None


# ----------------------------------------------------------------------------
# Parameter construction (torch-like default inits, BN folded, decoder padded)
# ----------------------------------------------------------------------------
def _linear_init(key, fan_in, fan_out):
    kw, kb = jax.random.split(key)
    bound = 1.0 / float(fan_in) ** 0.5
    w = jax.random.uniform(kw, (fan_in, fan_out), jnp.float32, -bound, bound)
    b = jax.random.uniform(kb, (fan_out,), jnp.float32, -bound, bound)
    return w, b


def _fold_bn(w, b):
    # Eval-mode BatchNorm with torch defaults: gamma=1, beta=0, mean=0, var=1.
    # (x @ w + b) * s + t  ==  x @ (w * s) + (b * s + t)
    c = w.shape[1]
    gamma = jnp.ones((c,), jnp.float32)
    beta = jnp.zeros((c,), jnp.float32)
    rmean = jnp.zeros((c,), jnp.float32)
    rvar = jnp.ones((c,), jnp.float32)
    s = gamma / jnp.sqrt(rvar + BN_EPS)
    t = beta - rmean * s
    return w * s[None, :], b * s + t


def make_params(key):
    keys = iter(jax.random.split(key, 4 + 4 * NB_PRIMITIVES))

    # Encoder: PointNetfeat_ (3->64->128->1024) + Linear(1024, Z_DIM) + BN + ReLU
    w1, b1 = _fold_bn(*_linear_init(next(keys), 3, 64))
    w2, b2 = _fold_bn(*_linear_init(next(keys), 64, 128))
    w3, b3 = _fold_bn(*_linear_init(next(keys), 128, 1024))
    wf, bf = _fold_bn(*_linear_init(next(keys), 1024, Z_DIM))
    enc = dict(
        w1=w1, b1=b1[None, :],                                    # VPU path -> f32
        w2=w2.astype(jnp.bfloat16), b2=b2[None, :],
        w3=w3.astype(jnp.bfloat16), b3=b3[None, :],
        wf=wf.astype(jnp.bfloat16), bf=bf[None, :],
    )

    # Decoders: NB_PRIMITIVES x PointGenCon(bottleneck_size = 2 + Z_DIM)
    bs = 2 + Z_DIM                                                 # 130
    prims = []
    for _ in range(NB_PRIMITIVES):
        w1d, b1d = _fold_bn(*_linear_init(next(keys), bs, bs))          # 130 -> 130
        w2d, b2d = _fold_bn(*_linear_init(next(keys), bs, bs // 2))     # 130 -> 65
        w3d, b3d = _fold_bn(*_linear_init(next(keys), bs // 2, bs // 4))  # 65 -> 32
        w4d, b4d = _linear_init(next(keys), bs // 4, 3)                 # 32 -> 3 (no BN)
        prims.append(dict(
            # conv1 split into rand-grid rows (VPU, f32) and z rows (MXU, bf16),
            # zero-padded to lane-friendly widths (padded bias/cols are zero).
            w1rg=jnp.zeros((2, DEC_C1), jnp.float32).at[:, :bs].set(w1d[:2]),
            w1z=jnp.zeros((Z_DIM, DEC_C1), jnp.float32)
                .at[:, :bs].set(w1d[2:]).astype(jnp.bfloat16),
            b1=jnp.zeros((1, DEC_C1), jnp.float32).at[0, :bs].set(b1d),
            w2=jnp.zeros((DEC_C1, DEC_C2), jnp.float32)
                .at[:bs, :bs // 2].set(w2d).astype(jnp.bfloat16),
            b2=jnp.zeros((1, DEC_C2), jnp.float32).at[0, :bs // 2].set(b2d),
            w3=jnp.zeros((DEC_C2, DEC_C3), jnp.float32)
                .at[:bs // 2, :bs // 4].set(w3d).astype(jnp.bfloat16),
            b3=jnp.zeros((1, DEC_C3), jnp.float32).at[0, :bs // 4].set(b3d),
            w4t=jnp.zeros((3, DEC_C3), jnp.float32).at[:, :bs // 4].set(w4d.T),
            b4t=b4d[:, None],                                            # (3, 1)
        ))
    dec = {k: jnp.stack([p[k] for p in prims]) for k in prims[0]}
    return {"enc": enc, "dec": dec}


# ----------------------------------------------------------------------------
if __name__ == "__main__":
    root = jax.random.PRNGKey(0)
    k_param, k_x, k_rg = jax.random.split(root, 3)

    params = make_params(k_param)
    # input point cloud, channels-last (B, N, 3); torch's encode() transposes to (B, 3, N)
    x = jax.random.normal(k_x, (BATCH, NUM_POINTS, 3), jnp.float32)

    out, kl = vae_forward(x, k_rg, params)
    out = jax.block_until_ready(out)

    assert out.shape == (BATCH, NUM_POINTS, 3), out.shape
    assert kl is None
    assert bool(jnp.all(jnp.isfinite(out)))
    print("KERNEL_OK")
</pallas_src>

<mosaic_0001>
module attributes {stable_mosaic.version = 11 : i64} {
  func.func @_vae_kernel(%arg0: i32, %arg1: memref<1x256x3xf32, #tpu.memory_space<vmem>>, %arg2: memref<1x2x128x2xf32, #tpu.memory_space<vmem>>, %arg3: memref<3x64xf32, #tpu.memory_space<vmem>>, %arg4: memref<1x64xf32, #tpu.memory_space<vmem>>, %arg5: memref<64x128xbf16, #tpu.memory_space<vmem>>, %arg6: memref<1x128xf32, #tpu.memory_space<vmem>>, %arg7: memref<128x1024xbf16, #tpu.memory_space<vmem>>, %arg8: memref<1x1024xf32, #tpu.memory_space<vmem>>, %arg9: memref<1024x128xbf16, #tpu.memory_space<vmem>>, %arg10: memref<1x128xf32, #tpu.memory_space<vmem>>, %arg11: memref<2x2x256xf32, #tpu.memory_space<vmem>>, %arg12: memref<2x128x256xbf16, #tpu.memory_space<vmem>>, %arg13: memref<2x1x256xf32, #tpu.memory_space<vmem>>, %arg14: memref<2x256x128xbf16, #tpu.memory_space<vmem>>, %arg15: memref<2x1x128xf32, #tpu.memory_space<vmem>>, %arg16: memref<2x128x128xbf16, #tpu.memory_space<vmem>>, %arg17: memref<2x1x128xf32, #tpu.memory_space<vmem>>, %arg18: memref<2x3x128xf32, #tpu.memory_space<vmem>>, %arg19: memref<2x3x1xf32, #tpu.memory_space<vmem>>, %arg20: memref<1x3x256xf32, #tpu.memory_space<vmem>>) attributes {dimension_semantics = [#tpu.dimension_semantics<parallel>], iteration_bounds = array<i64: 2>, scalar_prefetch = 0 : i64, scratch_operands = 0 : i64, tpu.core_type = #tpu.core_type<tc>, window_params = [{transform_indices = @transform_0, window_bounds = array<i64: 1, 256, 3>}, {transform_indices = @transform_1, window_bounds = array<i64: 1, 2, 128, 2>}, {pipeline_mode = #tpu.pipeline_mode<synchronous>, transform_indices = @transform_2, window_bounds = array<i64: 3, 64>}, {pipeline_mode = #tpu.pipeline_mode<synchronous>, transform_indices = @transform_3, window_bounds = array<i64: 1, 64>}, {pipeline_mode = #tpu.pipeline_mode<synchronous>, transform_indices = @transform_4, window_bounds = array<i64: 64, 128>}, {pipeline_mode = #tpu.pipeline_mode<synchronous>, transform_indices = @transform_5, window_bounds = array<i64: 1, 128>}, {pipeline_mode = #tpu.pipeline_mode<synchronous>, transform_indices = @transform_6, window_bounds = array<i64: 128, 1024>}, {pipeline_mode = #tpu.pipeline_mode<synchronous>, transform_indices = @transform_7, window_bounds = array<i64: 1, 1024>}, {pipeline_mode = #tpu.pipeline_mode<synchronous>, transform_indices = @transform_8, window_bounds = array<i64: 1024, 128>}, {pipeline_mode = #tpu.pipeline_mode<synchronous>, transform_indices = @transform_9, window_bounds = array<i64: 1, 128>}, {pipeline_mode = #tpu.pipeline_mode<synchronous>, transform_indices = @transform_10, window_bounds = array<i64: 2, 2, 256>}, {pipeline_mode = #tpu.pipeline_mode<synchronous>, transform_indices = @transform_11, window_bounds = array<i64: 2, 128, 256>}, {pipeline_mode = #tpu.pipeline_mode<synchronous>, transform_indices = @transform_12, window_bounds = array<i64: 2, 1, 256>}, {pipeline_mode = #tpu.pipeline_mode<synchronous>, transform_indices = @transform_13, window_bounds = array<i64: 2, 256, 128>}, {pipeline_mode = #tpu.pipeline_mode<synchronous>, transform_indices = @transform_14, window_bounds = array<i64: 2, 1, 128>}, {pipeline_mode = #tpu.pipeline_mode<synchronous>, transform_indices = @transform_15, window_bounds = array<i64: 2, 128, 128>}, {pipeline_mode = #tpu.pipeline_mode<synchronous>, transform_indices = @transform_16, window_bounds = array<i64: 2, 1, 128>}, {pipeline_mode = #tpu.pipeline_mode<synchronous>, transform_indices = @transform_17, window_bounds = array<i64: 2, 3, 128>}, {pipeline_mode = #tpu.pipeline_mode<synchronous>, transform_indices = @transform_18, window_bounds = array<i64: 2, 3, 1>}, {transform_indices = @transform_19, window_bounds = array<i64: 1, 3, 256>}]} {
    %c0 = arith.constant 0 : index
    %c0_0 = arith.constant 0 : index
    %c0_1 = arith.constant 0 : index
    %0 = vector.load %arg1[%c0, %c0_0, %c0_1] : memref<1x256x3xf32, #tpu.memory_space<vmem>>, vector<1x256x3xf32>
    %1 = vector.shape_cast %0 : vector<1x256x3xf32> to vector<256x3xf32>
    %2 = vector.extract_strided_slice %1 {offsets = [0, 0], sizes = [256, 1], strides = [1, 1]} : vector<256x3xf32> to vector<256x1xf32>
    %c0_2 = arith.constant 0 : index
    %c0_3 = arith.constant 0 : index
    %3 = vector.load %arg3[%c0_2, %c0_3] : memref<3x64xf32, #tpu.memory_space<vmem>>, vector<1x64xf32>
    %4 = vector.broadcast %2 : vector<256x1xf32> to vector<256x64xf32>
    %5 = vector.broadcast %3 : vector<1x64xf32> to vector<256x64xf32>
    %6 = arith.mulf %4, %5 : vector<256x64xf32>
    %7 = vector.extract_strided_slice %1 {offsets = [0, 1], sizes = [256, 1], strides = [1, 1]} : vector<256x3xf32> to vector<256x1xf32>
    %c1 = arith.constant 1 : index
    %c0_4 = arith.constant 0 : index
    %8 = vector.load %arg3[%c1, %c0_4] : memref<3x64xf32, #tpu.memory_space<vmem>>, vector<1x64xf32>
    %9 = vector.broadcast %7 : vector<256x1xf32> to vector<256x64xf32>
    %10 = vector.broadcast %8 : vector<1x64xf32> to vector<256x64xf32>
    %11 = arith.mulf %9, %10 : vector<256x64xf32>
    %12 = arith.addf %6, %11 : vector<256x64xf32>
    %13 = vector.extract_strided_slice %1 {offsets = [0, 2], sizes = [256, 1], strides = [1, 1]} : vector<256x3xf32> to vector<256x1xf32>
    %c2 = arith.constant 2 : index
    %c0_5 = arith.constant 0 : index
    %14 = vector.load %arg3[%c2, %c0_5] : memref<3x64xf32, #tpu.memory_space<vmem>>, vector<1x64xf32>
    %15 = vector.broadcast %13 : vector<256x1xf32> to vector<256x64xf32>
    %16 = vector.broadcast %14 : vector<1x64xf32> to vector<256x64xf32>
    %17 = arith.mulf %15, %16 : vector<256x64xf32>
    %18 = arith.addf %12, %17 : vector<256x64xf32>
    %c0_6 = arith.constant 0 : index
    %c0_7 = arith.constant 0 : index
    %19 = vector.load %arg4[%c0_6, %c0_7] : memref<1x64xf32, #tpu.memory_space<vmem>>, vector<1x64xf32>
    %20 = vector.broadcast %19 : vector<1x64xf32> to vector<256x64xf32>
    %21 = arith.addf %18, %20 : vector<256x64xf32>
    %cst = arith.constant 0.000000e+00 : f32
    %22 = vector.broadcast %cst : f32 to vector<256x64xf32>
    %23 = arith.maximumf %21, %22 : vector<256x64xf32>
    %24 = arith.truncf %23 : vector<256x64xf32> to vector<256x64xbf16>
    %c0_8 = arith.constant 0 : index
    %c0_9 = arith.constant 0 : index
    %25 = vector.load %arg5[%c0_8, %c0_9] : memref<64x128xbf16, #tpu.memory_space<vmem>>, vector<64x128xbf16>
    %cst_10 = arith.constant dense<0.000000e+00> : vector<256x128xf32>
    %26 = tpu.matmul %24, %25, %cst_10 {dimension_numbers = #tpu.dot_dimension_numbers<[1], [0], [0], [1], [0, 0, 1, 1], [], []>} : vector<256x64xbf16>, vector<64x128xbf16>, vector<256x128xf32> -> vector<256x128xf32>
    %c0_11 = arith.constant 0 : index
    %c0_12 = arith.constant 0 : index
    %27 = vector.load %arg6[%c0_11, %c0_12] : memref<1x128xf32, #tpu.memory_space<vmem>>, vector<1x128xf32>
    %28 = vector.broadcast %27 : vector<1x128xf32> to vector<256x128xf32>
    %29 = arith.addf %26, %28 : vector<256x128xf32>
    %cst_13 = arith.constant 0.000000e+00 : f32
    %30 = vector.broadcast %cst_13 : f32 to vector<256x128xf32>
    %31 = arith.maximumf %29, %30 : vector<256x128xf32>
    %32 = arith.truncf %31 : vector<256x128xf32> to vector<256x128xbf16>
    %c0_14 = arith.constant 0 : index
    %c0_15 = arith.constant 0 : index
    %33 = vector.load %arg7[%c0_14, %c0_15] : memref<128x1024xbf16, #tpu.memory_space<vmem>>, vector<128x1024xbf16>
    %cst_16 = arith.constant dense<0.000000e+00> : vector<256x1024xf32>
    %34 = tpu.matmul %32, %33, %cst_16 {dimension_numbers = #tpu.dot_dimension_numbers<[1], [0], [0], [1], [0, 0, 1, 1], [], []>} : vector<256x128xbf16>, vector<128x1024xbf16>, vector<256x1024xf32> -> vector<256x1024xf32>
    %c0_17 = arith.constant 0 : index
    %c0_18 = arith.constant 0 : index
    %35 = vector.load %arg8[%c0_17, %c0_18] : memref<1x1024xf32, #tpu.memory_space<vmem>>, vector<1x1024xf32>
    %36 = vector.broadcast %35 : vector<1x1024xf32> to vector<256x1024xf32>
    %37 = arith.addf %34, %36 : vector<256x1024xf32>
    %cst_19 = arith.constant dense<0xFF800000> : vector<1024xf32>
    %38 = vector.multi_reduction <maximumf>, %37, %cst_19 [0] : vector<256x1024xf32> to vector<1024xf32>
    %39 = vector.shape_cast %38 : vector<1024xf32> to vector<1x1024xf32>
    %40 = arith.truncf %39 : vector<1x1024xf32> to vector<1x1024xbf16>
    %c0_20 = arith.constant 0 : index
    %c0_21 = arith.constant 0 : index
    %41 = vector.load %arg9[%c0_20, %c0_21] : memref<1024x128xbf16, #tpu.memory_space<vmem>>, vector<1024x128xbf16>
    %cst_22 = arith.constant dense<0.000000e+00> : vector<1x128xf32>
    %42 = tpu.matmul %40, %41, %cst_22 {dimension_numbers = #tpu.dot_dimension_numbers<[1], [0], [0], [1], [0, 0, 1, 1], [], []>} : vector<1x1024xbf16>, vector<1024x128xbf16>, vector<1x128xf32> -> vector<1x128xf32>
    %c0_23 = arith.constant 0 : index
    %c0_24 = arith.constant 0 : index
    %43 = vector.load %arg10[%c0_23, %c0_24] : memref<1x128xf32, #tpu.memory_space<vmem>>, vector<1x128xf32>
    %44 = arith.addf %42, %43 : vector<1x128xf32>
    %cst_25 = arith.constant 0.000000e+00 : f32
    %45 = vector.broadcast %cst_25 : f32 to vector<1x128xf32>
    %46 = arith.maximumf %44, %45 : vector<1x128xf32>
    %47 = arith.truncf %46 : vector<1x128xf32> to vector<1x128xbf16>
    %c0_26 = arith.constant 0 : index
    %c0_27 = arith.constant 0 : index
    %c0_28 = arith.constant 0 : index
    %48 = vector.load %arg12[%c0_26, %c0_27, %c0_28] : memref<2x128x256xbf16, #tpu.memory_space<vmem>>, vector<1x128x256xbf16>
    %49 = vector.shape_cast %48 : vector<1x128x256xbf16> to vector<128x256xbf16>
    %cst_29 = arith.constant dense<0.000000e+00> : vector<1x256xf32>
    %50 = tpu.matmul %47, %49, %cst_29 {dimension_numbers = #tpu.dot_dimension_numbers<[1], [0], [0], [1], [0, 0, 1, 1], [], []>} : vector<1x128xbf16>, vector<128x256xbf16>, vector<1x256xf32> -> vector<1x256xf32>
    %c0_30 = arith.constant 0 : index
    %c0_31 = arith.constant 0 : index
    %c0_32 = arith.constant 0 : index
    %51 = vector.load %arg13[%c0_30, %c0_31, %c0_32] : memref<2x1x256xf32, #tpu.memory_space<vmem>>, vector<1x1x256xf32>
    %52 = vector.shape_cast %51 : vector<1x1x256xf32> to vector<1x256xf32>
    %53 = arith.addf %50, %52 : vector<1x256xf32>
    %c0_33 = arith.constant 0 : index
    %c0_34 = arith.constant 0 : index
    %c0_35 = arith.constant 0 : index
    %c0_36 = arith.constant 0 : index
    %54 = vector.load %arg2[%c0_33, %c0_34, %c0_35, %c0_36] : memref<1x2x128x2xf32, #tpu.memory_space<vmem>>, vector<1x1x128x2xf32>
    %55 = vector.shape_cast %54 : vector<1x1x128x2xf32> to vector<128x2xf32>
    %c0_37 = arith.constant 0 : index
    %c0_38 = arith.constant 0 : index
    %c0_39 = arith.constant 0 : index
    %56 = vector.load %arg11[%c0_37, %c0_38, %c0_39] : memref<2x2x256xf32, #tpu.memory_space<vmem>>, vector<1x2x256xf32>
    %57 = vector.shape_cast %56 : vector<1x2x256xf32> to vector<2x256xf32>
    %58 = vector.extract_strided_slice %55 {offsets = [0, 0], sizes = [128, 1], strides = [1, 1]} : vector<128x2xf32> to vector<128x1xf32>
    %59 = vector.extract_strided_slice %57 {offsets = [0, 0], sizes = [1, 256], strides = [1, 1]} : vector<2x256xf32> to vector<1x256xf32>
    %60 = vector.broadcast %58 : vector<128x1xf32> to vector<128x256xf32>
    %61 = vector.broadcast %59 : vector<1x256xf32> to vector<128x256xf32>
    %62 = arith.mulf %60, %61 : vector<128x256xf32>
    %63 = vector.extract_strided_slice %55 {offsets = [0, 1], sizes = [128, 1], strides = [1, 1]} : vector<128x2xf32> to vector<128x1xf32>
    %64 = vector.extract_strided_slice %57 {offsets = [1, 0], sizes = [1, 256], strides = [1, 1]} : vector<2x256xf32> to vector<1x256xf32>
    %65 = vector.broadcast %63 : vector<128x1xf32> to vector<128x256xf32>
    %66 = vector.broadcast %64 : vector<1x256xf32> to vector<128x256xf32>
    %67 = arith.mulf %65, %66 : vector<128x256xf32>
    %68 = arith.addf %62, %67 : vector<128x256xf32>
    %69 = vector.broadcast %53 : vector<1x256xf32> to vector<128x256xf32>
    %70 = arith.addf %68, %69 : vector<128x256xf32>
    %cst_40 = arith.constant 0.000000e+00 : f32
    %71 = vector.broadcast %cst_40 : f32 to vector<128x256xf32>
    %72 = arith.maximumf %70, %71 : vector<128x256xf32>
    %73 = arith.truncf %72 : vector<128x256xf32> to vector<128x256xbf16>
    %c0_41 = arith.constant 0 : index
    %c0_42 = arith.constant 0 : index
    %c0_43 = arith.constant 0 : index
    %74 = vector.load %arg14[%c0_41, %c0_42, %c0_43] : memref<2x256x128xbf16, #tpu.memory_space<vmem>>, vector<1x256x128xbf16>
    %75 = vector.shape_cast %74 : vector<1x256x128xbf16> to vector<256x128xbf16>
    %cst_44 = arith.constant dense<0.000000e+00> : vector<128x128xf32>
    %76 = tpu.matmul %73, %75, %cst_44 {dimension_numbers = #tpu.dot_dimension_numbers<[1], [0], [0], [1], [0, 0, 1, 1], [], []>} : vector<128x256xbf16>, vector<256x128xbf16>, vector<128x128xf32> -> vector<128x128xf32>
    %c0_45 = arith.constant 0 : index
    %c0_46 = arith.constant 0 : index
    %c0_47 = arith.constant 0 : index
    %77 = vector.load %arg15[%c0_45, %c0_46, %c0_47] : memref<2x1x128xf32, #tpu.memory_space<vmem>>, vector<1x1x128xf32>
    %78 = vector.shape_cast %77 : vector<1x1x128xf32> to vector<1x128xf32>
    %79 = vector.broadcast %78 : vector<1x128xf32> to vector<128x128xf32>
    %80 = arith.addf %76, %79 : vector<128x128xf32>
    %cst_48 = arith.constant 0.000000e+00 : f32
    %81 = vector.broadcast %cst_48 : f32 to vector<128x128xf32>
    %82 = arith.maximumf %80, %81 : vector<128x128xf32>
    %83 = arith.truncf %82 : vector<128x128xf32> to vector<128x128xbf16>
    %c0_49 = arith.constant 0 : index
    %c0_50 = arith.constant 0 : index
    %c0_51 = arith.constant 0 : index
    %84 = vector.load %arg16[%c0_49, %c0_50, %c0_51] : memref<2x128x128xbf16, #tpu.memory_space<vmem>>, vector<1x128x128xbf16>
    %85 = vector.shape_cast %84 : vector<1x128x128xbf16> to vector<128x128xbf16>
    %cst_52 = arith.constant dense<0.000000e+00> : vector<128x128xf32>
    %86 = tpu.matmul %83, %85, %cst_52 {dimension_numbers = #tpu.dot_dimension_numbers<[1], [0], [0], [1], [0, 0, 1, 1], [], []>} : vector<128x128xbf16>, vector<128x128xbf16>, vector<128x128xf32> -> vector<128x128xf32>
    %c0_53 = arith.constant 0 : index
    %c0_54 = arith.constant 0 : index
    %c0_55 = arith.constant 0 : index
    %87 = vector.load %arg17[%c0_53, %c0_54, %c0_55] : memref<2x1x128xf32, #tpu.memory_space<vmem>>, vector<1x1x128xf32>
    %88 = vector.shape_cast %87 : vector<1x1x128xf32> to vector<1x128xf32>
    %89 = vector.broadcast %88 : vector<1x128xf32> to vector<128x128xf32>
    %90 = arith.addf %86, %89 : vector<128x128xf32>
    %cst_56 = arith.constant 0.000000e+00 : f32
    %91 = vector.broadcast %cst_56 : f32 to vector<128x128xf32>
    %92 = arith.maximumf %90, %91 : vector<128x128xf32>
    %c0_57 = arith.constant 0 : index
    %c0_58 = arith.constant 0 : index
    %c0_59 = arith.constant 0 : index
    %93 = vector.load %arg18[%c0_57, %c0_58, %c0_59] : memref<2x3x128xf32, #tpu.memory_space<vmem>>, vector<1x3x128xf32>
    %94 = vector.shape_cast %93 : vector<1x3x128xf32> to vector<3x128xf32>
    %95 = tpu.transpose %92, [1, 0] : vector<128x128xf32> -> vector<128x128xf32>
    %cst_60 = arith.constant dense<0.000000e+00> : vector<3x128xf32>
    %96 = tpu.matmul %94, %95, %cst_60 {dimension_numbers = #tpu.dot_dimension_numbers<[1], [0], [0], [1], [0, 0, 1, 1], [], []>} : vector<3x128xf32>, vector<128x128xf32>, vector<3x128xf32> -> vector<3x128xf32>
    %c0_61 = arith.constant 0 : index
    %c0_62 = arith.constant 0 : index
    %c0_63 = arith.constant 0 : index
    %97 = vector.load %arg19[%c0_61, %c0_62, %c0_63] : memref<2x3x1xf32, #tpu.memory_space<vmem>>, vector<1x3x1xf32>
    %98 = vector.shape_cast %97 : vector<1x3x1xf32> to vector<3x1xf32>
    %99 = vector.broadcast %98 : vector<3x1xf32> to vector<3x128xf32>
    %100 = arith.addf %96, %99 : vector<3x128xf32>
    %101 = math.tanh %100 : vector<3x128xf32>
    %c0_64 = arith.constant 0 : index
    %c0_65 = arith.constant 0 : index
    %c0_66 = arith.constant 0 : index
    %102 = vector.load %arg20[%c0_64, %c0_65, %c0_66] : memref<1x3x256xf32, #tpu.memory_space<vmem>>, vector<1x3x128xf32>
    %103 = vector.shape_cast %102 : vector<1x3x128xf32> to vector<3x128xf32>
    %104 = vector.shape_cast %101 : vector<3x128xf32> to vector<1x3x128xf32>
    tpu.vector_store %arg20[%c0_64, %c0_65, %c0_66], %104 {strides = array<i32>} : memref<1x3x256xf32, #tpu.memory_space<vmem>>, vector<1x3x128xf32>,
    %c1_67 = arith.constant 1 : index
    %c0_68 = arith.constant 0 : index
    %c0_69 = arith.constant 0 : index
    %105 = vector.load %arg12[%c1_67, %c0_68, %c0_69] : memref<2x128x256xbf16, #tpu.memory_space<vmem>>, vector<1x128x256xbf16>
    %106 = vector.shape_cast %105 : vector<1x128x256xbf16> to vector<128x256xbf16>
    %cst_70 = arith.constant dense<0.000000e+00> : vector<1x256xf32>
    %107 = tpu.matmul %47, %106, %cst_70 {dimension_numbers = #tpu.dot_dimension_numbers<[1], [0], [0], [1], [0, 0, 1, 1], [], []>} : vector<1x128xbf16>, vector<128x256xbf16>, vector<1x256xf32> -> vector<1x256xf32>
    %c1_71 = arith.constant 1 : index
    %c0_72 = arith.constant 0 : index
    %c0_73 = arith.constant 0 : index
    %108 = vector.load %arg13[%c1_71, %c0_72, %c0_73] : memref<2x1x256xf32, #tpu.memory_space<vmem>>, vector<1x1x256xf32>
    %109 = vector.shape_cast %108 : vector<1x1x256xf32> to vector<1x256xf32>
    %110 = arith.addf %107, %109 : vector<1x256xf32>
    %c0_74 = arith.constant 0 : index
    %c1_75 = arith.constant 1 : index
    %c0_76 = arith.constant 0 : index
    %c0_77 = arith.constant 0 : index
    %111 = vector.load %arg2[%c0_74, %c1_75, %c0_76, %c0_77] : memref<1x2x128x2xf32, #tpu.memory_space<vmem>>, vector<1x1x128x2xf32>
    %112 = vector.shape_cast %111 : vector<1x1x128x2xf32> to vector<128x2xf32>
    %c1_78 = arith.constant 1 : index
    %c0_79 = arith.constant 0 : index
    %c0_80 = arith.constant 0 : index
    %113 = vector.load %arg11[%c1_78, %c0_79, %c0_80] : memref<2x2x256xf32, #tpu.memory_space<vmem>>, vector<1x2x256xf32>
    %114 = vector.shape_cast %113 : vector<1x2x256xf32> to vector<2x256xf32>
    %115 = vector.extract_strided_slice %112 {offsets = [0, 0], sizes = [128, 1], strides = [1, 1]} : vector<128x2xf32> to vector<128x1xf32>
    %116 = vector.extract_strided_slice %114 {offsets = [0, 0], sizes = [1, 256], strides = [1, 1]} : vector<2x256xf32> to vector<1x256xf32>
    %117 = vector.broadcast %115 : vector<128x1xf32> to vector<128x256xf32>
    %118 = vector.broadcast %116 : vector<1x256xf32> to vector<128x256xf32>
    %119 = arith.mulf %117, %118 : vector<128x256xf32>
    %120 = vector.extract_strided_slice %112 {offsets = [0, 1], sizes = [128, 1], strides = [1, 1]} : vector<128x2xf32> to vector<128x1xf32>
    %121 = vector.extract_strided_slice %114 {offsets = [1, 0], sizes = [1, 256], strides = [1, 1]} : vector<2x256xf32> to vector<1x256xf32>
    %122 = vector.broadcast %120 : vector<128x1xf32> to vector<128x256xf32>
    %123 = vector.broadcast %121 : vector<1x256xf32> to vector<128x256xf32>
    %124 = arith.mulf %122, %123 : vector<128x256xf32>
    %125 = arith.addf %119, %124 : vector<128x256xf32>
    %126 = vector.broadcast %110 : vector<1x256xf32> to vector<128x256xf32>
    %127 = arith.addf %125, %126 : vector<128x256xf32>
    %cst_81 = arith.constant 0.000000e+00 : f32
    %128 = vector.broadcast %cst_81 : f32 to vector<128x256xf32>
    %129 = arith.maximumf %127, %128 : vector<128x256xf32>
    %130 = arith.truncf %129 : vector<128x256xf32> to vector<128x256xbf16>
    %c1_82 = arith.constant 1 : index
    %c0_83 = arith.constant 0 : index
    %c0_84 = arith.constant 0 : index
    %131 = vector.load %arg14[%c1_82, %c0_83, %c0_84] : memref<2x256x128xbf16, #tpu.memory_space<vmem>>, vector<1x256x128xbf16>
    %132 = vector.shape_cast %131 : vector<1x256x128xbf16> to vector<256x128xbf16>
    %cst_85 = arith.constant dense<0.000000e+00> : vector<128x128xf32>
    %133 = tpu.matmul %130, %132, %cst_85 {dimension_numbers = #tpu.dot_dimension_numbers<[1], [0], [0], [1], [0, 0, 1, 1], [], []>} : vector<128x256xbf16>, vector<256x128xbf16>, vector<128x128xf32> -> vector<128x128xf32>
    %c1_86 = arith.constant 1 : index
    %c0_87 = arith.constant 0 : index
    %c0_88 = arith.constant 0 : index
    %134 = vector.load %arg15[%c1_86, %c0_87, %c0_88] : memref<2x1x128xf32, #tpu.memory_space<vmem>>, vector<1x1x128xf32>
    %135 = vector.shape_cast %134 : vector<1x1x128xf32> to vector<1x128xf32>
    %136 = vector.broadcast %135 : vector<1x128xf32> to vector<128x128xf32>
    %137 = arith.addf %133, %136 : vector<128x128xf32>
    %cst_89 = arith.constant 0.000000e+00 : f32
    %138 = vector.broadcast %cst_89 : f32 to vector<128x128xf32>
    %139 = arith.maximumf %137, %138 : vector<128x128xf32>
    %140 = arith.truncf %139 : vector<128x128xf32> to vector<128x128xbf16>
    %c1_90 = arith.constant 1 : index
    %c0_91 = arith.constant 0 : index
    %c0_92 = arith.constant 0 : index
    %141 = vector.load %arg16[%c1_90, %c0_91, %c0_92] : memref<2x128x128xbf16, #tpu.memory_space<vmem>>, vector<1x128x128xbf16>
    %142 = vector.shape_cast %141 : vector<1x128x128xbf16> to vector<128x128xbf16>
    %cst_93 = arith.constant dense<0.000000e+00> : vector<128x128xf32>
    %143 = tpu.matmul %140, %142, %cst_93 {dimension_numbers = #tpu.dot_dimension_numbers<[1], [0], [0], [1], [0, 0, 1, 1], [], []>} : vector<128x128xbf16>, vector<128x128xbf16>, vector<128x128xf32> -> vector<128x128xf32>
    %c1_94 = arith.constant 1 : index
    %c0_95 = arith.constant 0 : index
    %c0_96 = arith.constant 0 : index
    %144 = vector.load %arg17[%c1_94, %c0_95, %c0_96] : memref<2x1x128xf32, #tpu.memory_space<vmem>>, vector<1x1x128xf32>
    %145 = vector.shape_cast %144 : vector<1x1x128xf32> to vector<1x128xf32>
    %146 = vector.broadcast %145 : vector<1x128xf32> to vector<128x128xf32>
    %147 = arith.addf %143, %146 : vector<128x128xf32>
    %cst_97 = arith.constant 0.000000e+00 : f32
    %148 = vector.broadcast %cst_97 : f32 to vector<128x128xf32>
    %149 = arith.maximumf %147, %148 : vector<128x128xf32>
    %c1_98 = arith.constant 1 : index
    %c0_99 = arith.constant 0 : index
    %c0_100 = arith.constant 0 : index
    %150 = vector.load %arg18[%c1_98, %c0_99, %c0_100] : memref<2x3x128xf32, #tpu.memory_space<vmem>>, vector<1x3x128xf32>
    %151 = vector.shape_cast %150 : vector<1x3x128xf32> to vector<3x128xf32>
    %152 = tpu.transpose %149, [1, 0] : vector<128x128xf32> -> vector<128x128xf32>
    %cst_101 = arith.constant dense<0.000000e+00> : vector<3x128xf32>
    %153 = tpu.matmul %151, %152, %cst_101 {dimension_numbers = #tpu.dot_dimension_numbers<[1], [0], [0], [1], [0, 0, 1, 1], [], []>} : vector<3x128xf32>, vector<128x128xf32>, vector<3x128xf32> -> vector<3x128xf32>
    %c1_102 = arith.constant 1 : index
    %c0_103 = arith.constant 0 : index
    %c0_104 = arith.constant 0 : index
    %154 = vector.load %arg19[%c1_102, %c0_103, %c0_104] : memref<2x3x1xf32, #tpu.memory_space<vmem>>, vector<1x3x1xf32>
    %155 = vector.shape_cast %154 : vector<1x3x1xf32> to vector<3x1xf32>
    %156 = vector.broadcast %155 : vector<3x1xf32> to vector<3x128xf32>
    %157 = arith.addf %153, %156 : vector<3x128xf32>
    %158 = math.tanh %157 : vector<3x128xf32>
    %c0_105 = arith.constant 0 : index
    %c0_106 = arith.constant 0 : index
    %c128 = arith.constant 128 : index
    %159 = vector.load %arg20[%c0_105, %c0_106, %c128] : memref<1x3x256xf32, #tpu.memory_space<vmem>>, vector<1x3x128xf32>
    %160 = vector.shape_cast %159 : vector<1x3x128xf32> to vector<3x128xf32>
    %161 = vector.shape_cast %158 : vector<3x128xf32> to vector<1x3x128xf32>
    tpu.vector_store %arg20[%c0_105, %c0_106, %c128], %161 {strides = array<i32>} : memref<1x3x256xf32, #tpu.memory_space<vmem>>, vector<1x3x128xf32>,
    return
  }
  func.func @transform_0(%arg0: i32) -> (i32, i32, i32) {
    %c0_i32 = arith.constant 0 : i32
    %c0_i32_0 = arith.constant 0 : i32
    %c0_i32_1 = arith.constant 0 : i32
    return %arg0, %c0_i32, %c0_i32_0 : i32, i32, i32
  }
  func.func @transform_1(%arg0: i32) -> (i32, i32, i32, i32) {
    %c0_i32 = arith.constant 0 : i32
    %c0_i32_0 = arith.constant 0 : i32
    %c0_i32_1 = arith.constant 0 : i32
    %c0_i32_2 = arith.constant 0 : i32
    return %arg0, %c0_i32, %c0_i32_0, %c0_i32_1 : i32, i32, i32, i32
  }
  func.func @transform_2(%arg0: i32) -> (i32, i32) {
    %c0_i32 = arith.constant 0 : i32
    %c0_i32_0 = arith.constant 0 : i32
    %c0_i32_1 = arith.constant 0 : i32
    return %c0_i32, %c0_i32_0 : i32, i32
  }
  func.func @transform_3(%arg0: i32) -> (i32, i32) {
    %c0_i32 = arith.constant 0 : i32
    %c0_i32_0 = arith.constant 0 : i32
    %c0_i32_1 = arith.constant 0 : i32
    return %c0_i32, %c0_i32_0 : i32, i32
  }
  func.func @transform_4(%arg0: i32) -> (i32, i32) {
    %c0_i32 = arith.constant 0 : i32
    %c0_i32_0 = arith.constant 0 : i32
    %c0_i32_1 = arith.constant 0 : i32
    return %c0_i32, %c0_i32_0 : i32, i32
  }
  func.func @transform_5(%arg0: i32) -> (i32, i32) {
    %c0_i32 = arith.constant 0 : i32
    %c0_i32_0 = arith.constant 0 : i32
    %c0_i32_1 = arith.constant 0 : i32
    return %c0_i32, %c0_i32_0 : i32, i32
  }
  func.func @transform_6(%arg0: i32) -> (i32, i32) {
    %c0_i32 = arith.constant 0 : i32
    %c0_i32_0 = arith.constant 0 : i32
    %c0_i32_1 = arith.constant 0 : i32
    return %c0_i32, %c0_i32_0 : i32, i32
  }
  func.func @transform_7(%arg0: i32) -> (i32, i32) {
    %c0_i32 = arith.constant 0 : i32
    %c0_i32_0 = arith.constant 0 : i32
    %c0_i32_1 = arith.constant 0 : i32
    return %c0_i32, %c0_i32_0 : i32, i32
  }
  func.func @transform_8(%arg0: i32) -> (i32, i32) {
    %c0_i32 = arith.constant 0 : i32
    %c0_i32_0 = arith.constant 0 : i32
    %c0_i32_1 = arith.constant 0 : i32
    return %c0_i32, %c0_i32_0 : i32, i32
  }
  func.func @transform_9(%arg0: i32) -> (i32, i32) {
    %c0_i32 = arith.constant 0 : i32
    %c0_i32_0 = arith.constant 0 : i32
    %c0_i32_1 = arith.constant 0 : i32
    return %c0_i32, %c0_i32_0 : i32, i32
  }
  func.func @transform_10(%arg0: i32) -> (i32, i32, i32) {
    %c0_i32 = arith.constant 0 : i32
    %c0_i32_0 = arith.constant 0 : i32
    %c0_i32_1 = arith.constant 0 : i32
    %c0_i32_2 = arith.constant 0 : i32
    return %c0_i32, %c0_i32_0, %c0_i32_1 : i32, i32, i32
  }
  func.func @transform_11(%arg0: i32) -> (i32, i32, i32) {
    %c0_i32 = arith.constant 0 : i32
    %c0_i32_0 = arith.constant 0 : i32
    %c0_i32_1 = arith.constant 0 : i32
    %c0_i32_2 = arith.constant 0 : i32
    return %c0_i32, %c0_i32_0, %c0_i32_1 : i32, i32, i32
  }
  func.func @transform_12(%arg0: i32) -> (i32, i32, i32) {
    %c0_i32 = arith.constant 0 : i32
    %c0_i32_0 = arith.constant 0 : i32
    %c0_i32_1 = arith.constant 0 : i32
    %c0_i32_2 = arith.constant 0 : i32
    return %c0_i32, %c0_i32_0, %c0_i32_1 : i32, i32, i32
  }
  func.func @transform_13(%arg0: i32) -> (i32, i32, i32) {
    %c0_i32 = arith.constant 0 : i32
    %c0_i32_0 = arith.constant 0 : i32
    %c0_i32_1 = arith.constant 0 : i32
    %c0_i32_2 = arith.constant 0 : i32
    return %c0_i32, %c0_i32_0, %c0_i32_1 : i32, i32, i32
  }
  func.func @transform_14(%arg0: i32) -> (i32, i32, i32) {
    %c0_i32 = arith.constant 0 : i32
    %c0_i32_0 = arith.constant 0 : i32
    %c0_i32_1 = arith.constant 0 : i32
    %c0_i32_2 = arith.constant 0 : i32
    return %c0_i32, %c0_i32_0, %c0_i32_1 : i32, i32, i32
  }
  func.func @transform_15(%arg0: i32) -> (i32, i32, i32) {
    %c0_i32 = arith.constant 0 : i32
    %c0_i32_0 = arith.constant 0 : i32
    %c0_i32_1 = arith.constant 0 : i32
    %c0_i32_2 = arith.constant 0 : i32
    return %c0_i32, %c0_i32_0, %c0_i32_1 : i32, i32, i32
  }
  func.func @transform_16(%arg0: i32) -> (i32, i32, i32) {
    %c0_i32 = arith.constant 0 : i32
    %c0_i32_0 = arith.constant 0 : i32
    %c0_i32_1 = arith.constant 0 : i32
    %c0_i32_2 = arith.constant 0 : i32
    return %c0_i32, %c0_i32_0, %c0_i32_1 : i32, i32, i32
  }
  func.func @transform_17(%arg0: i32) -> (i32, i32, i32) {
    %c0_i32 = arith.constant 0 : i32
    %c0_i32_0 = arith.constant 0 : i32
    %c0_i32_1 = arith.constant 0 : i32
    %c0_i32_2 = arith.constant 0 : i32
    return %c0_i32, %c0_i32_0, %c0_i32_1 : i32, i32, i32
  }
  func.func @transform_18(%arg0: i32) -> (i32, i32, i32) {
    %c0_i32 = arith.constant 0 : i32
    %c0_i32_0 = arith.constant 0 : i32
    %c0_i32_1 = arith.constant 0 : i32
    %c0_i32_2 = arith.constant 0 : i32
    return %c0_i32, %c0_i32_0, %c0_i32_1 : i32, i32, i32
  }
  func.func @transform_19(%arg0: i32) -> (i32, i32, i32) {
    %c0_i32 = arith.constant 0 : i32
    %c0_i32_0 = arith.constant 0 : i32
    %c0_i32_1 = arith.constant 0 : i32
    return %arg0, %c0_i32, %c0_i32_0 : i32, i32, i32
  }
}

</mosaic_0001>

<llo_original>
// kernel: tpu_custom_call.1
$region0: #{tpu_custom_call.1}
  #allocation0 [shape = 'u32[]', space=smem, size = 0x4, offset = 0x4, fixed_abs, tag = 'smem constant byte address 0x4 - core index']
  #allocation1 [shape = 'u32[144,128]{1,0:T(1,128)}', space=vmem, size = 0x12000, scoped, tag = 'internal scratch']
  %s0 = inlined_call_operand.vmem [shape: f32[2,256,3], index: 0, kind: input, shape index: {}]
  %s1 = inlined_call_operand.vmem [shape: f32[2,2,128,2], index: 1, kind: input, shape index: {}]
  %s2 = inlined_call_operand.vmem [shape: f32[3,64], index: 2, kind: input, shape index: {}]
  %s3 = inlined_call_operand.hbm [shape: f32[1,64], index: 3, kind: input, shape index: {}]
  %s4 = inlined_call_operand.vmem [shape: bf16[64,128], index: 4, kind: input, shape index: {}]
  %s5 = inlined_call_operand.hbm [shape: f32[1,128], index: 5, kind: input, shape index: {}]
  %s6 = inlined_call_operand.vmem [shape: bf16[128,1024], index: 6, kind: input, shape index: {}]
  %s7 = inlined_call_operand.vmem [shape: f32[1,1024], index: 7, kind: input, shape index: {}]
  %s8 = inlined_call_operand.vmem [shape: bf16[1024,128], index: 8, kind: input, shape index: {}]
  %s9 = inlined_call_operand.vmem [shape: f32[1,128], index: 9, kind: input, shape index: {}]
  %s10 = inlined_call_operand.vmem [shape: f32[2,2,256], index: 10, kind: input, shape index: {}]
  %s11 = inlined_call_operand.hbm [shape: bf16[2,128,256], index: 11, kind: input, shape index: {}]
  %s12 = inlined_call_operand.vmem [shape: f32[2,1,256], index: 12, kind: input, shape index: {}]
  %s13 = inlined_call_operand.hbm [shape: bf16[2,256,128], index: 13, kind: input, shape index: {}]
  %s14 = inlined_call_operand.vmem [shape: f32[2,1,128], index: 14, kind: input, shape index: {}]
  %s15 = inlined_call_operand.hbm [shape: bf16[2,128,128], index: 15, kind: input, shape index: {}]
  %s16 = inlined_call_operand.vmem [shape: f32[2,1,128], index: 16, kind: input, shape index: {}]
  %s17 = inlined_call_operand.vmem [shape: f32[2,3,128], index: 17, kind: input, shape index: {}]
  %s18 = inlined_call_operand.vmem [shape: f32[2,3,1], index: 18, kind: input, shape index: {}]
  %s19 = inlined_call_operand.vmem [shape: f32[2,3,256], index: 19, kind: output, shape index: {}]
  %s20 = sld [smem:[#allocation0]]
  $region129: #{tpu_custom_call.1} parent=0
    _
  %s22 = ssub.s32 1, %s20
  %s23 = scalar_select 0, %s22, %s20
  $region1: #{tpu_custom_call.1} parent=0
    #allocation2 [shape = 'u8[512]{0}', space=vmem, size = 0x400, scoped, tag = 'input window, operand 3, single buffered']
    #allocation3 [shape = 's32[2]{0}', space=sflag, size = 0x8, scoped, tag = 'scoped memory for tpu_custom_call.1']
    #allocation4 [shape = 'u8[512]{0}', space=vmem, size = 0x400, scoped, tag = 'input window, operand 5, single buffered']
    #allocation5 [shape = 's32[1]{0}', space=sflag, size = 0x4, scoped, tag = 'scoped memory for tpu_custom_call.1']
    #allocation6 [shape = 'u8[131072]{0}', space=vmem, size = 0x20000, scoped, tag = 'input window, operand 11, single buffered']
    #allocation7 [shape = 'u8[131072]{0}', space=vmem, size = 0x20000, scoped, tag = 'input window, operand 13, single buffered']
    #allocation8 [shape = 's32[1]{0}', space=sflag, size = 0x4, scoped, tag = 'scoped memory for tpu_custom_call.1']
    #allocation9 [shape = 'u8[65536]{0}', space=vmem, size = 0x10000, scoped, tag = 'input window, operand 15, single buffered']
    %24 = vsyncpa [#allocation3], 0
    %25 = vsyncpa [#allocation5], 0
    %26 = vsyncpa [#allocation8], 0
    loop: start=0, step=1, limit=4
    $region2: #{tpu_custom_call.1} parent=1 // loop_pre_header
      _
    $region3: #{tpu_custom_call.1} parent=1 // loop_header
      %s28 = sphi 0, %s32
      %p29 = scmp.ge.s32.totalorder %s28, 4
      %s38 = sphi 0, %s40
      %s41 = sphi 0, %s38
      %s42 = sphi 0, %s41
      %s58 = sphi 0, %s42
      %s64 = sphi 0, %s66
      %s67 = sphi 0, %s64
      %s68 = sphi 0, %s67
      %s84 = sphi 0, %s68
      %s88 = sphi 0, %s88
      %s90 = sphi 0, %s88
      %s91 = sphi 0, %s90
      %s105 = sphi 0, %s91
      %s109 = sphi 0, %s109
      %s111 = sphi 0, %s109
      %s112 = sphi 0, %s111
      %s126 = sphi 0, %s112
      %s130 = sphi 0, %s130
      %s132 = sphi 0, %s130
      %s133 = sphi 0, %s132
      %s147 = sphi 0, %s133
      %s151 = sphi 0, %s151
      %s153 = sphi 0, %s151
      %s154 = sphi 0, %s153
      %s168 = sphi 0, %s154
      %s172 = sphi 0, %s172
      %s174 = sphi 0, %s172
      %s175 = sphi 0, %s174
      %s189 = sphi 0, %s175
      %s193 = sphi 0, %s193
      %s195 = sphi 0, %s193
      %s196 = sphi 0, %s195
      %s210 = sphi 0, %s196
      %s214 = sphi 0, %s214
      %s216 = sphi 0, %s214
      %s217 = sphi 0, %s216
      %s231 = sphi 0, %s217
      %s235 = sphi 0, %s235
      %s237 = sphi 0, %s235
      %s238 = sphi 0, %s237
      %s252 = sphi 0, %s238
      %s256 = sphi 0, %s256
      %s258 = sphi 0, %s256
      %s259 = sphi 0, %s258
      %s273 = sphi 0, %s259
      %s277 = sphi 0, %s277
      %s279 = sphi 0, %s277
      %s280 = sphi 0, %s279
      %s294 = sphi 0, %s280
      %s298 = sphi 0, %s298
      %s300 = sphi 0, %s298
      %s301 = sphi 0, %s300
      %s315 = sphi 0, %s301
      %s319 = sphi 0, %s319
      %s321 = sphi 0, %s319
      %s322 = sphi 0, %s321
      %s336 = sphi 0, %s322
      %s340 = sphi 0, %s340
      %s342 = sphi 0, %s340
      %s343 = sphi 0, %s342
      %s357 = sphi 0, %s343
      %s361 = sphi 0, %s361
      %s363 = sphi 0, %s361
      %s364 = sphi 0, %s363
      %s378 = sphi 0, %s364
      %s382 = sphi 0, %s382
      %s384 = sphi 0, %s382
      %s385 = sphi 0, %s384
      %s399 = sphi 0, %s385
      %s403 = sphi 0, %s403
      %s405 = sphi 0, %s403
      %s406 = sphi 0, %s405
      %s420 = sphi 0, %s406
      %s424 = sphi 0, %s424
      %s426 = sphi 0, %s424
      %s427 = sphi 0, %s426
      %s441 = sphi 0, %s427
      %s447 = sphi 0, %s449
      %s450 = sphi 0, %s447
      %s451 = sphi 0, %s450
      %s467 = sphi 0, %s451
    $region4: #{tpu_custom_call.1} parent=1 // loop_header_branch
      %31 = sbr.rel (%p29) target = $region8
    $region5: #{tpu_custom_call.1} parent=1 // loop_body
      %s33 = ssub.s32 %s28, 1
      %s34 = ssub.s32 %s28, 2
      %s35 = sadd.s32 %s28, 1
      %s36 = ssub.s32 %s28, %s35
      %p37 = scmp.eq.s32.totalorder %s36, 0
      %s39 = sadd.s32 %s38, 1
      %s40 = scalar_select %p37, %s38, %s39
      %p43 = pneg %p37
      %p44 = scmp.eq.s32.totalorder %s28, 1
      %p45 = por %p43, %p44
      %p46 = scmp.ne.s32.totalorder %s38, %s41
      %p47 = scmp.eq.s32.totalorder %s28, 0
      %p48 = por %p46, %p47
      %p49 = scmp.ne.s32.totalorder %s38, %s41
      %p50 = scmp.eq.s32.totalorder %s33, 1
      %p51 = por %p49, %p50
      %p52 = scmp.ne.s32.totalorder %s41, %s42
      %p53 = scmp.eq.s32.totalorder %s33, 0
      %p54 = por %p52, %p53
      %p55 = scmp.ne.s32.totalorder %s41, %s42
      %p56 = scmp.eq.s32.totalorder %s34, 1
      %p57 = por %p55, %p56
      %p59 = scmp.ne.s32.totalorder %s42, %s58
      %p60 = scmp.eq.s32.totalorder %s34, 0
      %p61 = por %p59, %p60
      %s62 = ssub.s32 %s28, %s35
      %p63 = scmp.eq.s32.totalorder %s62, 0
      %s65 = sadd.s32 %s64, 1
      %s66 = scalar_select %p63, %s64, %s65
      %p69 = pneg %p63
      %p70 = scmp.eq.s32.totalorder %s28, 1
      %p71 = por %p69, %p70
      %p72 = scmp.ne.s32.totalorder %s64, %s67
      %p73 = scmp.eq.s32.totalorder %s28, 0
      %p74 = por %p72, %p73
      %p75 = scmp.ne.s32.totalorder %s64, %s67
      %p76 = scmp.eq.s32.totalorder %s33, 1
      %p77 = por %p75, %p76
      %p78 = scmp.ne.s32.totalorder %s67, %s68
      %p79 = scmp.eq.s32.totalorder %s33, 0
      %p80 = por %p78, %p79
      %p81 = scmp.ne.s32.totalorder %s67, %s68
      %p82 = scmp.eq.s32.totalorder %s34, 1
      %p83 = por %p81, %p82
      %p85 = scmp.ne.s32.totalorder %s68, %s84
      %p86 = scmp.eq.s32.totalorder %s34, 0
      %p87 = por %p85, %p86
      %s89 = sadd.s32 %s88, 1
      %p92 = scmp.eq.s32.totalorder %s28, 1
      %p93 = scmp.ne.s32.totalorder %s88, %s90
      %p94 = scmp.eq.s32.totalorder %s28, 0
      %p95 = por %p93, %p94
      %p96 = scmp.ne.s32.totalorder %s88, %s90
      %p97 = scmp.eq.s32.totalorder %s33, 1
      %p98 = por %p96, %p97
      %p99 = scmp.ne.s32.totalorder %s90, %s91
      %p100 = scmp.eq.s32.totalorder %s33, 0
      %p101 = por %p99, %p100
      %p102 = scmp.ne.s32.totalorder %s90, %s91
      %p103 = scmp.eq.s32.totalorder %s34, 1
      %p104 = por %p102, %p103
      %p106 = scmp.ne.s32.totalorder %s91, %s105
      %p107 = scmp.eq.s32.totalorder %s34, 0
      %p108 = por %p106, %p107
      %s110 = sadd.s32 %s109, 1
      %p113 = scmp.eq.s32.totalorder %s28, 1
      %p114 = scmp.ne.s32.totalorder %s109, %s111
      %p115 = scmp.eq.s32.totalorder %s28, 0
      %p116 = por %p114, %p115
      %p117 = scmp.ne.s32.totalorder %s109, %s111
      %p118 = scmp.eq.s32.totalorder %s33, 1
      %p119 = por %p117, %p118
      %p120 = scmp.ne.s32.totalorder %s111, %s112
      %p121 = scmp.eq.s32.totalorder %s33, 0
      %p122 = por %p120, %p121
      %p123 = scmp.ne.s32.totalorder %s111, %s112
      %p124 = scmp.eq.s32.totalorder %s34, 1
      %p125 = por %p123, %p124
      %p127 = scmp.ne.s32.totalorder %s112, %s126
      %p128 = scmp.eq.s32.totalorder %s34, 0
      %p129 = por %p127, %p128
      %s131 = sadd.s32 %s130, 1
      %p134 = scmp.eq.s32.totalorder %s28, 1
      %p135 = scmp.ne.s32.totalorder %s130, %s132
      %p136 = scmp.eq.s32.totalorder %s28, 0
      %p137 = por %p135, %p136
      %p138 = scmp.ne.s32.totalorder %s130, %s132
      %p139 = scmp.eq.s32.totalorder %s33, 1
      %p140 = por %p138, %p139
      %p141 = scmp.ne.s32.totalorder %s132, %s133
      %p142 = scmp.eq.s32.totalorder %s33, 0
      %p143 = por %p141, %p142
      %p144 = scmp.ne.s32.totalorder %s132, %s133
      %p145 = scmp.eq.s32.totalorder %s34, 1
      %p146 = por %p144, %p145
      %p148 = scmp.ne.s32.totalorder %s133, %s147
      %p149 = scmp.eq.s32.totalorder %s34, 0
      %p150 = por %p148, %p149
      %s152 = sadd.s32 %s151, 1
      %p155 = scmp.eq.s32.totalorder %s28, 1
      %p156 = scmp.ne.s32.totalorder %s151, %s153
      %p157 = scmp.eq.s32.totalorder %s28, 0
      %p158 = por %p156, %p157
      %p159 = scmp.ne.s32.totalorder %s151, %s153
      %p160 = scmp.eq.s32.totalorder %s33, 1
      %p161 = por %p159, %p160
      %p162 = scmp.ne.s32.totalorder %s153, %s154
      %p163 = scmp.eq.s32.totalorder %s33, 0
      %p164 = por %p162, %p163
      %p165 = scmp.ne.s32.totalorder %s153, %s154
      %p166 = scmp.eq.s32.totalorder %s34, 1
      %p167 = por %p165, %p166
      %p169 = scmp.ne.s32.totalorder %s154, %s168
      %p170 = scmp.eq.s32.totalorder %s34, 0
      %p171 = por %p169, %p170
      %s173 = sadd.s32 %s172, 1
      %p176 = scmp.eq.s32.totalorder %s28, 1
      %p177 = scmp.ne.s32.totalorder %s172, %s174
      %p178 = scmp.eq.s32.totalorder %s28, 0
      %p179 = por %p177, %p178
      %p180 = scmp.ne.s32.totalorder %s172, %s174
      %p181 = scmp.eq.s32.totalorder %s33, 1
      %p182 = por %p180, %p181
      %p183 = scmp.ne.s32.totalorder %s174, %s175
      %p184 = scmp.eq.s32.totalorder %s33, 0
      %p185 = por %p183, %p184
      %p186 = scmp.ne.s32.totalorder %s174, %s175
      %p187 = scmp.eq.s32.totalorder %s34, 1
      %p188 = por %p186, %p187
      %p190 = scmp.ne.s32.totalorder %s175, %s189
      %p191 = scmp.eq.s32.totalorder %s34, 0
      %p192 = por %p190, %p191
      %s194 = sadd.s32 %s193, 1
      %p197 = scmp.eq.s32.totalorder %s28, 1
      %p198 = scmp.ne.s32.totalorder %s193, %s195
      %p199 = scmp.eq.s32.totalorder %s28, 0
      %p200 = por %p198, %p199
      %p201 = scmp.ne.s32.totalorder %s193, %s195
      %p202 = scmp.eq.s32.totalorder %s33, 1
      %p203 = por %p201, %p202
      %p204 = scmp.ne.s32.totalorder %s195, %s196
      %p205 = scmp.eq.s32.totalorder %s33, 0
      %p206 = por %p204, %p205
      %p207 = scmp.ne.s32.totalorder %s195, %s196
      %p208 = scmp.eq.s32.totalorder %s34, 1
      %p209 = por %p207, %p208
      %p211 = scmp.ne.s32.totalorder %s196, %s210
      %p212 = scmp.eq.s32.totalorder %s34, 0
      %p213 = por %p211, %p212
      %s215 = sadd.s32 %s214, 1
      %p218 = scmp.eq.s32.totalorder %s28, 1
      %p219 = scmp.ne.s32.totalorder %s214, %s216
      %p220 = scmp.eq.s32.totalorder %s28, 0
      %p221 = por %p219, %p220
      %p222 = scmp.ne.s32.totalorder %s214, %s216
      %p223 = scmp.eq.s32.totalorder %s33, 1
      %p224 = por %p222, %p223
      %p225 = scmp.ne.s32.totalorder %s216, %s217
      %p226 = scmp.eq.s32.totalorder %s33, 0
      %p227 = por %p225, %p226
      %p228 = scmp.ne.s32.totalorder %s216, %s217
      %p229 = scmp.eq.s32.totalorder %s34, 1
      %p230 = por %p228, %p229
      %p232 = scmp.ne.s32.totalorder %s217, %s231
      %p233 = scmp.eq.s32.totalorder %s34, 0
      %p234 = por %p232, %p233
      %s236 = sadd.s32 %s235, 1
      %p239 = scmp.eq.s32.totalorder %s28, 1
      %p240 = scmp.ne.s32.totalorder %s235, %s237
      %p241 = scmp.eq.s32.totalorder %s28, 0
      %p242 = por %p240, %p241
      %p243 = scmp.ne.s32.totalorder %s235, %s237
      %p244 = scmp.eq.s32.totalorder %s33, 1
      %p245 = por %p243, %p244
      %p246 = scmp.ne.s32.totalorder %s237, %s238
      %p247 = scmp.eq.s32.totalorder %s33, 0
      %p248 = por %p246, %p247
      %p249 = scmp.ne.s32.totalorder %s237, %s238
      %p250 = scmp.eq.s32.totalorder %s34, 1
      %p251 = por %p249, %p250
      %p253 = scmp.ne.s32.totalorder %s238, %s252
      %p254 = scmp.eq.s32.totalorder %s34, 0
      %p255 = por %p253, %p254
      %s257 = sadd.s32 %s256, 1
      %p260 = scmp.eq.s32.totalorder %s28, 1
      %p261 = scmp.ne.s32.totalorder %s256, %s258
      %p262 = scmp.eq.s32.totalorder %s28, 0
      %p263 = por %p261, %p262
      %p264 = scmp.ne.s32.totalorder %s256, %s258
      %p265 = scmp.eq.s32.totalorder %s33, 1
      %p266 = por %p264, %p265
      %p267 = scmp.ne.s32.totalorder %s258, %s259
      %p268 = scmp.eq.s32.totalorder %s33, 0
      %p269 = por %p267, %p268
      %p270 = scmp.ne.s32.totalorder %s258, %s259
      %p271 = scmp.eq.s32.totalorder %s34, 1
      %p272 = por %p270, %p271
      %p274 = scmp.ne.s32.totalorder %s259, %s273
      %p275 = scmp.eq.s32.totalorder %s34, 0
      %p276 = por %p274, %p275
      %s278 = sadd.s32 %s277, 1
      %p281 = scmp.eq.s32.totalorder %s28, 1
      %p282 = scmp.ne.s32.totalorder %s277, %s279
      %p283 = scmp.eq.s32.totalorder %s28, 0
      %p284 = por %p282, %p283
      %p285 = scmp.ne.s32.totalorder %s277, %s279
      %p286 = scmp.eq.s32.totalorder %s33, 1
      %p287 = por %p285, %p286
      %p288 = scmp.ne.s32.totalorder %s279, %s280
      %p289 = scmp.eq.s32.totalorder %s33, 0
      %p290 = por %p288, %p289
      %p291 = scmp.ne.s32.totalorder %s279, %s280
      %p292 = scmp.eq.s32.totalorder %s34, 1
      %p293 = por %p291, %p292
      %p295 = scmp.ne.s32.totalorder %s280, %s294
      %p296 = scmp.eq.s32.totalorder %s34, 0
      %p297 = por %p295, %p296
      %s299 = sadd.s32 %s298, 1
      %p302 = scmp.eq.s32.totalorder %s28, 1
      %p303 = scmp.ne.s32.totalorder %s298, %s300
      %p304 = scmp.eq.s32.totalorder %s28, 0
      %p305 = por %p303, %p304
      %p306 = scmp.ne.s32.totalorder %s298, %s300
      %p307 = scmp.eq.s32.totalorder %s33, 1
      %p308 = por %p306, %p307
      %p309 = scmp.ne.s32.totalorder %s300, %s301
      %p310 = scmp.eq.s32.totalorder %s33, 0
      %p311 = por %p309, %p310
      %p312 = scmp.ne.s32.totalorder %s300, %s301
      %p313 = scmp.eq.s32.totalorder %s34, 1
      %p314 = por %p312, %p313
      %p316 = scmp.ne.s32.totalorder %s301, %s315
      %p317 = scmp.eq.s32.totalorder %s34, 0
      %p318 = por %p316, %p317
      %s320 = sadd.s32 %s319, 1
      %p323 = scmp.eq.s32.totalorder %s28, 1
      %p324 = scmp.ne.s32.totalorder %s319, %s321
      %p325 = scmp.eq.s32.totalorder %s28, 0
      %p326 = por %p324, %p325
      %p327 = scmp.ne.s32.totalorder %s319, %s321
      %p328 = scmp.eq.s32.totalorder %s33, 1
      %p329 = por %p327, %p328
      %p330 = scmp.ne.s32.totalorder %s321, %s322
      %p331 = scmp.eq.s32.totalorder %s33, 0
      %p332 = por %p330, %p331
      %p333 = scmp.ne.s32.totalorder %s321, %s322
      %p334 = scmp.eq.s32.totalorder %s34, 1
      %p335 = por %p333, %p334
      %p337 = scmp.ne.s32.totalorder %s322, %s336
      %p338 = scmp.eq.s32.totalorder %s34, 0
      %p339 = por %p337, %p338
      %s341 = sadd.s32 %s340, 1
      %p344 = scmp.eq.s32.totalorder %s28, 1
      %p345 = scmp.ne.s32.totalorder %s340, %s342
      %p346 = scmp.eq.s32.totalorder %s28, 0
      %p347 = por %p345, %p346
      %p348 = scmp.ne.s32.totalorder %s340, %s342
      %p349 = scmp.eq.s32.totalorder %s33, 1
      %p350 = por %p348, %p349
      %p351 = scmp.ne.s32.totalorder %s342, %s343
      %p352 = scmp.eq.s32.totalorder %s33, 0
      %p353 = por %p351, %p352
      %p354 = scmp.ne.s32.totalorder %s342, %s343
      %p355 = scmp.eq.s32.totalorder %s34, 1
      %p356 = por %p354, %p355
      %p358 = scmp.ne.s32.totalorder %s343, %s357
      %p359 = scmp.eq.s32.totalorder %s34, 0
      %p360 = por %p358, %p359
      %s362 = sadd.s32 %s361, 1
      %p365 = scmp.eq.s32.totalorder %s28, 1
      %p366 = scmp.ne.s32.totalorder %s361, %s363
      %p367 = scmp.eq.s32.totalorder %s28, 0
      %p368 = por %p366, %p367
      %p369 = scmp.ne.s32.totalorder %s361, %s363
      %p370 = scmp.eq.s32.totalorder %s33, 1
      %p371 = por %p369, %p370
      %p372 = scmp.ne.s32.totalorder %s363, %s364
      %p373 = scmp.eq.s32.totalorder %s33, 0
      %p374 = por %p372, %p373
      %p375 = scmp.ne.s32.totalorder %s363, %s364
      %p376 = scmp.eq.s32.totalorder %s34, 1
      %p377 = por %p375, %p376
      %p379 = scmp.ne.s32.totalorder %s364, %s378
      %p380 = scmp.eq.s32.totalorder %s34, 0
      %p381 = por %p379, %p380
      %s383 = sadd.s32 %s382, 1
      %p386 = scmp.eq.s32.totalorder %s28, 1
      %p387 = scmp.ne.s32.totalorder %s382, %s384
      %p388 = scmp.eq.s32.totalorder %s28, 0
      %p389 = por %p387, %p388
      %p390 = scmp.ne.s32.totalorder %s382, %s384
      %p391 = scmp.eq.s32.totalorder %s33, 1
      %p392 = por %p390, %p391
      %p393 = scmp.ne.s32.totalorder %s384, %s385
      %p394 = scmp.eq.s32.totalorder %s33, 0
      %p395 = por %p393, %p394
      %p396 = scmp.ne.s32.totalorder %s384, %s385
      %p397 = scmp.eq.s32.totalorder %s34, 1
      %p398 = por %p396, %p397
      %p400 = scmp.ne.s32.totalorder %s385, %s399
      %p401 = scmp.eq.s32.totalorder %s34, 0
      %p402 = por %p400, %p401
      %s404 = sadd.s32 %s403, 1
      %p407 = scmp.eq.s32.totalorder %s28, 1
      %p408 = scmp.ne.s32.totalorder %s403, %s405
      %p409 = scmp.eq.s32.totalorder %s28, 0
      %p410 = por %p408, %p409
      %p411 = scmp.ne.s32.totalorder %s403, %s405
      %p412 = scmp.eq.s32.totalorder %s33, 1
      %p413 = por %p411, %p412
      %p414 = scmp.ne.s32.totalorder %s405, %s406
      %p415 = scmp.eq.s32.totalorder %s33, 0
      %p416 = por %p414, %p415
      %p417 = scmp.ne.s32.totalorder %s405, %s406
      %p418 = scmp.eq.s32.totalorder %s34, 1
      %p419 = por %p417, %p418
      %p421 = scmp.ne.s32.totalorder %s406, %s420
      %p422 = scmp.eq.s32.totalorder %s34, 0
      %p423 = por %p421, %p422
      %s425 = sadd.s32 %s424, 1
      %p428 = scmp.eq.s32.totalorder %s28, 1
      %p429 = scmp.ne.s32.totalorder %s424, %s426
      %p430 = scmp.eq.s32.totalorder %s28, 0
      %p431 = por %p429, %p430
      %p432 = scmp.ne.s32.totalorder %s424, %s426
      %p433 = scmp.eq.s32.totalorder %s33, 1
      %p434 = por %p432, %p433
      %p435 = scmp.ne.s32.totalorder %s426, %s427
      %p436 = scmp.eq.s32.totalorder %s33, 0
      %p437 = por %p435, %p436
      %p438 = scmp.ne.s32.totalorder %s426, %s427
      %p439 = scmp.eq.s32.totalorder %s34, 1
      %p440 = por %p438, %p439
      %p442 = scmp.ne.s32.totalorder %s427, %s441
      %p443 = scmp.eq.s32.totalorder %s34, 0
      %p444 = por %p442, %p443
      %s445 = ssub.s32 %s28, %s35
      %p446 = scmp.eq.s32.totalorder %s445, 0
      %s448 = sadd.s32 %s447, 1
      %s449 = scalar_select %p446, %s447, %s448
      %p452 = pneg %p446
      %p453 = scmp.eq.s32.totalorder %s28, 1
      %p454 = por %p452, %p453
      %p455 = scmp.ne.s32.totalorder %s447, %s450
      %p456 = scmp.eq.s32.totalorder %s28, 0
      %p457 = por %p455, %p456
      %p458 = scmp.ne.s32.totalorder %s447, %s450
      %p459 = scmp.eq.s32.totalorder %s33, 1
      %p460 = por %p458, %p459
      %p461 = scmp.ne.s32.totalorder %s450, %s451
      %p462 = scmp.eq.s32.totalorder %s33, 0
      %p463 = por %p461, %p462
      %p464 = scmp.ne.s32.totalorder %s450, %s451
      %p465 = scmp.eq.s32.totalorder %s34, 1
      %p466 = por %p464, %p465
      %p468 = scmp.ne.s32.totalorder %s451, %s467
      %p469 = scmp.eq.s32.totalorder %s34, 0
      %p470 = por %p468, %p469
      %p471 = scmp.le.s32.totalorder 1, %s28
      %p472 = scmp.lt.s32.totalorder %s28, 3
      %p473 = pnand %p471, %p472
      %p474 = pneg %p473
      // Predicated region
      $region9: #{tpu_custom_call.1} parent=5 // pred_check
        _
      $region10: #{tpu_custom_call.1} parent=5 // pred_check_branch
        %476 = sbr.rel (%p473) target = $region12
      $region11: #{tpu_custom_call.1} parent=5 // pred_region
        %s477 = ssub.s32 %s28, 1
        // Predicated region
        $region13: #{tpu_custom_call.1} parent=11 // pred_check
          %p478 = pneg %p101
        $region14: #{tpu_custom_call.1} parent=11 // pred_check_branch
          %480 = sbr.rel (%p478) target = $region16
        $region15: #{tpu_custom_call.1} parent=11 // pred_region
          _
        $region16: #{tpu_custom_call.1} parent=11 // pred_fallthru
          _
        // Predicated region
        $region17: #{tpu_custom_call.1} parent=11 // pred_check
          %p481 = pneg %p122
        $region18: #{tpu_custom_call.1} parent=11 // pred_check_branch
          %483 = sbr.rel (%p481) target = $region20
        $region19: #{tpu_custom_call.1} parent=11 // pred_region
          %s485 = ssub.s32 16, 16
          %486 = vsyncadd [#allocation3], %s485
          %s488 = sshll.u32 [#allocation2], 4
          %s489 = int_to_ptr.vmem [resolvable:$true] %s488
          %491 = dma.hbm_to_vmem [thread:$0]  %s3, 16, %s489, [#allocation3]
        $region20: #{tpu_custom_call.1} parent=11 // pred_fallthru
          _
        // Predicated region
        $region21: #{tpu_custom_call.1} parent=11 // pred_check
          %p492 = pneg %p143
        $region22: #{tpu_custom_call.1} parent=11 // pred_check_branch
          %494 = sbr.rel (%p492) target = $region24
        $region23: #{tpu_custom_call.1} parent=11 // pred_region
          _
        $region24: #{tpu_custom_call.1} parent=11 // pred_fallthru
          _
        // Predicated region
        $region25: #{tpu_custom_call.1} parent=11 // pred_check
          %p495 = pneg %p164
        $region26: #{tpu_custom_call.1} parent=11 // pred_check_branch
          %497 = sbr.rel (%p495) target = $region28
        $region27: #{tpu_custom_call.1} parent=11 // pred_region
          %s499 = ssub.s32 16, 16
          %500 = vsyncadd [#allocation5], %s499
          %s502 = sshll.u32 [#allocation4], 4
          %s503 = int_to_ptr.vmem [resolvable:$true] %s502
          %505 = dma.hbm_to_vmem [thread:$0]  %s5, 16, %s503, [#allocation5]
        $region28: #{tpu_custom_call.1} parent=11 // pred_fallthru
          _
        // Predicated region
        $region29: #{tpu_custom_call.1} parent=11 // pred_check
          %p506 = pneg %p185
        $region30: #{tpu_custom_call.1} parent=11 // pred_check_branch
          %508 = sbr.rel (%p506) target = $region32
        $region31: #{tpu_custom_call.1} parent=11 // pred_region
          _
        $region32: #{tpu_custom_call.1} parent=11 // pred_fallthru
          _
        // Predicated region
        $region33: #{tpu_custom_call.1} parent=11 // pred_check
          %p509 = pneg %p206
        $region34: #{tpu_custom_call.1} parent=11 // pred_check_branch
          %511 = sbr.rel (%p509) target = $region36
        $region35: #{tpu_custom_call.1} parent=11 // pred_region
          _
        $region36: #{tpu_custom_call.1} parent=11 // pred_fallthru
          _
        // Predicated region
        $region37: #{tpu_custom_call.1} parent=11 // pred_check
          %p512 = pneg %p227
        $region38: #{tpu_custom_call.1} parent=11 // pred_check_branch
          %514 = sbr.rel (%p512) target = $region40
        $region39: #{tpu_custom_call.1} parent=11 // pred_region
          _
        $region40: #{tpu_custom_call.1} parent=11 // pred_fallthru
          _
        // Predicated region
        $region41: #{tpu_custom_call.1} parent=11 // pred_check
          %p515 = pneg %p248
        $region42: #{tpu_custom_call.1} parent=11 // pred_check_branch
          %517 = sbr.rel (%p515) target = $region44
        $region43: #{tpu_custom_call.1} parent=11 // pred_region
          _
        $region44: #{tpu_custom_call.1} parent=11 // pred_fallthru
          _
        // Predicated region
        $region45: #{tpu_custom_call.1} parent=11 // pred_check
          %p518 = pneg %p269
        $region46: #{tpu_custom_call.1} parent=11 // pred_check_branch
          %520 = sbr.rel (%p518) target = $region48
        $region47: #{tpu_custom_call.1} parent=11 // pred_region
          _
        $region48: #{tpu_custom_call.1} parent=11 // pred_fallthru
          _
        // Predicated region
        $region49: #{tpu_custom_call.1} parent=11 // pred_check
          %p521 = pneg %p290
        $region50: #{tpu_custom_call.1} parent=11 // pred_check_branch
          %523 = sbr.rel (%p521) target = $region52
        $region51: #{tpu_custom_call.1} parent=11 // pred_region
          %s525 = ssub.s32 4096, 4096
          %526 = vsyncadd [#allocation5], %s525
          %s527 = sshll.u32 [#allocation6], 4
          %s528 = int_to_ptr.vmem [resolvable:$true] %s527
          %533 = dma.hbm_to_vmem [thread:$0]  %s11, 4096, %s528, [#allocation5], 128, 128, 8
        $region52: #{tpu_custom_call.1} parent=11 // pred_fallthru
          _
        // Predicated region
        $region53: #{tpu_custom_call.1} parent=11 // pred_check
          %p534 = pneg %p311
        $region54: #{tpu_custom_call.1} parent=11 // pred_check_branch
          %536 = sbr.rel (%p534) target = $region56
        $region55: #{tpu_custom_call.1} parent=11 // pred_region
          _
        $region56: #{tpu_custom_call.1} parent=11 // pred_fallthru
          _
        // Predicated region
        $region57: #{tpu_custom_call.1} parent=11 // pred_check
          %p537 = pneg %p332
        $region58: #{tpu_custom_call.1} parent=11 // pred_check_branch
          %539 = sbr.rel (%p537) target = $region60
        $region59: #{tpu_custom_call.1} parent=11 // pred_region
          %s541 = ssub.s32 4096, 4096
          %542 = vsyncadd [#allocation8], %s541
          %s543 = sshll.u32 [#allocation7], 4
          %s544 = int_to_ptr.vmem [resolvable:$true] %s543
          %549 = dma.hbm_to_vmem [thread:$0]  %s13, 4096, %s544, [#allocation8], 64, 64, 4
        $region60: #{tpu_custom_call.1} parent=11 // pred_fallthru
          _
        // Predicated region
        $region61: #{tpu_custom_call.1} parent=11 // pred_check
          %p550 = pneg %p353
        $region62: #{tpu_custom_call.1} parent=11 // pred_check_branch
          %552 = sbr.rel (%p550) target = $region64
        $region63: #{tpu_custom_call.1} parent=11 // pred_region
          _
        $region64: #{tpu_custom_call.1} parent=11 // pred_fallthru
          _
        // Predicated region
        $region65: #{tpu_custom_call.1} parent=11 // pred_check
          %p553 = pneg %p374
        $region66: #{tpu_custom_call.1} parent=11 // pred_check_branch
          %555 = sbr.rel (%p553) target = $region68
        $region67: #{tpu_custom_call.1} parent=11 // pred_region
          %s557 = ssub.s32 2048, 2048
          %558 = vsyncadd [#allocation8], %s557
          %s559 = sshll.u32 [#allocation9], 4
          %s560 = int_to_ptr.vmem [resolvable:$true] %s559
          %565 = dma.hbm_to_vmem [thread:$0]  %s15, 2048, %s560, [#allocation8], 64, 64, 4
        $region68: #{tpu_custom_call.1} parent=11 // pred_fallthru
          _
        // Predicated region
        $region69: #{tpu_custom_call.1} parent=11 // pred_check
          %p566 = pneg %p395
        $region70: #{tpu_custom_call.1} parent=11 // pred_check_branch
          %568 = sbr.rel (%p566) target = $region72
        $region71: #{tpu_custom_call.1} parent=11 // pred_region
          _
        $region72: #{tpu_custom_call.1} parent=11 // pred_fallthru
          _
        // Predicated region
        $region73: #{tpu_custom_call.1} parent=11 // pred_check
          %p569 = pneg %p416
        $region74: #{tpu_custom_call.1} parent=11 // pred_check_branch
          %571 = sbr.rel (%p569) target = $region76
        $region75: #{tpu_custom_call.1} parent=11 // pred_region
          _
        $region76: #{tpu_custom_call.1} parent=11 // pred_fallthru
          _
        // Predicated region
        $region77: #{tpu_custom_call.1} parent=11 // pred_check
          %p572 = pneg %p437
        $region78: #{tpu_custom_call.1} parent=11 // pred_check_branch
          %574 = sbr.rel (%p572) target = $region80
        $region79: #{tpu_custom_call.1} parent=11 // pred_region
          _
        $region80: #{tpu_custom_call.1} parent=11 // pred_fallthru
          _
      $region12: #{tpu_custom_call.1} parent=5 // pred_fallthru
        _
      %p575 = scmp.lt.s32.totalorder %s28, 2
      // Predicated region
      $region81: #{tpu_custom_call.1} parent=5 // pred_check
        %p576 = pneg %p575
      $region82: #{tpu_custom_call.1} parent=5 // pred_check_branch
        %578 = sbr.rel (%p576) target = $region84
      $region83: #{tpu_custom_call.1} parent=5 // pred_region
        // Predicated region
        $region85: #{tpu_custom_call.1} parent=83 // pred_check
          %p579 = pneg %p48
        $region86: #{tpu_custom_call.1} parent=83 // pred_check_branch
          %581 = sbr.rel (%p579) target = $region88
        $region87: #{tpu_custom_call.1} parent=83 // pred_region
          %p582 = scmp.lt.s32.totalorder %s28, 1
          %s583 = scalar_select %p582, %s28, 1
          %s584 = smul.addr %s583, 32
          %s585 = smul.addr %s584, 8
          %s586 = scalar_lea.vmem %s0, %s585
        $region88: #{tpu_custom_call.1} parent=83 // pred_fallthru
          _
        // Predicated region
        $region89: #{tpu_custom_call.1} parent=83 // pred_check
          %p587 = pneg %p74
        $region90: #{tpu_custom_call.1} parent=83 // pred_check_branch
          %589 = sbr.rel (%p587) target = $region92
        $region91: #{tpu_custom_call.1} parent=83 // pred_region
          %p590 = scmp.lt.s32.totalorder %s28, 1
          %s591 = scalar_select %p590, %s28, 1
          %s592 = smul.addr %s591, 32
          %s593 = smul.addr %s592, 8
          %s594 = scalar_lea.vmem %s1, %s593
        $region92: #{tpu_custom_call.1} parent=83 // pred_fallthru
          _
      $region84: #{tpu_custom_call.1} parent=5 // pred_fallthru
        _
      %p595 = scmp.le.s32.totalorder 1, %s28
      %p596 = scmp.lt.s32.totalorder %s28, 3
      %p597 = pnand %p595, %p596
      %p598 = pneg %p597
      // Predicated region
      $region93: #{tpu_custom_call.1} parent=5 // pred_check
        _
      $region94: #{tpu_custom_call.1} parent=5 // pred_check_branch
        %600 = sbr.rel (%p597) target = $region96
      $region95: #{tpu_custom_call.1} parent=5 // pred_region
        %s601 = ssub.s32 %s28, 1
        // Predicated region
        $region97: #{tpu_custom_call.1} parent=95 // pred_check
          %p602 = pneg %p122
        $region98: #{tpu_custom_call.1} parent=95 // pred_check_branch
          %604 = sbr.rel (%p602) target = $region100
        $region99: #{tpu_custom_call.1} parent=95 // pred_region
          %605 = dma.done [#allocation3], 16
        $region100: #{tpu_custom_call.1} parent=95 // pred_fallthru
          _
        // Predicated region
        $region101: #{tpu_custom_call.1} parent=95 // pred_check
          %p606 = pneg %p164
        $region102: #{tpu_custom_call.1} parent=95 // pred_check_branch
          %608 = sbr.rel (%p606) target = $region104
        $region103: #{tpu_custom_call.1} parent=95 // pred_region
          %609 = dma.done [#allocation5], 16
        $region104: #{tpu_custom_call.1} parent=95 // pred_fallthru
          _
        // Predicated region
        $region105: #{tpu_custom_call.1} parent=95 // pred_check
          %p610 = pneg %p290
        $region106: #{tpu_custom_call.1} parent=95 // pred_check_branch
          %612 = sbr.rel (%p610) target = $region108
        $region107: #{tpu_custom_call.1} parent=95 // pred_region
          %613 = dma.done [#allocation5], 4096
        $region108: #{tpu_custom_call.1} parent=95 // pred_fallthru
          _
        // Predicated region
        $region109: #{tpu_custom_call.1} parent=95 // pred_check
          %p614 = pneg %p332
        $region110: #{tpu_custom_call.1} parent=95 // pred_check_branch
          %616 = sbr.rel (%p614) target = $region112
        $region111: #{tpu_custom_call.1} parent=95 // pred_region
          %617 = dma.done [#allocation8], 4096
        $region112: #{tpu_custom_call.1} parent=95 // pred_fallthru
          _
        // Predicated region
        $region113: #{tpu_custom_call.1} parent=95 // pred_check
          %p618 = pneg %p374
        $region114: #{tpu_custom_call.1} parent=95 // pred_check_branch
          %620 = sbr.rel (%p618) target = $region116
        $region115: #{tpu_custom_call.1} parent=95 // pred_region
          %621 = dma.done [#allocation8], 2048
        $region116: #{tpu_custom_call.1} parent=95 // pred_fallthru
          _
        %p622 = scmp.lt.s32.totalorder %s33, 1
        %s623 = scalar_select %p622, %s33, 1
        %s624 = smul.addr %s623, 32
        %s625 = smul.addr %s624, 8
        %s626 = scalar_lea.vmem %s0, %s625
        %p627 = pneg %p54
        %p628 = pneg %p51
        %p629 = scmp.lt.s32.totalorder %s33, 1
        %s630 = scalar_select %p629, %s33, 1
        %s631 = smul.addr %s630, 32
        %s632 = smul.addr %s631, 8
        %s633 = scalar_lea.vmem %s1, %s632
        %p634 = pneg %p80
        %p635 = pneg %p77
        %p636 = pneg %p101
        %p637 = pneg %p98
        %p638 = pneg %p122
        %p639 = pneg %p119
        %p640 = pneg %p143
        %p641 = pneg %p140
        %p642 = pneg %p164
        %p643 = pneg %p161
        %p644 = pneg %p185
        %p645 = pneg %p182
        %p646 = pneg %p206
        %p647 = pneg %p203
        %p648 = pneg %p227
        %p649 = pneg %p224
        %p650 = pneg %p248
        %p651 = pneg %p245
        %p652 = pneg %p269
        %p653 = pneg %p266
        %p654 = pneg %p290
        %p655 = pneg %p287
        %p656 = pneg %p311
        %p657 = pneg %p308
        %p658 = pneg %p332
        %p659 = pneg %p329
        %p660 = pneg %p353
        %p661 = pneg %p350
        %p662 = pneg %p374
        %p663 = pneg %p371
        %p664 = pneg %p395
        %p665 = pneg %p392
        %p666 = pneg %p416
        %p667 = pneg %p413
        %p668 = pneg %p437
        %p669 = pneg %p434
        %p670 = pneg %p463
        %p671 = pneg %p460
        %p672 = scmp.lt.s32.totalorder %s33, 1
        %s673 = scalar_select %p672, %s33, 1
        %s674 = smul.addr %s673, 2
        %s675 = smul.addr %s674, 4
        %s676 = scalar_lea.vmem %s19, %s675
        %p677 = scmp.lt.s32.totalorder %s33, 1
        %s678 = scalar_select %p677, %s33, 1
        %s679 = smul.addr %s678, 32
        %s680 = smul.addr %s679, 8
        %s681 = scalar_lea.vmem %s0, %s680
        %p682 = scmp.lt.s32.totalorder %s33, 1
        %s683 = scalar_select %p682, %s33, 1
        %s684 = smul.addr %s683, 32
        %s685 = smul.addr %s684, 8
        %s686 = scalar_lea.vmem %s1, %s685
        %p687 = scmp.lt.s32.totalorder %s33, 1
        %s688 = scalar_select %p687, %s33, 1
        %s689 = smul.addr %s688, 2
        %s690 = smul.addr %s689, 4
        %s691 = scalar_lea.vmem %s19, %s690
        %v693 = vld [vmem:[%s681] sm:$0xff]
        %v694 = vld [vmem:[%s681 + $0x8] sm:$0xff]
        %v695 = vld [vmem:[%s681 + $0x10] sm:$0xff]
        %v696 = vld [vmem:[%s681 + $0x18] sm:$0xff]
        %v697 = vld [vmem:[%s681 + $0x20] sm:$0xff]
        %v698 = vld [vmem:[%s681 + $0x28] sm:$0xff]
        %v699 = vld [vmem:[%s681 + $0x30] sm:$0xff]
        %v700 = vld [vmem:[%s681 + $0x38] sm:$0xff]
        %v701 = vld [vmem:[%s681 + $0x40] sm:$0xff]
        %v702 = vld [vmem:[%s681 + $0x48] sm:$0xff]
        %v703 = vld [vmem:[%s681 + $0x50] sm:$0xff]
        %v704 = vld [vmem:[%s681 + $0x58] sm:$0xff]
        %v705 = vld [vmem:[%s681 + $0x60] sm:$0xff]
        %v706 = vld [vmem:[%s681 + $0x68] sm:$0xff]
        %v707 = vld [vmem:[%s681 + $0x70] sm:$0xff]
        %v708 = vld [vmem:[%s681 + $0x78] sm:$0xff]
        %v709 = vld [vmem:[%s681 + $0x80] sm:$0xff]
        %v710 = vld [vmem:[%s681 + $0x88] sm:$0xff]
        %v711 = vld [vmem:[%s681 + $0x90] sm:$0xff]
        %v712 = vld [vmem:[%s681 + $0x98] sm:$0xff]
        %v713 = vld [vmem:[%s681 + $0xa0] sm:$0xff]
        %v714 = vld [vmem:[%s681 + $0xa8] sm:$0xff]
        %v715 = vld [vmem:[%s681 + $0xb0] sm:$0xff]
        %v716 = vld [vmem:[%s681 + $0xb8] sm:$0xff]
        %v717 = vld [vmem:[%s681 + $0xc0] sm:$0xff]
        %v718 = vld [vmem:[%s681 + $0xc8] sm:$0xff]
        %v719 = vld [vmem:[%s681 + $0xd0] sm:$0xff]
        %v720 = vld [vmem:[%s681 + $0xd8] sm:$0xff]
        %v721 = vld [vmem:[%s681 + $0xe0] sm:$0xff]
        %v722 = vld [vmem:[%s681 + $0xe8] sm:$0xff]
        %v723 = vld [vmem:[%s681 + $0xf0] sm:$0xff]
        %v724 = vld [vmem:[%s681 + $0xf8] sm:$0xff]
        %v725 = vld [vmem:[%s2] sm:$0x1]
        %727 = vset.pattern.permute.xlu0 0
        %728 = vperm.xlu0 %727, %v693
        %v729 = vpop.permute.xlu0 %728
        %732 = vset.pattern.permute.xlu0 0
        %733 = vperm.xlu0 %732, %v694
        %v734 = vpop.permute.xlu0 %733
        %737 = vset.pattern.permute.xlu0 0
        %738 = vperm.xlu0 %737, %v695
        %v739 = vpop.permute.xlu0 %738
        %742 = vset.pattern.permute.xlu0 0
        %743 = vperm.xlu0 %742, %v696
        %v744 = vpop.permute.xlu0 %743
        %747 = vset.pattern.permute.xlu0 0
        %748 = vperm.xlu0 %747, %v697
        %v749 = vpop.permute.xlu0 %748
        %752 = vset.pattern.permute.xlu0 0
        %753 = vperm.xlu0 %752, %v698
        %v754 = vpop.permute.xlu0 %753
        %757 = vset.pattern.permute.xlu0 0
        %758 = vperm.xlu0 %757, %v699
        %v759 = vpop.permute.xlu0 %758
        %762 = vset.pattern.permute.xlu0 0
        %763 = vperm.xlu0 %762, %v700
        %v764 = vpop.permute.xlu0 %763
        %767 = vset.pattern.permute.xlu0 0
        %768 = vperm.xlu0 %767, %v701
        %v769 = vpop.permute.xlu0 %768
        %772 = vset.pattern.permute.xlu0 0
        %773 = vperm.xlu0 %772, %v702
        %v774 = vpop.permute.xlu0 %773
        %777 = vset.pattern.permute.xlu0 0
        %778 = vperm.xlu0 %777, %v703
        %v779 = vpop.permute.xlu0 %778
        %782 = vset.pattern.permute.xlu0 0
        %783 = vperm.xlu0 %782, %v704
        %v784 = vpop.permute.xlu0 %783
        %787 = vset.pattern.permute.xlu0 0
        %788 = vperm.xlu0 %787, %v705
        %v789 = vpop.permute.xlu0 %788
        %792 = vset.pattern.permute.xlu0 0
        %793 = vperm.xlu0 %792, %v706
        %v794 = vpop.permute.xlu0 %793
        %797 = vset.pattern.permute.xlu0 0
        %798 = vperm.xlu0 %797, %v707
        %v799 = vpop.permute.xlu0 %798
        %802 = vset.pattern.permute.xlu0 0
        %803 = vperm.xlu0 %802, %v708
        %v804 = vpop.permute.xlu0 %803
        %807 = vset.pattern.permute.xlu0 0
        %808 = vperm.xlu0 %807, %v709
        %v809 = vpop.permute.xlu0 %808
        %812 = vset.pattern.permute.xlu0 0
        %813 = vperm.xlu0 %812, %v710
        %v814 = vpop.permute.xlu0 %813
        %817 = vset.pattern.permute.xlu0 0
        %818 = vperm.xlu0 %817, %v711
        %v819 = vpop.permute.xlu0 %818
        %822 = vset.pattern.permute.xlu0 0
        %823 = vperm.xlu0 %822, %v712
        %v824 = vpop.permute.xlu0 %823
        %827 = vset.pattern.permute.xlu0 0
        %828 = vperm.xlu0 %827, %v713
        %v829 = vpop.permute.xlu0 %828
        %832 = vset.pattern.permute.xlu0 0
        %833 = vperm.xlu0 %832, %v714
        %v834 = vpop.permute.xlu0 %833
        %837 = vset.pattern.permute.xlu0 0
        %838 = vperm.xlu0 %837, %v715
        %v839 = vpop.permute.xlu0 %838
        %842 = vset.pattern.permute.xlu0 0
        %843 = vperm.xlu0 %842, %v716
        %v844 = vpop.permute.xlu0 %843
        %847 = vset.pattern.permute.xlu0 0
        %848 = vperm.xlu0 %847, %v717
        %v849 = vpop.permute.xlu0 %848
        %852 = vset.pattern.permute.xlu0 0
        %853 = vperm.xlu0 %852, %v718
        %v854 = vpop.permute.xlu0 %853
        %857 = vset.pattern.permute.xlu0 0
        %858 = vperm.xlu0 %857, %v719
        %v859 = vpop.permute.xlu0 %858
        %862 = vset.pattern.permute.xlu0 0
        %863 = vperm.xlu0 %862, %v720
        %v864 = vpop.permute.xlu0 %863
        %867 = vset.pattern.permute.xlu0 0
        %868 = vperm.xlu0 %867, %v721
        %v869 = vpop.permute.xlu0 %868
        %872 = vset.pattern.permute.xlu0 0
        %873 = vperm.xlu0 %872, %v722
        %v874 = vpop.permute.xlu0 %873
        %877 = vset.pattern.permute.xlu0 0
        %878 = vperm.xlu0 %877, %v723
        %v879 = vpop.permute.xlu0 %878
        %882 = vset.pattern.permute.xlu0 0
        %883 = vperm.xlu0 %882, %v724
        %v884 = vpop.permute.xlu0 %883
        %v886 = vlaneseq
        %v887 = vshrl.u32 %v886, 7
        %v888 = vsub.s32 0, %v887
        %v889 = vrot.slane %v725, %v888
        %v890 = vmul.f32 %v729, %v889
        %v891 = vmul.f32 %v734, %v889
        %v892 = vmul.f32 %v739, %v889
        %v893 = vmul.f32 %v744, %v889
        %v894 = vmul.f32 %v749, %v889
        %v895 = vmul.f32 %v754, %v889
        %v896 = vmul.f32 %v759, %v889
        %v897 = vmul.f32 %v764, %v889
        %v898 = vmul.f32 %v769, %v889
        %v899 = vmul.f32 %v774, %v889
        %v900 = vmul.f32 %v779, %v889
        %v901 = vmul.f32 %v784, %v889
        %v902 = vmul.f32 %v789, %v889
        %v903 = vmul.f32 %v794, %v889
        %v904 = vmul.f32 %v799, %v889
        %v905 = vmul.f32 %v804, %v889
        %v906 = vmul.f32 %v809, %v889
        %v907 = vmul.f32 %v814, %v889
        %v908 = vmul.f32 %v819, %v889
        %v909 = vmul.f32 %v824, %v889
        %v910 = vmul.f32 %v829, %v889
        %v911 = vmul.f32 %v834, %v889
        %v912 = vmul.f32 %v839, %v889
        %v913 = vmul.f32 %v844, %v889
        %v914 = vmul.f32 %v849, %v889
        %v915 = vmul.f32 %v854, %v889
        %v916 = vmul.f32 %v859, %v889
        %v917 = vmul.f32 %v864, %v889
        %v918 = vmul.f32 %v869, %v889
        %v919 = vmul.f32 %v874, %v889
        %v920 = vmul.f32 %v879, %v889
        %v921 = vmul.f32 %v884, %v889
        %v922 = vld [vmem:[%s2 + $0x1] sm:$0x1]
        %923 = vset.pattern.permute.xlu0 1
        %924 = vperm.xlu0 %923, %v693
        %v925 = vpop.permute.xlu0 %924
        %927 = vset.pattern.permute.xlu0 1
        %928 = vperm.xlu0 %927, %v694
        %v929 = vpop.permute.xlu0 %928
        %931 = vset.pattern.permute.xlu0 1
        %932 = vperm.xlu0 %931, %v695
        %v933 = vpop.permute.xlu0 %932
        %935 = vset.pattern.permute.xlu0 1
        %936 = vperm.xlu0 %935, %v696
        %v937 = vpop.permute.xlu0 %936
        %939 = vset.pattern.permute.xlu0 1
        %940 = vperm.xlu0 %939, %v697
        %v941 = vpop.permute.xlu0 %940
        %943 = vset.pattern.permute.xlu0 1
        %944 = vperm.xlu0 %943, %v698
        %v945 = vpop.permute.xlu0 %944
        %947 = vset.pattern.permute.xlu0 1
        %948 = vperm.xlu0 %947, %v699
        %v949 = vpop.permute.xlu0 %948
        %951 = vset.pattern.permute.xlu0 1
        %952 = vperm.xlu0 %951, %v700
        %v953 = vpop.permute.xlu0 %952
        %955 = vset.pattern.permute.xlu0 1
        %956 = vperm.xlu0 %955, %v701
        %v957 = vpop.permute.xlu0 %956
        %959 = vset.pattern.permute.xlu0 1
        %960 = vperm.xlu0 %959, %v702
        %v961 = vpop.permute.xlu0 %960
        %963 = vset.pattern.permute.xlu0 1
        %964 = vperm.xlu0 %963, %v703
        %v965 = vpop.permute.xlu0 %964
        %967 = vset.pattern.permute.xlu0 1
        %968 = vperm.xlu0 %967, %v704
        %v969 = vpop.permute.xlu0 %968
        %971 = vset.pattern.permute.xlu0 1
        %972 = vperm.xlu0 %971, %v705
        %v973 = vpop.permute.xlu0 %972
        %975 = vset.pattern.permute.xlu0 1
        %976 = vperm.xlu0 %975, %v706
        %v977 = vpop.permute.xlu0 %976
        %979 = vset.pattern.permute.xlu0 1
        %980 = vperm.xlu0 %979, %v707
        %v981 = vpop.permute.xlu0 %980
        %983 = vset.pattern.permute.xlu0 1
        %984 = vperm.xlu0 %983, %v708
        %v985 = vpop.permute.xlu0 %984
        %987 = vset.pattern.permute.xlu0 1
        %988 = vperm.xlu0 %987, %v709
        %v989 = vpop.permute.xlu0 %988
        %991 = vset.pattern.permute.xlu0 1
        %992 = vperm.xlu0 %991, %v710
        %v993 = vpop.permute.xlu0 %992
        %995 = vset.pattern.permute.xlu0 1
        %996 = vperm.xlu0 %995, %v711
        %v997 = vpop.permute.xlu0 %996
        %999 = vset.pattern.permute.xlu0 1
        %1000 = vperm.xlu0 %999, %v712
        %v1001 = vpop.permute.xlu0 %1000
        %1003 = vset.pattern.permute.xlu0 1
        %1004 = vperm.xlu0 %1003, %v713
        %v1005 = vpop.permute.xlu0 %1004
        %1007 = vset.pattern.permute.xlu0 1
        %1008 = vperm.xlu0 %1007, %v714
        %v1009 = vpop.permute.xlu0 %1008
        %1011 = vset.pattern.permute.xlu0 1
        %1012 = vperm.xlu0 %1011, %v715
        %v1013 = vpop.permute.xlu0 %1012
        %1015 = vset.pattern.permute.xlu0 1
        %1016 = vperm.xlu0 %1015, %v716
        %v1017 = vpop.permute.xlu0 %1016
        %1019 = vset.pattern.permute.xlu0 1
        %1020 = vperm.xlu0 %1019, %v717
        %v1021 = vpop.permute.xlu0 %1020
        %1023 = vset.pattern.permute.xlu0 1
        %1024 = vperm.xlu0 %1023, %v718
        %v1025 = vpop.permute.xlu0 %1024
        %1027 = vset.pattern.permute.xlu0 1
        %1028 = vperm.xlu0 %1027, %v719
        %v1029 = vpop.permute.xlu0 %1028
        %1031 = vset.pattern.permute.xlu0 1
        %1032 = vperm.xlu0 %1031, %v720
        %v1033 = vpop.permute.xlu0 %1032
        %1035 = vset.pattern.permute.xlu0 1
        %1036 = vperm.xlu0 %1035, %v721
        %v1037 = vpop.permute.xlu0 %1036
        %1039 = vset.pattern.permute.xlu0 1
        %1040 = vperm.xlu0 %1039, %v722
        %v1041 = vpop.permute.xlu0 %1040
        %1043 = vset.pattern.permute.xlu0 1
        %1044 = vperm.xlu0 %1043, %v723
        %v1045 = vpop.permute.xlu0 %1044
        %1047 = vset.pattern.permute.xlu0 1
        %1048 = vperm.xlu0 %1047, %v724
        %v1049 = vpop.permute.xlu0 %1048
        %v1051 = vlaneseq
        %v1052 = vshrl.u32 %v1051, 7
        %v1053 = vsub.s32 0, %v1052
        %v1054 = vrot.slane %v922, %v1053
        %v1055 = vmul.f32 %v925, %v1054
        %v1056 = vmul.f32 %v929, %v1054
        %v1057 = vmul.f32 %v933, %v1054
        %v1058 = vmul.f32 %v937, %v1054
        %v1059 = vmul.f32 %v941, %v1054
        %v1060 = vmul.f32 %v945, %v1054
        %v1061 = vmul.f32 %v949, %v1054
        %v1062 = vmul.f32 %v953, %v1054
        %v1063 = vmul.f32 %v957, %v1054
        %v1064 = vmul.f32 %v961, %v1054
        %v1065 = vmul.f32 %v965, %v1054
        %v1066 = vmul.f32 %v969, %v1054
        %v1067 = vmul.f32 %v973, %v1054
        %v1068 = vmul.f32 %v977, %v1054
        %v1069 = vmul.f32 %v981, %v1054
        %v1070 = vmul.f32 %v985, %v1054
        %v1071 = vmul.f32 %v989, %v1054
        %v1072 = vmul.f32 %v993, %v1054
        %v1073 = vmul.f32 %v997, %v1054
        %v1074 = vmul.f32 %v1001, %v1054
        %v1075 = vmul.f32 %v1005, %v1054
        %v1076 = vmul.f32 %v1009, %v1054
        %v1077 = vmul.f32 %v1013, %v1054
        %v1078 = vmul.f32 %v1017, %v1054
        %v1079 = vmul.f32 %v1021, %v1054
        %v1080 = vmul.f32 %v1025, %v1054
        %v1081 = vmul.f32 %v1029, %v1054
        %v1082 = vmul.f32 %v1033, %v1054
        %v1083 = vmul.f32 %v1037, %v1054
        %v1084 = vmul.f32 %v1041, %v1054
        %v1085 = vmul.f32 %v1045, %v1054
        %v1086 = vmul.f32 %v1049, %v1054
        %v1087 = vadd.f32 %v890, %v1055
        %v1088 = vadd.f32 %v891, %v1056
        %v1089 = vadd.f32 %v892, %v1057
        %v1090 = vadd.f32 %v893, %v1058
        %v1091 = vadd.f32 %v894, %v1059
        %v1092 = vadd.f32 %v895, %v1060
        %v1093 = vadd.f32 %v896, %v1061
        %v1094 = vadd.f32 %v897, %v1062
        %v1095 = vadd.f32 %v898, %v1063
        %v1096 = vadd.f32 %v899, %v1064
        %v1097 = vadd.f32 %v900, %v1065
        %v1098 = vadd.f32 %v901, %v1066
        %v1099 = vadd.f32 %v902, %v1067
        %v1100 = vadd.f32 %v903, %v1068
        %v1101 = vadd.f32 %v904, %v1069
        %v1102 = vadd.f32 %v905, %v1070
        %v1103 = vadd.f32 %v906, %v1071
        %v1104 = vadd.f32 %v907, %v1072
        %v1105 = vadd.f32 %v908, %v1073
        %v1106 = vadd.f32 %v909, %v1074
        %v1107 = vadd.f32 %v910, %v1075
        %v1108 = vadd.f32 %v911, %v1076
        %v1109 = vadd.f32 %v912, %v1077
        %v1110 = vadd.f32 %v913, %v1078
        %v1111 = vadd.f32 %v914, %v1079
        %v1112 = vadd.f32 %v915, %v1080
        %v1113 = vadd.f32 %v916, %v1081
        %v1114 = vadd.f32 %v917, %v1082
        %v1115 = vadd.f32 %v918, %v1083
        %v1116 = vadd.f32 %v919, %v1084
        %v1117 = vadd.f32 %v920, %v1085
        %v1118 = vadd.f32 %v921, %v1086
        %v1119 = vld [vmem:[%s2 + $0x2] sm:$0x1]
        %1120 = vset.pattern.permute.xlu0 2
        %1121 = vperm.xlu0 %1120, %v693
        %v1122 = vpop.permute.xlu0 %1121
        %1124 = vset.pattern.permute.xlu0 2
        %1125 = vperm.xlu0 %1124, %v694
        %v1126 = vpop.permute.xlu0 %1125
        %1128 = vset.pattern.permute.xlu0 2
        %1129 = vperm.xlu0 %1128, %v695
        %v1130 = vpop.permute.xlu0 %1129
        %1132 = vset.pattern.permute.xlu0 2
        %1133 = vperm.xlu0 %1132, %v696
        %v1134 = vpop.permute.xlu0 %1133
        %1136 = vset.pattern.permute.xlu0 2
        %1137 = vperm.xlu0 %1136, %v697
        %v1138 = vpop.permute.xlu0 %1137
        %1140 = vset.pattern.permute.xlu0 2
        %1141 = vperm.xlu0 %1140, %v698
        %v1142 = vpop.permute.xlu0 %1141
        %1144 = vset.pattern.permute.xlu0 2
        %1145 = vperm.xlu0 %1144, %v699
        %v1146 = vpop.permute.xlu0 %1145
        %1148 = vset.pattern.permute.xlu0 2
        %1149 = vperm.xlu0 %1148, %v700
        %v1150 = vpop.permute.xlu0 %1149
        %1152 = vset.pattern.permute.xlu0 2
        %1153 = vperm.xlu0 %1152, %v701
        %v1154 = vpop.permute.xlu0 %1153
        %1156 = vset.pattern.permute.xlu0 2
        %1157 = vperm.xlu0 %1156, %v702
        %v1158 = vpop.permute.xlu0 %1157
        %1160 = vset.pattern.permute.xlu0 2
        %1161 = vperm.xlu0 %1160, %v703
        %v1162 = vpop.permute.xlu0 %1161
        %1164 = vset.pattern.permute.xlu0 2
        %1165 = vperm.xlu0 %1164, %v704
        %v1166 = vpop.permute.xlu0 %1165
        %1168 = vset.pattern.permute.xlu0 2
        %1169 = vperm.xlu0 %1168, %v705
        %v1170 = vpop.permute.xlu0 %1169
        %1172 = vset.pattern.permute.xlu0 2
        %1173 = vperm.xlu0 %1172, %v706
        %v1174 = vpop.permute.xlu0 %1173
        %1176 = vset.pattern.permute.xlu0 2
        %1177 = vperm.xlu0 %1176, %v707
        %v1178 = vpop.permute.xlu0 %1177
        %1180 = vset.pattern.permute.xlu0 2
        %1181 = vperm.xlu0 %1180, %v708
        %v1182 = vpop.permute.xlu0 %1181
        %1184 = vset.pattern.permute.xlu0 2
        %1185 = vperm.xlu0 %1184, %v709
        %v1186 = vpop.permute.xlu0 %1185
        %1188 = vset.pattern.permute.xlu0 2
        %1189 = vperm.xlu0 %1188, %v710
        %v1190 = vpop.permute.xlu0 %1189
        %1192 = vset.pattern.permute.xlu0 2
        %1193 = vperm.xlu0 %1192, %v711
        %v1194 = vpop.permute.xlu0 %1193
        %1196 = vset.pattern.permute.xlu0 2
        %1197 = vperm.xlu0 %1196, %v712
        %v1198 = vpop.permute.xlu0 %1197
        %1200 = vset.pattern.permute.xlu0 2
        %1201 = vperm.xlu0 %1200, %v713
        %v1202 = vpop.permute.xlu0 %1201
        %1204 = vset.pattern.permute.xlu0 2
        %1205 = vperm.xlu0 %1204, %v714
        %v1206 = vpop.permute.xlu0 %1205
        %1208 = vset.pattern.permute.xlu0 2
        %1209 = vperm.xlu0 %1208, %v715
        %v1210 = vpop.permute.xlu0 %1209
        %1212 = vset.pattern.permute.xlu0 2
        %1213 = vperm.xlu0 %1212, %v716
        %v1214 = vpop.permute.xlu0 %1213
        %1216 = vset.pattern.permute.xlu0 2
        %1217 = vperm.xlu0 %1216, %v717
        %v1218 = vpop.permute.xlu0 %1217
        %1220 = vset.pattern.permute.xlu0 2
        %1221 = vperm.xlu0 %1220, %v718
        %v1222 = vpop.permute.xlu0 %1221
        %1224 = vset.pattern.permute.xlu0 2
        %1225 = vperm.xlu0 %1224, %v719
        %v1226 = vpop.permute.xlu0 %1225
        %1228 = vset.pattern.permute.xlu0 2
        %1229 = vperm.xlu0 %1228, %v720
        %v1230 = vpop.permute.xlu0 %1229
        %1232 = vset.pattern.permute.xlu0 2
        %1233 = vperm.xlu0 %1232, %v721
        %v1234 = vpop.permute.xlu0 %1233
        %1236 = vset.pattern.permute.xlu0 2
        %1237 = vperm.xlu0 %1236, %v722
        %v1238 = vpop.permute.xlu0 %1237
        %1240 = vset.pattern.permute.xlu0 2
        %1241 = vperm.xlu0 %1240, %v723
        %v1242 = vpop.permute.xlu0 %1241
        %1244 = vset.pattern.permute.xlu0 2
        %1245 = vperm.xlu0 %1244, %v724
        %v1246 = vpop.permute.xlu0 %1245
        %v1248 = vlaneseq
        %v1249 = vshrl.u32 %v1248, 7
        %v1250 = vsub.s32 0, %v1249
        %v1251 = vrot.slane %v1119, %v1250
        %v1252 = vmul.f32 %v1122, %v1251
        %v1253 = vmul.f32 %v1126, %v1251
        %v1254 = vmul.f32 %v1130, %v1251
        %v1255 = vmul.f32 %v1134, %v1251
        %v1256 = vmul.f32 %v1138, %v1251
        %v1257 = vmul.f32 %v1142, %v1251
        %v1258 = vmul.f32 %v1146, %v1251
        %v1259 = vmul.f32 %v1150, %v1251
        %v1260 = vmul.f32 %v1154, %v1251
        %v1261 = vmul.f32 %v1158, %v1251
        %v1262 = vmul.f32 %v1162, %v1251
        %v1263 = vmul.f32 %v1166, %v1251
        %v1264 = vmul.f32 %v1170, %v1251
        %v1265 = vmul.f32 %v1174, %v1251
        %v1266 = vmul.f32 %v1178, %v1251
        %v1267 = vmul.f32 %v1182, %v1251
        %v1268 = vmul.f32 %v1186, %v1251
        %v1269 = vmul.f32 %v1190, %v1251
        %v1270 = vmul.f32 %v1194, %v1251
        %v1271 = vmul.f32 %v1198, %v1251
        %v1272 = vmul.f32 %v1202, %v1251
        %v1273 = vmul.f32 %v1206, %v1251
        %v1274 = vmul.f32 %v1210, %v1251
        %v1275 = vmul.f32 %v1214, %v1251
        %v1276 = vmul.f32 %v1218, %v1251
        %v1277 = vmul.f32 %v1222, %v1251
        %v1278 = vmul.f32 %v1226, %v1251
        %v1279 = vmul.f32 %v1230, %v1251
        %v1280 = vmul.f32 %v1234, %v1251
        %v1281 = vmul.f32 %v1238, %v1251
        %v1282 = vmul.f32 %v1242, %v1251
        %v1283 = vmul.f32 %v1246, %v1251
        %v1284 = vadd.f32 %v1087, %v1252
        %v1285 = vadd.f32 %v1088, %v1253
        %v1286 = vadd.f32 %v1089, %v1254
        %v1287 = vadd.f32 %v1090, %v1255
        %v1288 = vadd.f32 %v1091, %v1256
        %v1289 = vadd.f32 %v1092, %v1257
        %v1290 = vadd.f32 %v1093, %v1258
        %v1291 = vadd.f32 %v1094, %v1259
        %v1292 = vadd.f32 %v1095, %v1260
        %v1293 = vadd.f32 %v1096, %v1261
        %v1294 = vadd.f32 %v1097, %v1262
        %v1295 = vadd.f32 %v1098, %v1263
        %v1296 = vadd.f32 %v1099, %v1264
        %v1297 = vadd.f32 %v1100, %v1265
        %v1298 = vadd.f32 %v1101, %v1266
        %v1299 = vadd.f32 %v1102, %v1267
        %v1300 = vadd.f32 %v1103, %v1268
        %v1301 = vadd.f32 %v1104, %v1269
        %v1302 = vadd.f32 %v1105, %v1270
        %v1303 = vadd.f32 %v1106, %v1271
        %v1304 = vadd.f32 %v1107, %v1272
        %v1305 = vadd.f32 %v1108, %v1273
        %v1306 = vadd.f32 %v1109, %v1274
        %v1307 = vadd.f32 %v1110, %v1275
        %v1308 = vadd.f32 %v1111, %v1276
        %v1309 = vadd.f32 %v1112, %v1277
        %v1310 = vadd.f32 %v1113, %v1278
        %v1311 = vadd.f32 %v1114, %v1279
        %v1312 = vadd.f32 %v1115, %v1280
        %v1313 = vadd.f32 %v1116, %v1281
        %v1314 = vadd.f32 %v1117, %v1282
        %v1315 = vadd.f32 %v1118, %v1283
        %v1316 = vld [vmem:[#allocation2] sm:$0x1]
        %v1318 = vlaneseq
        %v1319 = vshrl.u32 %v1318, 7
        %v1320 = vsub.s32 0, %v1319
        %v1321 = vrot.slane %v1316, %v1320
        %v1323 = vadd.f32 %v1284, %v1321
        %v1324 = vadd.f32 %v1285, %v1321
        %v1325 = vadd.f32 %v1286, %v1321
        %v1326 = vadd.f32 %v1287, %v1321
        %v1327 = vadd.f32 %v1288, %v1321
        %v1328 = vadd.f32 %v1289, %v1321
        %v1329 = vadd.f32 %v1290, %v1321
        %v1330 = vadd.f32 %v1291, %v1321
        %v1331 = vadd.f32 %v1292, %v1321
        %v1332 = vadd.f32 %v1293, %v1321
        %v1333 = vadd.f32 %v1294, %v1321
        %v1334 = vadd.f32 %v1295, %v1321
        %v1335 = vadd.f32 %v1296, %v1321
        %v1336 = vadd.f32 %v1297, %v1321
        %v1337 = vadd.f32 %v1298, %v1321
        %v1338 = vadd.f32 %v1299, %v1321
        %v1339 = vadd.f32 %v1300, %v1321
        %v1340 = vadd.f32 %v1301, %v1321
        %v1341 = vadd.f32 %v1302, %v1321
        %v1342 = vadd.f32 %v1303, %v1321
        %v1343 = vadd.f32 %v1304, %v1321
        %v1344 = vadd.f32 %v1305, %v1321
        %v1345 = vadd.f32 %v1306, %v1321
        %v1346 = vadd.f32 %v1307, %v1321
        %v1347 = vadd.f32 %v1308, %v1321
        %v1348 = vadd.f32 %v1309, %v1321
        %v1349 = vadd.f32 %v1310, %v1321
        %v1350 = vadd.f32 %v1311, %v1321
        %v1351 = vadd.f32 %v1312, %v1321
        %v1352 = vadd.f32 %v1313, %v1321
        %v1353 = vadd.f32 %v1314, %v1321
        %v1354 = vadd.f32 %v1315, %v1321
        %v1355 = vmax.f32 %v1323, 0.0
        %v1356 = vmax.f32 %v1324, 0.0
        %v1357 = vmax.f32 %v1325, 0.0
        %v1358 = vmax.f32 %v1326, 0.0
        %v1359 = vmax.f32 %v1327, 0.0
        %v1360 = vmax.f32 %v1328, 0.0
        %v1361 = vmax.f32 %v1329, 0.0
        %v1362 = vmax.f32 %v1330, 0.0
        %v1363 = vmax.f32 %v1331, 0.0
        %v1364 = vmax.f32 %v1332, 0.0
        %v1365 = vmax.f32 %v1333, 0.0
        %v1366 = vmax.f32 %v1334, 0.0
        %v1367 = vmax.f32 %v1335, 0.0
        %v1368 = vmax.f32 %v1336, 0.0
        %v1369 = vmax.f32 %v1337, 0.0
        %v1370 = vmax.f32 %v1338, 0.0
        %v1371 = vmax.f32 %v1339, 0.0
        %v1372 = vmax.f32 %v1340, 0.0
        %v1373 = vmax.f32 %v1341, 0.0
        %v1374 = vmax.f32 %v1342, 0.0
        %v1375 = vmax.f32 %v1343, 0.0
        %v1376 = vmax.f32 %v1344, 0.0
        %v1377 = vmax.f32 %v1345, 0.0
        %v1378 = vmax.f32 %v1346, 0.0
        %v1379 = vmax.f32 %v1347, 0.0
        %v1380 = vmax.f32 %v1348, 0.0
        %v1381 = vmax.f32 %v1349, 0.0
        %v1382 = vmax.f32 %v1350, 0.0
        %v1383 = vmax.f32 %v1351, 0.0
        %v1384 = vmax.f32 %v1352, 0.0
        %v1385 = vmax.f32 %v1353, 0.0
        %v1386 = vmax.f32 %v1354, 0.0
        %v1387 = vpack.c.bf16 %v1356, %v1355
        %v1388 = vpack.c.bf16 %v1358, %v1357
        %v1389 = vpack.c.bf16 %v1360, %v1359
        %v1390 = vpack.c.bf16 %v1362, %v1361
        %v1391 = vpack.c.bf16 %v1364, %v1363
        %v1392 = vpack.c.bf16 %v1366, %v1365
        %v1393 = vpack.c.bf16 %v1368, %v1367
        %v1394 = vpack.c.bf16 %v1370, %v1369
        %v1395 = vpack.c.bf16 %v1372, %v1371
        %v1396 = vpack.c.bf16 %v1374, %v1373
        %v1397 = vpack.c.bf16 %v1376, %v1375
        %v1398 = vpack.c.bf16 %v1378, %v1377
        %v1399 = vpack.c.bf16 %v1380, %v1379
        %v1400 = vpack.c.bf16 %v1382, %v1381
        %v1401 = vpack.c.bf16 %v1384, %v1383
        %v1402 = vpack.c.bf16 %v1386, %v1385
        %v1403 = vld [vmem:[%s4] sm:$0xf]
        %v1404 = vld [vmem:[%s4 + $0x4] sm:$0xf]
        %v1405 = vld [vmem:[%s4 + $0x8] sm:$0xf]
        %v1406 = vld [vmem:[%s4 + $0xc] sm:$0xf]
        %v1407 = vld [vmem:[%s4 + $0x10] sm:$0xf]
        %v1408 = vld [vmem:[%s4 + $0x14] sm:$0xf]
        %v1409 = vld [vmem:[%s4 + $0x18] sm:$0xf]
        %v1410 = vld [vmem:[%s4 + $0x1c] sm:$0xf]
        %v1411 = vld [vmem:[#allocation4] sm:$0x1]
        %v1413 = vlaneseq
        %v1414 = vshrl.u32 %v1413, 7
        %v1415 = vsub.s32 0, %v1414
        %v1416 = vrot.slane %v1411, %v1415
        %v1426 = vunpack.c.l.b16 %v1403
        %v1427 = vunpack.c.l.b16 %v1404
        %v1428 = vunpack.c.l.b16 %v1405
        %v1429 = vunpack.c.l.b16 %v1406
        %v1430 = vunpack.c.l.b16 %v1407
        %v1431 = vunpack.c.l.b16 %v1408
        %v1432 = vunpack.c.l.b16 %v1409
        %v1433 = vunpack.c.l.b16 %v1410
        %v1434 = vpack.c.b16 %v1427, %v1426
        %v1435 = vpack.c.b16 %v1429, %v1428
        %v1436 = vpack.c.b16 %v1431, %v1430
        %v1437 = vpack.c.b16 %v1433, %v1432
        %vm1442 = vcmask 523264
        %v1444 = vsel %vm1442, %v1387, 0
        %v1447 = vsel %vm1442, %v1388, 0
        %v1450 = vsel %vm1442, %v1389, 0
        %v1453 = vsel %vm1442, %v1390, 0
        %v1456 = vsel %vm1442, %v1391, 0
        %v1459 = vsel %vm1442, %v1392, 0
        %v1462 = vsel %vm1442, %v1393, 0
        %v1465 = vsel %vm1442, %v1394, 0
        %v1468 = vsel %vm1442, %v1395, 0
        %v1471 = vsel %vm1442, %v1396, 0
        %v1474 = vsel %vm1442, %v1397, 0
        %v1477 = vsel %vm1442, %v1398, 0
        %v1480 = vsel %vm1442, %v1399, 0
        %v1483 = vsel %vm1442, %v1400, 0
        %v1486 = vsel %vm1442, %v1401, 0
        %v1489 = vsel %vm1442, %v1402, 0
        %1491 = vmatprep.subr.bf16.mxu0 0
        %1492 = vmatpush1.bf16.msra.mxu0 %v1434
        %1493 = vmatprep.subr.bf16.mxu0 0
        %1494 = vmatpush1.bf16.msra.mxu0 %v1435
        %1495 = vmatprep.subr.bf16.mxu0 0
        %1496 = vmatpush1.bf16.msra.mxu0 %v1436
        %1497 = vmatprep.subr.bf16.mxu0 0
        %1498 = vmatpush1.bf16.msra.mxu0 %v1437
        %1499 = vmatprep.subr.bf16.mxu0 0
        %1500 = vmatpush1.bf16.msra.mxu0 0
        %1501 = vmatprep.subr.bf16.mxu0 0
        %1502 = vmatpush1.bf16.msra.mxu0 0
        %1503 = vmatprep.subr.bf16.mxu0 0
        %1504 = vmatpush1.bf16.msra.mxu0 0
        %1505 = vmatprep.subr.bf16.mxu0 0
        %1506 = vmatpush1.bf16.msra.mxu0 0
        %1507 = vmatprep.subr.bf16.mxu0 0
        %1508 = vmatpush1.bf16.msra.mxu0 0
        %1509 = vmatprep.subr.bf16.mxu0 0
        %1510 = vmatpush1.bf16.msra.mxu0 0
        %1511 = vmatprep.subr.bf16.mxu0 0
        %1512 = vmatpush1.bf16.msra.mxu0 0
        %1513 = vmatprep.subr.bf16.mxu0 0
        %1514 = vmatpush1.bf16.msra.mxu0 0
        %1515 = vmatprep.subr.bf16.mxu0 0
        %1516 = vmatpush1.bf16.msra.mxu0 0
        %1517 = vmatprep.subr.bf16.mxu0 0
        %1518 = vmatpush1.bf16.msra.mxu0 0
        %1519 = vmatprep.subr.bf16.mxu0 0
        %1520 = vmatpush1.bf16.msra.mxu0 0
        %1521 = vmatprep.subr.bf16.mxu0 0
        %1522 = vmatpush1.bf16.msra.mxu0 0
        %1523 = vmatprep.mubr.bf16.mxu0 0
        %1524 = vmatmul.mubr.bf16.gmra.mrb[0].mxu0 %v1444
        %v1525 = vpop.f32.mrb[0].mxu0
        %v1526 = vadd.f32 %v1416, %v1525
        %v1527 = vpop.f32.mrb[0].mxu0
        %v1528 = vpop.f32.mrb[0].mxu0
        %v1529 = vadd.f32 %v1416, %v1528
        %v1530 = vpop.f32.mrb[0].mxu0
        %1531 = vmatprep.mubr.bf16.mxu0 0
        %1532 = vmatmul.mubr.bf16.gmra.mrb[0].mxu0 %v1447
        %v1533 = vpop.f32.mrb[0].mxu0
        %v1534 = vadd.f32 %v1416, %v1533
        %v1535 = vpop.f32.mrb[0].mxu0
        %v1536 = vpop.f32.mrb[0].mxu0
        %v1537 = vadd.f32 %v1416, %v1536
        %v1538 = vpop.f32.mrb[0].mxu0
        %1539 = vmatprep.mubr.bf16.mxu0 0
        %1540 = vmatmul.mubr.bf16.gmra.mrb[0].mxu0 %v1450
        %v1541 = vpop.f32.mrb[0].mxu0
        %v1542 = vadd.f32 %v1416, %v1541
        %v1543 = vpop.f32.mrb[0].mxu0
        %v1544 = vpop.f32.mrb[0].mxu0
        %v1545 = vadd.f32 %v1416, %v1544
        %v1546 = vpop.f32.mrb[0].mxu0
        %1547 = vmatprep.mubr.bf16.mxu0 0
        %1548 = vmatmul.mubr.bf16.gmra.mrb[0].mxu0 %v1453
        %v1549 = vpop.f32.mrb[0].mxu0
        %v1550 = vadd.f32 %v1416, %v1549
        %v1551 = vpop.f32.mrb[0].mxu0
        %v1552 = vpop.f32.mrb[0].mxu0
        %v1553 = vadd.f32 %v1416, %v1552
        %v1554 = vpop.f32.mrb[0].mxu0
        %1555 = vmatprep.mubr.bf16.mxu0 0
        %1556 = vmatmul.mubr.bf16.gmra.mrb[0].mxu0 %v1456
        %v1557 = vpop.f32.mrb[0].mxu0
        %v1558 = vadd.f32 %v1416, %v1557
        %v1559 = vpop.f32.mrb[0].mxu0
        %v1560 = vpop.f32.mrb[0].mxu0
        %v1561 = vadd.f32 %v1416, %v1560
        %v1562 = vpop.f32.mrb[0].mxu0
        %1563 = vmatprep.mubr.bf16.mxu0 0
        %1564 = vmatmul.mubr.bf16.gmra.mrb[0].mxu0 %v1459
        %v1565 = vpop.f32.mrb[0].mxu0
        %v1566 = vadd.f32 %v1416, %v1565
        %v1567 = vpop.f32.mrb[0].mxu0
        %v1568 = vpop.f32.mrb[0].mxu0
        %v1569 = vadd.f32 %v1416, %v1568
        %v1570 = vpop.f32.mrb[0].mxu0
        %1571 = vmatprep.mubr.bf16.mxu0 0
        %1572 = vmatmul.mubr.bf16.gmra.mrb[0].mxu0 %v1462
        %v1573 = vpop.f32.mrb[0].mxu0
        %v1574 = vadd.f32 %v1416, %v1573
        %v1575 = vpop.f32.mrb[0].mxu0
        %v1576 = vpop.f32.mrb[0].mxu0
        %v1577 = vadd.f32 %v1416, %v1576
        %v1578 = vpop.f32.mrb[0].mxu0
        %1579 = vmatprep.mubr.bf16.mxu0 0
        %1580 = vmatmul.mubr.bf16.gmra.mrb[0].mxu0 %v1465
        %v1581 = vpop.f32.mrb[0].mxu0
        %v1582 = vadd.f32 %v1416, %v1581
        %v1583 = vpop.f32.mrb[0].mxu0
        %v1584 = vpop.f32.mrb[0].mxu0
        %v1585 = vadd.f32 %v1416, %v1584
        %v1586 = vpop.f32.mrb[0].mxu0
        %1587 = vmatprep.mubr.bf16.mxu0 0
        %1588 = vmatmul.mubr.bf16.gmra.mrb[0].mxu0 %v1468
        %v1589 = vpop.f32.mrb[0].mxu0
        %v1590 = vadd.f32 %v1416, %v1589
        %v1591 = vpop.f32.mrb[0].mxu0
        %v1592 = vpop.f32.mrb[0].mxu0
        %v1593 = vadd.f32 %v1416, %v1592
        %v1594 = vpop.f32.mrb[0].mxu0
        %1595 = vmatprep.mubr.bf16.mxu0 0
        %1596 = vmatmul.mubr.bf16.gmra.mrb[0].mxu0 %v1471
        %v1597 = vpop.f32.mrb[0].mxu0
        %v1598 = vadd.f32 %v1416, %v1597
        %v1599 = vpop.f32.mrb[0].mxu0
        %v1600 = vpop.f32.mrb[0].mxu0
        %v1601 = vadd.f32 %v1416, %v1600
        %v1602 = vpop.f32.mrb[0].mxu0
        %1603 = vmatprep.mubr.bf16.mxu0 0
        %1604 = vmatmul.mubr.bf16.gmra.mrb[0].mxu0 %v1474
        %v1605 = vpop.f32.mrb[0].mxu0
        %v1606 = vadd.f32 %v1416, %v1605
        %v1607 = vpop.f32.mrb[0].mxu0
        %v1608 = vpop.f32.mrb[0].mxu0
        %v1609 = vadd.f32 %v1416, %v1608
        %v1610 = vpop.f32.mrb[0].mxu0
        %1611 = vmatprep.mubr.bf16.mxu0 0
        %1612 = vmatmul.mubr.bf16.gmra.mrb[0].mxu0 %v1477
        %v1613 = vpop.f32.mrb[0].mxu0
        %v1614 = vadd.f32 %v1416, %v1613
        %v1615 = vpop.f32.mrb[0].mxu0
        %v1616 = vpop.f32.mrb[0].mxu0
        %v1617 = vadd.f32 %v1416, %v1616
        %v1618 = vpop.f32.mrb[0].mxu0
        %1619 = vmatprep.mubr.bf16.mxu0 0
        %1620 = vmatmul.mubr.bf16.gmra.mrb[0].mxu0 %v1480
        %v1621 = vpop.f32.mrb[0].mxu0
        %v1622 = vadd.f32 %v1416, %v1621
        %v1623 = vpop.f32.mrb[0].mxu0
        %v1624 = vpop.f32.mrb[0].mxu0
        %v1625 = vadd.f32 %v1416, %v1624
        %v1626 = vpop.f32.mrb[0].mxu0
        %1627 = vmatprep.mubr.bf16.mxu0 0
        %1628 = vmatmul.mubr.bf16.gmra.mrb[0].mxu0 %v1483
        %v1629 = vpop.f32.mrb[0].mxu0
        %v1630 = vadd.f32 %v1416, %v1629
        %v1631 = vpop.f32.mrb[0].mxu0
        %v1632 = vpop.f32.mrb[0].mxu0
        %v1633 = vadd.f32 %v1416, %v1632
        %v1634 = vpop.f32.mrb[0].mxu0
        %1635 = vmatprep.mubr.bf16.mxu0 0
        %1636 = vmatmul.mubr.bf16.gmra.mrb[0].mxu0 %v1486
        %v1637 = vpop.f32.mrb[0].mxu0
        %v1638 = vadd.f32 %v1416, %v1637
        %v1639 = vpop.f32.mrb[0].mxu0
        %v1640 = vpop.f32.mrb[0].mxu0
        %v1641 = vadd.f32 %v1416, %v1640
        %v1642 = vpop.f32.mrb[0].mxu0
        %1643 = vmatprep.mubr.bf16.mxu0 0
        %1644 = vmatmul.mubr.bf16.gmra.mrb[0].mxu0 %v1489
        %v1645 = vpop.f32.mrb[0].mxu0
        %v1646 = vadd.f32 %v1416, %v1645
        %v1647 = vpop.f32.mrb[0].mxu0
        %v1648 = vpop.f32.mrb[0].mxu0
        %v1649 = vadd.f32 %v1416, %v1648
        %v1650 = vpop.f32.mrb[0].mxu0
        %1651 = vdwg.mxu0
        %v1652 = vmax.f32 %v1526, 0.0
        %v1653 = vmax.f32 %v1529, 0.0
        %v1654 = vmax.f32 %v1534, 0.0
        %v1655 = vmax.f32 %v1537, 0.0
        %v1656 = vmax.f32 %v1542, 0.0
        %v1657 = vmax.f32 %v1545, 0.0
        %v1658 = vmax.f32 %v1550, 0.0
        %v1659 = vmax.f32 %v1553, 0.0
        %v1660 = vmax.f32 %v1558, 0.0
        %v1661 = vmax.f32 %v1561, 0.0
        %v1662 = vmax.f32 %v1566, 0.0
        %v1663 = vmax.f32 %v1569, 0.0
        %v1664 = vmax.f32 %v1574, 0.0
        %v1665 = vmax.f32 %v1577, 0.0
        %v1666 = vmax.f32 %v1582, 0.0
        %v1667 = vmax.f32 %v1585, 0.0
        %v1668 = vmax.f32 %v1590, 0.0
        %v1669 = vmax.f32 %v1593, 0.0
        %v1670 = vmax.f32 %v1598, 0.0
        %v1671 = vmax.f32 %v1601, 0.0
        %v1672 = vmax.f32 %v1606, 0.0
        %v1673 = vmax.f32 %v1609, 0.0
        %v1674 = vmax.f32 %v1614, 0.0
        %v1675 = vmax.f32 %v1617, 0.0
        %v1676 = vmax.f32 %v1622, 0.0
        %v1677 = vmax.f32 %v1625, 0.0
        %v1678 = vmax.f32 %v1630, 0.0
        %v1679 = vmax.f32 %v1633, 0.0
        %v1680 = vmax.f32 %v1638, 0.0
        %v1681 = vmax.f32 %v1641, 0.0
        %v1682 = vmax.f32 %v1646, 0.0
        %v1683 = vmax.f32 %v1649, 0.0
        %v1684 = vpack.c.bf16 %v1653, %v1652
        %v1685 = vpack.c.bf16 %v1655, %v1654
        %v1686 = vpack.c.bf16 %v1657, %v1656
        %v1687 = vpack.c.bf16 %v1659, %v1658
        %v1688 = vpack.c.bf16 %v1661, %v1660
        %v1689 = vpack.c.bf16 %v1663, %v1662
        %v1690 = vpack.c.bf16 %v1665, %v1664
        %v1691 = vpack.c.bf16 %v1667, %v1666
        %v1692 = vpack.c.bf16 %v1669, %v1668
        %v1693 = vpack.c.bf16 %v1671, %v1670
        %v1694 = vpack.c.bf16 %v1673, %v1672
        %v1695 = vpack.c.bf16 %v1675, %v1674
        %v1696 = vpack.c.bf16 %v1677, %v1676
        %v1697 = vpack.c.bf16 %v1679, %v1678
        %v1698 = vpack.c.bf16 %v1681, %v1680
        %v1699 = vpack.c.bf16 %v1683, %v1682
        %v1700 = vld [vmem:[%s6] sm:$0xff]
        %v1701 = vld [vmem:[%s6 + $0x8] sm:$0xff]
        %v1702 = vld [vmem:[%s6 + $0x10] sm:$0xff]
        %v1703 = vld [vmem:[%s6 + $0x18] sm:$0xff]
        %v1704 = vld [vmem:[%s6 + $0x20] sm:$0xff]
        %v1705 = vld [vmem:[%s6 + $0x28] sm:$0xff]
        %v1706 = vld [vmem:[%s6 + $0x30] sm:$0xff]
        %v1707 = vld [vmem:[%s6 + $0x38] sm:$0xff]
        %v1708 = vld [vmem:[%s6 + $0x40] sm:$0xff]
        %v1709 = vld [vmem:[%s6 + $0x48] sm:$0xff]
        %v1710 = vld [vmem:[%s6 + $0x50] sm:$0xff]
        %v1711 = vld [vmem:[%s6 + $0x58] sm:$0xff]
        %v1712 = vld [vmem:[%s6 + $0x60] sm:$0xff]
        %v1713 = vld [vmem:[%s6 + $0x68] sm:$0xff]
        %v1714 = vld [vmem:[%s6 + $0x70] sm:$0xff]
        %v1715 = vld [vmem:[%s6 + $0x78] sm:$0xff]
        %v1716 = vld [vmem:[%s6 + $0x80] sm:$0xff]
        %v1717 = vld [vmem:[%s6 + $0x88] sm:$0xff]
        %v1718 = vld [vmem:[%s6 + $0x90] sm:$0xff]
        %v1719 = vld [vmem:[%s6 + $0x98] sm:$0xff]
        %v1720 = vld [vmem:[%s6 + $0xa0] sm:$0xff]
        %v1721 = vld [vmem:[%s6 + $0xa8] sm:$0xff]
        %v1722 = vld [vmem:[%s6 + $0xb0] sm:$0xff]
        %v1723 = vld [vmem:[%s6 + $0xb8] sm:$0xff]
        %v1724 = vld [vmem:[%s6 + $0xc0] sm:$0xff]
        %v1725 = vld [vmem:[%s6 + $0xc8] sm:$0xff]
        %v1726 = vld [vmem:[%s6 + $0xd0] sm:$0xff]
        %v1727 = vld [vmem:[%s6 + $0xd8] sm:$0xff]
        %v1728 = vld [vmem:[%s6 + $0xe0] sm:$0xff]
        %v1729 = vld [vmem:[%s6 + $0xe8] sm:$0xff]
        %v1730 = vld [vmem:[%s6 + $0xf0] sm:$0xff]
        %v1731 = vld [vmem:[%s6 + $0xf8] sm:$0xff]
        %v1732 = vld [vmem:[%s6 + $0x100] sm:$0xff]
        %v1733 = vld [vmem:[%s6 + $0x108] sm:$0xff]
        %v1734 = vld [vmem:[%s6 + $0x110] sm:$0xff]
        %v1735 = vld [vmem:[%s6 + $0x118] sm:$0xff]
        %v1736 = vld [vmem:[%s6 + $0x120] sm:$0xff]
        %v1737 = vld [vmem:[%s6 + $0x128] sm:$0xff]
        %v1738 = vld [vmem:[%s6 + $0x130] sm:$0xff]
        %v1739 = vld [vmem:[%s6 + $0x138] sm:$0xff]
        %v1740 = vld [vmem:[%s6 + $0x140] sm:$0xff]
        %v1741 = vld [vmem:[%s6 + $0x148] sm:$0xff]
        %v1742 = vld [vmem:[%s6 + $0x150] sm:$0xff]
        %v1743 = vld [vmem:[%s6 + $0x158] sm:$0xff]
        %v1744 = vld [vmem:[%s6 + $0x160] sm:$0xff]
        %v1745 = vld [vmem:[%s6 + $0x168] sm:$0xff]
        %v1746 = vld [vmem:[%s6 + $0x170] sm:$0xff]
        %v1747 = vld [vmem:[%s6 + $0x178] sm:$0xff]
        %v1748 = vld [vmem:[%s6 + $0x180] sm:$0xff]
        %v1749 = vld [vmem:[%s6 + $0x188] sm:$0xff]
        %v1750 = vld [vmem:[%s6 + $0x190] sm:$0xff]
        %v1751 = vld [vmem:[%s6 + $0x198] sm:$0xff]
        %v1752 = vld [vmem:[%s6 + $0x1a0] sm:$0xff]
        %v1753 = vld [vmem:[%s6 + $0x1a8] sm:$0xff]
        %v1754 = vld [vmem:[%s6 + $0x1b0] sm:$0xff]
        %v1755 = vld [vmem:[%s6 + $0x1b8] sm:$0xff]
        %v1756 = vld [vmem:[%s6 + $0x1c0] sm:$0xff]
        %v1757 = vld [vmem:[%s6 + $0x1c8] sm:$0xff]
        %v1758 = vld [vmem:[%s6 + $0x1d0] sm:$0xff]
        %v1759 = vld [vmem:[%s6 + $0x1d8] sm:$0xff]
        %v1760 = vld [vmem:[%s6 + $0x1e0] sm:$0xff]
        %v1761 = vld [vmem:[%s6 + $0x1e8] sm:$0xff]
        %v1762 = vld [vmem:[%s6 + $0x1f0] sm:$0xff]
        %v1763 = vld [vmem:[%s6 + $0x1f8] sm:$0xff]
        %v1764 = vld [vmem:[%s7] sm:$0xff]
        %v1766 = vlaneseq
        %v1767 = vshrl.u32 %v1766, 7
        %v1768 = vsub.s32 0, %v1767
        %v1769 = vrot.slane %v1764, %v1768
        %v1770 = vlaneseq
        %v1771 = vshrl.u32 %v1770, 7
        %v1772 = vsub.s32 1, %v1771
        %v1773 = vrot.slane %v1764, %v1772
        %v1774 = vlaneseq
        %v1775 = vshrl.u32 %v1774, 7
        %v1776 = vsub.s32 2, %v1775
        %v1777 = vrot.slane %v1764, %v1776
        %v1778 = vlaneseq
        %v1779 = vshrl.u32 %v1778, 7
        %v1780 = vsub.s32 3, %v1779
        %v1781 = vrot.slane %v1764, %v1780
        %v1782 = vlaneseq
        %v1783 = vshrl.u32 %v1782, 7
        %v1784 = vsub.s32 4, %v1783
        %v1785 = vrot.slane %v1764, %v1784
        %v1786 = vlaneseq
        %v1787 = vshrl.u32 %v1786, 7
        %v1788 = vsub.s32 5, %v1787
        %v1789 = vrot.slane %v1764, %v1788
        %v1790 = vlaneseq
        %v1791 = vshrl.u32 %v1790, 7
        %v1792 = vsub.s32 6, %v1791
        %v1793 = vrot.slane %v1764, %v1792
        %v1794 = vlaneseq
        %v1795 = vshrl.u32 %v1794, 7
        %v1796 = vsub.s32 7, %v1795
        %v1797 = vrot.slane %v1764, %v1796
        %v1870 = vunpack.c.l.b16 %v1700
        %v1871 = vunpack.c.h.b16 %v1700
        %v1872 = vunpack.c.l.b16 %v1701
        %v1873 = vunpack.c.h.b16 %v1701
        %v1874 = vunpack.c.l.b16 %v1702
        %v1875 = vunpack.c.h.b16 %v1702
        %v1876 = vunpack.c.l.b16 %v1703
        %v1877 = vunpack.c.h.b16 %v1703
        %v1878 = vunpack.c.l.b16 %v1704
        %v1879 = vunpack.c.h.b16 %v1704
        %v1880 = vunpack.c.l.b16 %v1705
        %v1881 = vunpack.c.h.b16 %v1705
        %v1882 = vunpack.c.l.b16 %v1706
        %v1883 = vunpack.c.h.b16 %v1706
        %v1884 = vunpack.c.l.b16 %v1707
        %v1885 = vunpack.c.h.b16 %v1707
        %v1886 = vunpack.c.l.b16 %v1708
        %v1887 = vunpack.c.h.b16 %v1708
        %v1888 = vunpack.c.l.b16 %v1709
        %v1889 = vunpack.c.h.b16 %v1709
        %v1890 = vunpack.c.l.b16 %v1710
        %v1891 = vunpack.c.h.b16 %v1710
        %v1892 = vunpack.c.l.b16 %v1711
        %v1893 = vunpack.c.h.b16 %v1711
        %v1894 = vunpack.c.l.b16 %v1712
        %v1895 = vunpack.c.h.b16 %v1712
        %v1896 = vunpack.c.l.b16 %v1713
        %v1897 = vunpack.c.h.b16 %v1713
        %v1898 = vunpack.c.l.b16 %v1714
        %v1899 = vunpack.c.h.b16 %v1714
        %v1900 = vunpack.c.l.b16 %v1715
        %v1901 = vunpack.c.h.b16 %v1715
        %v1902 = vunpack.c.l.b16 %v1716
        %v1903 = vunpack.c.h.b16 %v1716
        %v1904 = vunpack.c.l.b16 %v1717
        %v1905 = vunpack.c.h.b16 %v1717
        %v1906 = vunpack.c.l.b16 %v1718
        %v1907 = vunpack.c.h.b16 %v1718
        %v1908 = vunpack.c.l.b16 %v1719
        %v1909 = vunpack.c.h.b16 %v1719
        %v1910 = vunpack.c.l.b16 %v1720
        %v1911 = vunpack.c.h.b16 %v1720
        %v1912 = vunpack.c.l.b16 %v1721
        %v1913 = vunpack.c.h.b16 %v1721
        %v1914 = vunpack.c.l.b16 %v1722
        %v1915 = vunpack.c.h.b16 %v1722
        %v1916 = vunpack.c.l.b16 %v1723
        %v1917 = vunpack.c.h.b16 %v1723
        %v1918 = vunpack.c.l.b16 %v1724
        %v1919 = vunpack.c.h.b16 %v1724
        %v1920 = vunpack.c.l.b16 %v1725
        %v1921 = vunpack.c.h.b16 %v1725
        %v1922 = vunpack.c.l.b16 %v1726
        %v1923 = vunpack.c.h.b16 %v1726
        %v1924 = vunpack.c.l.b16 %v1727
        %v1925 = vunpack.c.h.b16 %v1727
        %v1926 = vunpack.c.l.b16 %v1728
        %v1927 = vunpack.c.h.b16 %v1728
        %v1928 = vunpack.c.l.b16 %v1729
        %v1929 = vunpack.c.h.b16 %v1729
        %v1930 = vunpack.c.l.b16 %v1730
        %v1931 = vunpack.c.h.b16 %v1730
        %v1932 = vunpack.c.l.b16 %v1731
        %v1933 = vunpack.c.h.b16 %v1731
        %v1934 = vunpack.c.l.b16 %v1732
        %v1935 = vunpack.c.h.b16 %v1732
        %v1936 = vunpack.c.l.b16 %v1733
        %v1937 = vunpack.c.h.b16 %v1733
        %v1938 = vunpack.c.l.b16 %v1734
        %v1939 = vunpack.c.h.b16 %v1734
        %v1940 = vunpack.c.l.b16 %v1735
        %v1941 = vunpack.c.h.b16 %v1735
        %v1942 = vunpack.c.l.b16 %v1736
        %v1943 = vunpack.c.h.b16 %v1736
        %v1944 = vunpack.c.l.b16 %v1737
        %v1945 = vunpack.c.h.b16 %v1737
        %v1946 = vunpack.c.l.b16 %v1738
        %v1947 = vunpack.c.h.b16 %v1738
        %v1948 = vunpack.c.l.b16 %v1739
        %v1949 = vunpack.c.h.b16 %v1739
        %v1950 = vunpack.c.l.b16 %v1740
        %v1951 = vunpack.c.h.b16 %v1740
        %v1952 = vunpack.c.l.b16 %v1741
        %v1953 = vunpack.c.h.b16 %v1741
        %v1954 = vunpack.c.l.b16 %v1742
        %v1955 = vunpack.c.h.b16 %v1742
        %v1956 = vunpack.c.l.b16 %v1743
        %v1957 = vunpack.c.h.b16 %v1743
        %v1958 = vunpack.c.l.b16 %v1744
        %v1959 = vunpack.c.h.b16 %v1744
        %v1960 = vunpack.c.l.b16 %v1745
        %v1961 = vunpack.c.h.b16 %v1745
        %v1962 = vunpack.c.l.b16 %v1746
        %v1963 = vunpack.c.h.b16 %v1746
        %v1964 = vunpack.c.l.b16 %v1747
        %v1965 = vunpack.c.h.b16 %v1747
        %v1966 = vunpack.c.l.b16 %v1748
        %v1967 = vunpack.c.h.b16 %v1748
        %v1968 = vunpack.c.l.b16 %v1749
        %v1969 = vunpack.c.h.b16 %v1749
        %v1970 = vunpack.c.l.b16 %v1750
        %v1971 = vunpack.c.h.b16 %v1750
        %v1972 = vunpack.c.l.b16 %v1751
        %v1973 = vunpack.c.h.b16 %v1751
        %v1974 = vunpack.c.l.b16 %v1752
        %v1975 = vunpack.c.h.b16 %v1752
        %v1976 = vunpack.c.l.b16 %v1753
        %v1977 = vunpack.c.h.b16 %v1753
        %v1978 = vunpack.c.l.b16 %v1754
        %v1979 = vunpack.c.h.b16 %v1754
        %v1980 = vunpack.c.l.b16 %v1755
        %v1981 = vunpack.c.h.b16 %v1755
        %v1982 = vunpack.c.l.b16 %v1756
        %v1983 = vunpack.c.h.b16 %v1756
        %v1984 = vunpack.c.l.b16 %v1757
        %v1985 = vunpack.c.h.b16 %v1757
        %v1986 = vunpack.c.l.b16 %v1758
        %v1987 = vunpack.c.h.b16 %v1758
        %v1988 = vunpack.c.l.b16 %v1759
        %v1989 = vunpack.c.h.b16 %v1759
        %v1990 = vunpack.c.l.b16 %v1760
        %v1991 = vunpack.c.h.b16 %v1760
        %v1992 = vunpack.c.l.b16 %v1761
        %v1993 = vunpack.c.h.b16 %v1761
        %v1994 = vunpack.c.l.b16 %v1762
        %v1995 = vunpack.c.h.b16 %v1762
        %v1996 = vunpack.c.l.b16 %v1763
        %v1997 = vunpack.c.h.b16 %v1763
        %v1998 = vpack.c.b16 %v1878, %v1870
        %v1999 = vpack.c.b16 %v1879, %v1871
        %v2000 = vpack.c.b16 %v1880, %v1872
        %v2001 = vpack.c.b16 %v1881, %v1873
        %v2002 = vpack.c.b16 %v1882, %v1874
        %v2003 = vpack.c.b16 %v1883, %v1875
        %v2004 = vpack.c.b16 %v1884, %v1876
        %v2005 = vpack.c.b16 %v1885, %v1877
        %v2006 = vpack.c.b16 %v1894, %v1886
        %v2007 = vpack.c.b16 %v1895, %v1887
        %v2008 = vpack.c.b16 %v1896, %v1888
        %v2009 = vpack.c.b16 %v1897, %v1889
        %v2010 = vpack.c.b16 %v1898, %v1890
        %v2011 = vpack.c.b16 %v1899, %v1891
        %v2012 = vpack.c.b16 %v1900, %v1892
        %v2013 = vpack.c.b16 %v1901, %v1893
        %v2014 = vpack.c.b16 %v1910, %v1902
        %v2015 = vpack.c.b16 %v1911, %v1903
        %v2016 = vpack.c.b16 %v1912, %v1904
        %v2017 = vpack.c.b16 %v1913, %v1905
        %v2018 = vpack.c.b16 %v1914, %v1906
        %v2019 = vpack.c.b16 %v1915, %v1907
        %v2020 = vpack.c.b16 %v1916, %v1908
        %v2021 = vpack.c.b16 %v1917, %v1909
        %v2022 = vpack.c.b16 %v1926, %v1918
        %v2023 = vpack.c.b16 %v1927, %v1919
        %v2024 = vpack.c.b16 %v1928, %v1920
        %v2025 = vpack.c.b16 %v1929, %v1921
        %v2026 = vpack.c.b16 %v1930, %v1922
        %v2027 = vpack.c.b16 %v1931, %v1923
        %v2028 = vpack.c.b16 %v1932, %v1924
        %v2029 = vpack.c.b16 %v1933, %v1925
        %v2030 = vpack.c.b16 %v1942, %v1934
        %v2031 = vpack.c.b16 %v1943, %v1935
        %v2032 = vpack.c.b16 %v1944, %v1936
        %v2033 = vpack.c.b16 %v1945, %v1937
        %v2034 = vpack.c.b16 %v1946, %v1938
        %v2035 = vpack.c.b16 %v1947, %v1939
        %v2036 = vpack.c.b16 %v1948, %v1940
        %v2037 = vpack.c.b16 %v1949, %v1941
        %v2038 = vpack.c.b16 %v1958, %v1950
        %v2039 = vpack.c.b16 %v1959, %v1951
        %v2040 = vpack.c.b16 %v1960, %v1952
        %v2041 = vpack.c.b16 %v1961, %v1953
        %v2042 = vpack.c.b16 %v1962, %v1954
        %v2043 = vpack.c.b16 %v1963, %v1955
        %v2044 = vpack.c.b16 %v1964, %v1956
        %v2045 = vpack.c.b16 %v1965, %v1957
        %v2046 = vpack.c.b16 %v1974, %v1966
        %v2047 = vpack.c.b16 %v1975, %v1967
        %v2048 = vpack.c.b16 %v1976, %v1968
        %v2049 = vpack.c.b16 %v1977, %v1969
        %v2050 = vpack.c.b16 %v1978, %v1970
        %v2051 = vpack.c.b16 %v1979, %v1971
        %v2052 = vpack.c.b16 %v1980, %v1972
        %v2053 = vpack.c.b16 %v1981, %v1973
        %v2054 = vpack.c.b16 %v1990, %v1982
        %v2055 = vpack.c.b16 %v1991, %v1983
        %v2056 = vpack.c.b16 %v1992, %v1984
        %v2057 = vpack.c.b16 %v1993, %v1985
        %v2058 = vpack.c.b16 %v1994, %v1986
        %v2059 = vpack.c.b16 %v1995, %v1987
        %v2060 = vpack.c.b16 %v1996, %v1988
        %v2061 = vpack.c.b16 %v1997, %v1989
        %2126 = vmatprep.subr.bf16.mxu0 %v1999
        %2127 = vmatpush1.bf16.msra.mxu0 %v1998
        %2128 = vmatprep.subr.bf16.mxu0 %v2007
        %2129 = vmatpush1.bf16.msra.mxu0 %v2006
        %2130 = vmatprep.subr.bf16.mxu0 %v2015
        %2131 = vmatpush1.bf16.msra.mxu0 %v2014
        %2132 = vmatprep.subr.bf16.mxu0 %v2023
        %2133 = vmatpush1.bf16.msra.mxu0 %v2022
        %2134 = vmatprep.subr.bf16.mxu0 %v2031
        %2135 = vmatpush1.bf16.msra.mxu0 %v2030
        %2136 = vmatprep.subr.bf16.mxu0 %v2039
        %2137 = vmatpush1.bf16.msra.mxu0 %v2038
        %2138 = vmatprep.subr.bf16.mxu0 %v2047
        %2139 = vmatpush1.bf16.msra.mxu0 %v2046
        %2140 = vmatprep.subr.bf16.mxu0 %v2055
        %2141 = vmatpush1.bf16.msra.mxu0 %v2054
        %2142 = vmatprep.subr.bf16.mxu0 0
        %2143 = vmatpush1.bf16.msra.mxu0 0
        %2144 = vmatprep.subr.bf16.mxu0 0
        %2145 = vmatpush1.bf16.msra.mxu0 0
        %2146 = vmatprep.subr.bf16.mxu0 0
        %2147 = vmatpush1.bf16.msra.mxu0 0
        %2148 = vmatprep.subr.bf16.mxu0 0
        %2149 = vmatpush1.bf16.msra.mxu0 0
        %2150 = vmatprep.subr.bf16.mxu0 0
        %2151 = vmatpush1.bf16.msra.mxu0 0
        %2152 = vmatprep.subr.bf16.mxu0 0
        %2153 = vmatpush1.bf16.msra.mxu0 0
        %2154 = vmatprep.subr.bf16.mxu0 0
        %2155 = vmatpush1.bf16.msra.mxu0 0
        %2156 = vmatprep.subr.bf16.mxu0 0
        %2157 = vmatpush1.bf16.msra.mxu0 0
        %2158 = vmatprep.mubr.bf16.mxu0 0
        %2159 = vmatmul.mubr.bf16.gmra.mrb[0].mxu0 %v1684
        %v2160 = vpop.f32.mrb[0].mxu0
        %v2161 = vadd.f32 %v1769, %v2160
        %v2162 = vpop.f32.mrb[0].mxu0
        %v2163 = vadd.f32 %v1773, %v2162
        %v2164 = vpop.f32.mrb[0].mxu0
        %v2165 = vadd.f32 %v1769, %v2164
        %v2166 = vpop.f32.mrb[0].mxu0
        %v2167 = vadd.f32 %v1773, %v2166
        %2168 = vmatprep.mubr.bf16.mxu0 0
        %2169 = vmatmul.mubr.bf16.gmra.mrb[0].mxu0 %v1685
        %v2170 = vpop.f32.mrb[0].mxu0
        %v2171 = vadd.f32 %v1769, %v2170
        %v2172 = vpop.f32.mrb[0].mxu0
        %v2173 = vadd.f32 %v1773, %v2172
        %v2174 = vpop.f32.mrb[0].mxu0
        %v2175 = vadd.f32 %v1769, %v2174
        %v2176 = vpop.f32.mrb[0].mxu0
        %v2177 = vadd.f32 %v1773, %v2176
        %2178 = vmatprep.mubr.bf16.mxu0 0
        %2179 = vmatmul.mubr.bf16.gmra.mrb[0].mxu0 %v1686
        %v2180 = vpop.f32.mrb[0].mxu0
        %v2181 = vadd.f32 %v1769, %v2180
        %v2182 = vpop.f32.mrb[0].mxu0
        %v2183 = vadd.f32 %v1773, %v2182
        %v2184 = vpop.f32.mrb[0].mxu0
        %v2185 = vadd.f32 %v1769, %v2184
        %v2186 = vpop.f32.mrb[0].mxu0
        %v2187 = vadd.f32 %v1773, %v2186
        %2188 = vmatprep.mubr.bf16.mxu0 0
        %2189 = vmatmul.mubr.bf16.gmra.mrb[0].mxu0 %v1687
        %v2190 = vpop.f32.mrb[0].mxu0
        %v2191 = vadd.f32 %v1769, %v2190
        %v2192 = vpop.f32.mrb[0].mxu0
        %v2193 = vadd.f32 %v1773, %v2192
        %v2194 = vpop.f32.mrb[0].mxu0
        %v2195 = vadd.f32 %v1769, %v2194
        %v2196 = vpop.f32.mrb[0].mxu0
        %v2197 = vadd.f32 %v1773, %v2196
        %2198 = vmatprep.mubr.bf16.mxu0 0
        %2199 = vmatmul.mubr.bf16.gmra.mrb[0].mxu0 %v1688
        %v2200 = vpop.f32.mrb[0].mxu0
        %v2201 = vadd.f32 %v1769, %v2200
        %v2202 = vpop.f32.mrb[0].mxu0
        %v2203 = vadd.f32 %v1773, %v2202
        %v2204 = vpop.f32.mrb[0].mxu0
        %v2205 = vadd.f32 %v1769, %v2204
        %v2206 = vpop.f32.mrb[0].mxu0
        %v2207 = vadd.f32 %v1773, %v2206
        %2208 = vmatprep.mubr.bf16.mxu0 0
        %2209 = vmatmul.mubr.bf16.gmra.mrb[0].mxu0 %v1689
        %v2210 = vpop.f32.mrb[0].mxu0
        %v2211 = vadd.f32 %v1769, %v2210
        %v2212 = vpop.f32.mrb[0].mxu0
        %v2213 = vadd.f32 %v1773, %v2212
        %v2214 = vpop.f32.mrb[0].mxu0
        %v2215 = vadd.f32 %v1769, %v2214
        %v2216 = vpop.f32.mrb[0].mxu0
        %v2217 = vadd.f32 %v1773, %v2216
        %2218 = vmatprep.mubr.bf16.mxu0 0
        %2219 = vmatmul.mubr.bf16.gmra.mrb[0].mxu0 %v1690
        %v2220 = vpop.f32.mrb[0].mxu0
        %v2221 = vadd.f32 %v1769, %v2220
        %v2222 = vpop.f32.mrb[0].mxu0
        %v2223 = vadd.f32 %v1773, %v2222
        %v2224 = vpop.f32.mrb[0].mxu0
        %v2225 = vadd.f32 %v1769, %v2224
        %v2226 = vpop.f32.mrb[0].mxu0
        %v2227 = vadd.f32 %v1773, %v2226
        %2228 = vmatprep.mubr.bf16.mxu0 0
        %2229 = vmatmul.mubr.bf16.gmra.mrb[0].mxu0 %v1691
        %v2230 = vpop.f32.mrb[0].mxu0
        %v2231 = vadd.f32 %v1769, %v2230
        %v2232 = vpop.f32.mrb[0].mxu0
        %v2233 = vadd.f32 %v1773, %v2232
        %v2234 = vpop.f32.mrb[0].mxu0
        %v2235 = vadd.f32 %v1769, %v2234
        %v2236 = vpop.f32.mrb[0].mxu0
        %v2237 = vadd.f32 %v1773, %v2236
        %2238 = vmatprep.mubr.bf16.mxu0 0
        %2239 = vmatmul.mubr.bf16.gmra.mrb[0].mxu0 %v1692
        %v2240 = vpop.f32.mrb[0].mxu0
        %v2241 = vadd.f32 %v1769, %v2240
        %v2242 = vpop.f32.mrb[0].mxu0
        %v2243 = vadd.f32 %v1773, %v2242
        %v2244 = vpop.f32.mrb[0].mxu0
        %v2245 = vadd.f32 %v1769, %v2244
        %v2246 = vpop.f32.mrb[0].mxu0
        %v2247 = vadd.f32 %v1773, %v2246
        %2248 = vmatprep.mubr.bf16.mxu0 0
        %2249 = vmatmul.mubr.bf16.gmra.mrb[0].mxu0 %v1693
        %v2250 = vpop.f32.mrb[0].mxu0
        %v2251 = vadd.f32 %v1769, %v2250
        %v2252 = vpop.f32.mrb[0].mxu0
        %v2253 = vadd.f32 %v1773, %v2252
        %v2254 = vpop.f32.mrb[0].mxu0
        %v2255 = vadd.f32 %v1769, %v2254
        %v2256 = vpop.f32.mrb[0].mxu0
        %v2257 = vadd.f32 %v1773, %v2256
        %2258 = vmatprep.mubr.bf16.mxu0 0
        %2259 = vmatmul.mubr.bf16.gmra.mrb[0].mxu0 %v1694
        %v2260 = vpop.f32.mrb[0].mxu0
        %v2261 = vadd.f32 %v1769, %v2260
        %v2262 = vpop.f32.mrb[0].mxu0
        %v2263 = vadd.f32 %v1773, %v2262
        %v2264 = vpop.f32.mrb[0].mxu0
        %v2265 = vadd.f32 %v1769, %v2264
        %v2266 = vpop.f32.mrb[0].mxu0
        %v2267 = vadd.f32 %v1773, %v2266
        %2268 = vmatprep.mubr.bf16.mxu0 0
        %2269 = vmatmul.mubr.bf16.gmra.mrb[0].mxu0 %v1695
        %v2270 = vpop.f32.mrb[0].mxu0
        %v2271 = vadd.f32 %v1769, %v2270
        %v2272 = vpop.f32.mrb[0].mxu0
        %v2273 = vadd.f32 %v1773, %v2272
        %v2274 = vpop.f32.mrb[0].mxu0
        %v2275 = vadd.f32 %v1769, %v2274
        %v2276 = vpop.f32.mrb[0].mxu0
        %v2277 = vadd.f32 %v1773, %v2276
        %2278 = vmatprep.mubr.bf16.mxu0 0
        %2279 = vmatmul.mubr.bf16.gmra.mrb[0].mxu0 %v1696
        %v2280 = vpop.f32.mrb[0].mxu0
        %v2281 = vadd.f32 %v1769, %v2280
        %v2282 = vpop.f32.mrb[0].mxu0
        %v2283 = vadd.f32 %v1773, %v2282
        %v2284 = vpop.f32.mrb[0].mxu0
        %v2285 = vadd.f32 %v1769, %v2284
        %v2286 = vpop.f32.mrb[0].mxu0
        %v2287 = vadd.f32 %v1773, %v2286
        %2288 = vmatprep.mubr.bf16.mxu0 0
        %2289 = vmatmul.mubr.bf16.gmra.mrb[0].mxu0 %v1697
        %v2290 = vpop.f32.mrb[0].mxu0
        %v2291 = vadd.f32 %v1769, %v2290
        %v2292 = vpop.f32.mrb[0].mxu0
        %v2293 = vadd.f32 %v1773, %v2292
        %v2294 = vpop.f32.mrb[0].mxu0
        %v2295 = vadd.f32 %v1769, %v2294
        %v2296 = vpop.f32.mrb[0].mxu0
        %v2297 = vadd.f32 %v1773, %v2296
        %2298 = vmatprep.mubr.bf16.mxu0 0
        %2299 = vmatmul.mubr.bf16.gmra.mrb[0].mxu0 %v1698
        %v2300 = vpop.f32.mrb[0].mxu0
        %v2301 = vadd.f32 %v1769, %v2300
        %v2302 = vpop.f32.mrb[0].mxu0
        %v2303 = vadd.f32 %v1773, %v2302
        %v2304 = vpop.f32.mrb[0].mxu0
        %v2305 = vadd.f32 %v1769, %v2304
        %v2306 = vpop.f32.mrb[0].mxu0
        %v2307 = vadd.f32 %v1773, %v2306
        %2308 = vmatprep.mubr.bf16.mxu0 0
        %2309 = vmatmul.mubr.bf16.gmra.mrb[0].mxu0 %v1699
        %v2310 = vpop.f32.mrb[0].mxu0
        %v2311 = vadd.f32 %v1769, %v2310
        %v2312 = vpop.f32.mrb[0].mxu0
        %v2313 = vadd.f32 %v1773, %v2312
        %v2314 = vpop.f32.mrb[0].mxu0
        %v2315 = vadd.f32 %v1769, %v2314
        %v2316 = vpop.f32.mrb[0].mxu0
        %v2317 = vadd.f32 %v1773, %v2316
        %2318 = vdwg.mxu0
        %2319 = vmatprep.subr.bf16.mxu0 %v2001
        %2320 = vmatpush1.bf16.msra.mxu0 %v2000
        %2321 = vmatprep.subr.bf16.mxu0 %v2009
        %2322 = vmatpush1.bf16.msra.mxu0 %v2008
        %2323 = vmatprep.subr.bf16.mxu0 %v2017
        %2324 = vmatpush1.bf16.msra.mxu0 %v2016
        %2325 = vmatprep.subr.bf16.mxu0 %v2025
        %2326 = vmatpush1.bf16.msra.mxu0 %v2024
        %2327 = vmatprep.subr.bf16.mxu0 %v2033
        %2328 = vmatpush1.bf16.msra.mxu0 %v2032
        %2329 = vmatprep.subr.bf16.mxu0 %v2041
        %2330 = vmatpush1.bf16.msra.mxu0 %v2040
        %2331 = vmatprep.subr.bf16.mxu0 %v2049
        %2332 = vmatpush1.bf16.msra.mxu0 %v2048
        %2333 = vmatprep.subr.bf16.mxu0 %v2057
        %2334 = vmatpush1.bf16.msra.mxu0 %v2056
        %2335 = vmatprep.subr.bf16.mxu0 0
        %2336 = vmatpush1.bf16.msra.mxu0 0
        %2337 = vmatprep.subr.bf16.mxu0 0
        %2338 = vmatpush1.bf16.msra.mxu0 0
        %2339 = vmatprep.subr.bf16.mxu0 0
        %2340 = vmatpush1.bf16.msra.mxu0 0
        %2341 = vmatprep.subr.bf16.mxu0 0
        %2342 = vmatpush1.bf16.msra.mxu0 0
        %2343 = vmatprep.subr.bf16.mxu0 0
        %2344 = vmatpush1.bf16.msra.mxu0 0
        %2345 = vmatprep.subr.bf16.mxu0 0
        %2346 = vmatpush1.bf16.msra.mxu0 0
        %2347 = vmatprep.subr.bf16.mxu0 0
        %2348 = vmatpush1.bf16.msra.mxu0 0
        %2349 = vmatprep.subr.bf16.mxu0 0
        %2350 = vmatpush1.bf16.msra.mxu0 0
        %2351 = vmatprep.mubr.bf16.mxu0 0
        %2352 = vmatmul.mubr.bf16.gmra.mrb[0].mxu0 %v1684
        %v2353 = vpop.f32.mrb[0].mxu0
        %v2354 = vadd.f32 %v1777, %v2353
        %v2355 = vpop.f32.mrb[0].mxu0
        %v2356 = vadd.f32 %v1781, %v2355
        %v2357 = vpop.f32.mrb[0].mxu0
        %v2358 = vadd.f32 %v1777, %v2357
        %v2359 = vpop.f32.mrb[0].mxu0
        %v2360 = vadd.f32 %v1781, %v2359
        %2361 = vmatprep.mubr.bf16.mxu0 0
        %2362 = vmatmul.mubr.bf16.gmra.mrb[0].mxu0 %v1685
        %v2363 = vpop.f32.mrb[0].mxu0
        %v2364 = vadd.f32 %v1777, %v2363
        %v2365 = vpop.f32.mrb[0].mxu0
        %v2366 = vadd.f32 %v1781, %v2365
        %v2367 = vpop.f32.mrb[0].mxu0
        %v2368 = vadd.f32 %v1777, %v2367
        %v2369 = vpop.f32.mrb[0].mxu0
        %v2370 = vadd.f32 %v1781, %v2369
        %2371 = vmatprep.mubr.bf16.mxu0 0
        %2372 = vmatmul.mubr.bf16.gmra.mrb[0].mxu0 %v1686
        %v2373 = vpop.f32.mrb[0].mxu0
        %v2374 = vadd.f32 %v1777, %v2373
        %v2375 = vpop.f32.mrb[0].mxu0
        %v2376 = vadd.f32 %v1781, %v2375
        %v2377 = vpop.f32.mrb[0].mxu0
        %v2378 = vadd.f32 %v1777, %v2377
        %v2379 = vpop.f32.mrb[0].mxu0
        %v2380 = vadd.f32 %v1781, %v2379
        %2381 = vmatprep.mubr.bf16.mxu0 0
        %2382 = vmatmul.mubr.bf16.gmra.mrb[0].mxu0 %v1687
        %v2383 = vpop.f32.mrb[0].mxu0
        %v2384 = vadd.f32 %v1777, %v2383
        %v2385 = vpop.f32.mrb[0].mxu0
        %v2386 = vadd.f32 %v1781, %v2385
        %v2387 = vpop.f32.mrb[0].mxu0
        %v2388 = vadd.f32 %v1777, %v2387
        %v2389 = vpop.f32.mrb[0].mxu0
        %v2390 = vadd.f32 %v1781, %v2389
        %2391 = vmatprep.mubr.bf16.mxu0 0
        %2392 = vmatmul.mubr.bf16.gmra.mrb[0].mxu0 %v1688
        %v2393 = vpop.f32.mrb[0].mxu0
        %v2394 = vadd.f32 %v1777, %v2393
        %v2395 = vpop.f32.mrb[0].mxu0
        %v2396 = vadd.f32 %v1781, %v2395
        %v2397 = vpop.f32.mrb[0].mxu0
        %v2398 = vadd.f32 %v1777, %v2397
        %v2399 = vpop.f32.mrb[0].mxu0
        %v2400 = vadd.f32 %v1781, %v2399
        %2401 = vmatprep.mubr.bf16.mxu0 0
        %2402 = vmatmul.mubr.bf16.gmra.mrb[0].mxu0 %v1689
        %v2403 = vpop.f32.mrb[0].mxu0
        %v2404 = vadd.f32 %v1777, %v2403
        %v2405 = vpop.f32.mrb[0].mxu0
        %v2406 = vadd.f32 %v1781, %v2405
        %v2407 = vpop.f32.mrb[0].mxu0
        %v2408 = vadd.f32 %v1777, %v2407
        %v2409 = vpop.f32.mrb[0].mxu0
        %v2410 = vadd.f32 %v1781, %v2409
        %2411 = vmatprep.mubr.bf16.mxu0 0
        %2412 = vmatmul.mubr.bf16.gmra.mrb[0].mxu0 %v1690
        %v2413 = vpop.f32.mrb[0].mxu0
        %v2414 = vadd.f32 %v1777, %v2413
        %v2415 = vpop.f32.mrb[0].mxu0
        %v2416 = vadd.f32 %v1781, %v2415
        %v2417 = vpop.f32.mrb[0].mxu0
        %v2418 = vadd.f32 %v1777, %v2417
        %v2419 = vpop.f32.mrb[0].mxu0
        %v2420 = vadd.f32 %v1781, %v2419
        %2421 = vmatprep.mubr.bf16.mxu0 0
        %2422 = vmatmul.mubr.bf16.gmra.mrb[0].mxu0 %v1691
        %v2423 = vpop.f32.mrb[0].mxu0
        %v2424 = vadd.f32 %v1777, %v2423
        %v2425 = vpop.f32.mrb[0].mxu0
        %v2426 = vadd.f32 %v1781, %v2425
        %v2427 = vpop.f32.mrb[0].mxu0
        %v2428 = vadd.f32 %v1777, %v2427
        %v2429 = vpop.f32.mrb[0].mxu0
        %v2430 = vadd.f32 %v1781, %v2429
        %2431 = vmatprep.mubr.bf16.mxu0 0
        %2432 = vmatmul.mubr.bf16.gmra.mrb[0].mxu0 %v1692
        %v2433 = vpop.f32.mrb[0].mxu0
        %v2434 = vadd.f32 %v1777, %v2433
        %v2435 = vpop.f32.mrb[0].mxu0
        %v2436 = vadd.f32 %v1781, %v2435
        %v2437 = vpop.f32.mrb[0].mxu0
        %v2438 = vadd.f32 %v1777, %v2437
        %v2439 = vpop.f32.mrb[0].mxu0
        %v2440 = vadd.f32 %v1781, %v2439
        %2441 = vmatprep.mubr.bf16.mxu0 0
        %2442 = vmatmul.mubr.bf16.gmra.mrb[0].mxu0 %v1693
        %v2443 = vpop.f32.mrb[0].mxu0
        %v2444 = vadd.f32 %v1777, %v2443
        %v2445 = vpop.f32.mrb[0].mxu0
        %v2446 = vadd.f32 %v1781, %v2445
        %v2447 = vpop.f32.mrb[0].mxu0
        %v2448 = vadd.f32 %v1777, %v2447
        %v2449 = vpop.f32.mrb[0].mxu0
        %v2450 = vadd.f32 %v1781, %v2449
        %2451 = vmatprep.mubr.bf16.mxu0 0
        %2452 = vmatmul.mubr.bf16.gmra.mrb[0].mxu0 %v1694
        %v2453 = vpop.f32.mrb[0].mxu0
        %v2454 = vadd.f32 %v1777, %v2453
        %v2455 = vpop.f32.mrb[0].mxu0
        %v2456 = vadd.f32 %v1781, %v2455
        %v2457 = vpop.f32.mrb[0].mxu0
        %v2458 = vadd.f32 %v1777, %v2457
        %v2459 = vpop.f32.mrb[0].mxu0
        %v2460 = vadd.f32 %v1781, %v2459
        %2461 = vmatprep.mubr.bf16.mxu0 0
        %2462 = vmatmul.mubr.bf16.gmra.mrb[0].mxu0 %v1695
        %v2463 = vpop.f32.mrb[0].mxu0
        %v2464 = vadd.f32 %v1777, %v2463
        %v2465 = vpop.f32.mrb[0].mxu0
        %v2466 = vadd.f32 %v1781, %v2465
        %v2467 = vpop.f32.mrb[0].mxu0
        %v2468 = vadd.f32 %v1777, %v2467
        %v2469 = vpop.f32.mrb[0].mxu0
        %v2470 = vadd.f32 %v1781, %v2469
        %2471 = vmatprep.mubr.bf16.mxu0 0
        %2472 = vmatmul.mubr.bf16.gmra.mrb[0].mxu0 %v1696
        %v2473 = vpop.f32.mrb[0].mxu0
        %v2474 = vadd.f32 %v1777, %v2473
        %v2475 = vpop.f32.mrb[0].mxu0
        %v2476 = vadd.f32 %v1781, %v2475
        %v2477 = vpop.f32.mrb[0].mxu0
        %v2478 = vadd.f32 %v1777, %v2477
        %v2479 = vpop.f32.mrb[0].mxu0
        %v2480 = vadd.f32 %v1781, %v2479
        %2481 = vmatprep.mubr.bf16.mxu0 0
        %2482 = vmatmul.mubr.bf16.gmra.mrb[0].mxu0 %v1697
        %v2483 = vpop.f32.mrb[0].mxu0
        %v2484 = vadd.f32 %v1777, %v2483
        %v2485 = vpop.f32.mrb[0].mxu0
        %v2486 = vadd.f32 %v1781, %v2485
        %v2487 = vpop.f32.mrb[0].mxu0
        %v2488 = vadd.f32 %v1777, %v2487
        %v2489 = vpop.f32.mrb[0].mxu0
        %v2490 = vadd.f32 %v1781, %v2489
        %2491 = vmatprep.mubr.bf16.mxu0 0
        %2492 = vmatmul.mubr.bf16.gmra.mrb[0].mxu0 %v1698
        %v2493 = vpop.f32.mrb[0].mxu0
        %v2494 = vadd.f32 %v1777, %v2493
        %v2495 = vpop.f32.mrb[0].mxu0
        %v2496 = vadd.f32 %v1781, %v2495
        %v2497 = vpop.f32.mrb[0].mxu0
        %v2498 = vadd.f32 %v1777, %v2497
        %v2499 = vpop.f32.mrb[0].mxu0
        %v2500 = vadd.f32 %v1781, %v2499
        %2501 = vmatprep.mubr.bf16.mxu0 0
        %2502 = vmatmul.mubr.bf16.gmra.mrb[0].mxu0 %v1699
        %v2503 = vpop.f32.mrb[0].mxu0
        %v2504 = vadd.f32 %v1777, %v2503
        %v2505 = vpop.f32.mrb[0].mxu0
        %v2506 = vadd.f32 %v1781, %v2505
        %v2507 = vpop.f32.mrb[0].mxu0
        %v2508 = vadd.f32 %v1777, %v2507
        %v2509 = vpop.f32.mrb[0].mxu0
        %v2510 = vadd.f32 %v1781, %v2509
        %2511 = vdwg.mxu0
        %2512 = vmatprep.subr.bf16.mxu0 %v2003
        %2513 = vmatpush1.bf16.msra.mxu0 %v2002
        %2514 = vmatprep.subr.bf16.mxu0 %v2011
        %2515 = vmatpush1.bf16.msra.mxu0 %v2010
        %2516 = vmatprep.subr.bf16.mxu0 %v2019
        %2517 = vmatpush1.bf16.msra.mxu0 %v2018
        %2518 = vmatprep.subr.bf16.mxu0 %v2027
        %2519 = vmatpush1.bf16.msra.mxu0 %v2026
        %2520 = vmatprep.subr.bf16.mxu0 %v2035
        %2521 = vmatpush1.bf16.msra.mxu0 %v2034
        %2522 = vmatprep.subr.bf16.mxu0 %v2043
        %2523 = vmatpush1.bf16.msra.mxu0 %v2042
        %2524 = vmatprep.subr.bf16.mxu0 %v2051
        %2525 = vmatpush1.bf16.msra.mxu0 %v2050
        %2526 = vmatprep.subr.bf16.mxu0 %v2059
        %2527 = vmatpush1.bf16.msra.mxu0 %v2058
        %2528 = vmatprep.subr.bf16.mxu0 0
        %2529 = vmatpush1.bf16.msra.mxu0 0
        %2530 = vmatprep.subr.bf16.mxu0 0
        %2531 = vmatpush1.bf16.msra.mxu0 0
        %2532 = vmatprep.subr.bf16.mxu0 0
        %2533 = vmatpush1.bf16.msra.mxu0 0
        %2534 = vmatprep.subr.bf16.mxu0 0
        %2535 = vmatpush1.bf16.msra.mxu0 0
        %2536 = vmatprep.subr.bf16.mxu0 0
        %2537 = vmatpush1.bf16.msra.mxu0 0
        %2538 = vmatprep.subr.bf16.mxu0 0
        %2539 = vmatpush1.bf16.msra.mxu0 0
        %2540 = vmatprep.subr.bf16.mxu0 0
        %2541 = vmatpush1.bf16.msra.mxu0 0
        %2542 = vmatprep.subr.bf16.mxu0 0
        %2543 = vmatpush1.bf16.msra.mxu0 0
        %2544 = vmatprep.mubr.bf16.mxu0 0
        %2545 = vmatmul.mubr.bf16.gmra.mrb[0].mxu0 %v1684
        %v2546 = vpop.f32.mrb[0].mxu0
        %v2547 = vadd.f32 %v1785, %v2546
        %v2548 = vpop.f32.mrb[0].mxu0
        %v2549 = vadd.f32 %v1789, %v2548
        %v2550 = vpop.f32.mrb[0].mxu0
        %v2551 = vadd.f32 %v1785, %v2550
        %v2552 = vpop.f32.mrb[0].mxu0
        %v2553 = vadd.f32 %v1789, %v2552
        %2554 = vmatprep.mubr.bf16.mxu0 0
        %2555 = vmatmul.mubr.bf16.gmra.mrb[0].mxu0 %v1685
        %v2556 = vpop.f32.mrb[0].mxu0
        %v2557 = vadd.f32 %v1785, %v2556
        %v2558 = vpop.f32.mrb[0].mxu0
        %v2559 = vadd.f32 %v1789, %v2558
        %v2560 = vpop.f32.mrb[0].mxu0
        %v2561 = vadd.f32 %v1785, %v2560
        %v2562 = vpop.f32.mrb[0].mxu0
        %v2563 = vadd.f32 %v1789, %v2562
        %2564 = vmatprep.mubr.bf16.mxu0 0
        %2565 = vmatmul.mubr.bf16.gmra.mrb[0].mxu0 %v1686
        %v2566 = vpop.f32.mrb[0].mxu0
        %v2567 = vadd.f32 %v1785, %v2566
        %v2568 = vpop.f32.mrb[0].mxu0
        %v2569 = vadd.f32 %v1789, %v2568
        %v2570 = vpop.f32.mrb[0].mxu0
        %v2571 = vadd.f32 %v1785, %v2570
        %v2572 = vpop.f32.mrb[0].mxu0
        %v2573 = vadd.f32 %v1789, %v2572
        %2574 = vmatprep.mubr.bf16.mxu0 0
        %2575 = vmatmul.mubr.bf16.gmra.mrb[0].mxu0 %v1687
        %v2576 = vpop.f32.mrb[0].mxu0
        %v2577 = vadd.f32 %v1785, %v2576
        %v2578 = vpop.f32.mrb[0].mxu0
        %v2579 = vadd.f32 %v1789, %v2578
        %v2580 = vpop.f32.mrb[0].mxu0
        %v2581 = vadd.f32 %v1785, %v2580
        %v2582 = vpop.f32.mrb[0].mxu0
        %v2583 = vadd.f32 %v1789, %v2582
        %2584 = vmatprep.mubr.bf16.mxu0 0
        %2585 = vmatmul.mubr.bf16.gmra.mrb[0].mxu0 %v1688
        %v2586 = vpop.f32.mrb[0].mxu0
        %v2587 = vadd.f32 %v1785, %v2586
        %v2588 = vpop.f32.mrb[0].mxu0
        %v2589 = vadd.f32 %v1789, %v2588
        %v2590 = vpop.f32.mrb[0].mxu0
        %v2591 = vadd.f32 %v1785, %v2590
        %v2592 = vpop.f32.mrb[0].mxu0
        %v2593 = vadd.f32 %v1789, %v2592
        %2594 = vmatprep.mubr.bf16.mxu0 0
        %2595 = vmatmul.mubr.bf16.gmra.mrb[0].mxu0 %v1689
        %v2596 = vpop.f32.mrb[0].mxu0
        %v2597 = vadd.f32 %v1785, %v2596
        %v2598 = vpop.f32.mrb[0].mxu0
        %v2599 = vadd.f32 %v1789, %v2598
        %v2600 = vpop.f32.mrb[0].mxu0
        %v2601 = vadd.f32 %v1785, %v2600
        %v2602 = vpop.f32.mrb[0].mxu0
        %v2603 = vadd.f32 %v1789, %v2602
        %2604 = vmatprep.mubr.bf16.mxu0 0
        %2605 = vmatmul.mubr.bf16.gmra.mrb[0].mxu0 %v1690
        %v2606 = vpop.f32.mrb[0].mxu0
        %v2607 = vadd.f32 %v1785, %v2606
        %v2608 = vpop.f32.mrb[0].mxu0
        %v2609 = vadd.f32 %v1789, %v2608
        %v2610 = vpop.f32.mrb[0].mxu0
        %v2611 = vadd.f32 %v1785, %v2610
        %v2612 = vpop.f32.mrb[0].mxu0
        %v2613 = vadd.f32 %v1789, %v2612
        %2614 = vmatprep.mubr.bf16.mxu0 0
        %2615 = vmatmul.mubr.bf16.gmra.mrb[0].mxu0 %v1691
        %v2616 = vpop.f32.mrb[0].mxu0
        %v2617 = vadd.f32 %v1785, %v2616
        %v2618 = vpop.f32.mrb[0].mxu0
        %v2619 = vadd.f32 %v1789, %v2618
        %v2620 = vpop.f32.mrb[0].mxu0
        %v2621 = vadd.f32 %v1785, %v2620
        %v2622 = vpop.f32.mrb[0].mxu0
        %v2623 = vadd.f32 %v1789, %v2622
        %2624 = vmatprep.mubr.bf16.mxu0 0
        %2625 = vmatmul.mubr.bf16.gmra.mrb[0].mxu0 %v1692
        %v2626 = vpop.f32.mrb[0].mxu0
        %v2627 = vadd.f32 %v1785, %v2626
        %v2628 = vpop.f32.mrb[0].mxu0
        %v2629 = vadd.f32 %v1789, %v2628
        %v2630 = vpop.f32.mrb[0].mxu0
        %v2631 = vadd.f32 %v1785, %v2630
        %v2632 = vpop.f32.mrb[0].mxu0
        %v2633 = vadd.f32 %v1789, %v2632
        %2634 = vmatprep.mubr.bf16.mxu0 0
        %2635 = vmatmul.mubr.bf16.gmra.mrb[0].mxu0 %v1693
        %v2636 = vpop.f32.mrb[0].mxu0
        %v2637 = vadd.f32 %v1785, %v2636
        %v2638 = vpop.f32.mrb[0].mxu0
        %v2639 = vadd.f32 %v1789, %v2638
        %v2640 = vpop.f32.mrb[0].mxu0
        %v2641 = vadd.f32 %v1785, %v2640
        %v2642 = vpop.f32.mrb[0].mxu0
        %v2643 = vadd.f32 %v1789, %v2642
        %2644 = vmatprep.mubr.bf16.mxu0 0
        %2645 = vmatmul.mubr.bf16.gmra.mrb[0].mxu0 %v1694
        %v2646 = vpop.f32.mrb[0].mxu0
        %v2647 = vadd.f32 %v1785, %v2646
        %v2648 = vpop.f32.mrb[0].mxu0
        %v2649 = vadd.f32 %v1789, %v2648
        %v2650 = vpop.f32.mrb[0].mxu0
        %v2651 = vadd.f32 %v1785, %v2650
        %v2652 = vpop.f32.mrb[0].mxu0
        %v2653 = vadd.f32 %v1789, %v2652
        %2654 = vmatprep.mubr.bf16.mxu0 0
        %2655 = vmatmul.mubr.bf16.gmra.mrb[0].mxu0 %v1695
        %v2656 = vpop.f32.mrb[0].mxu0
        %v2657 = vadd.f32 %v1785, %v2656
        %v2658 = vpop.f32.mrb[0].mxu0
        %v2659 = vadd.f32 %v1789, %v2658
        %v2660 = vpop.f32.mrb[0].mxu0
        %v2661 = vadd.f32 %v1785, %v2660
        %v2662 = vpop.f32.mrb[0].mxu0
        %v2663 = vadd.f32 %v1789, %v2662
        %2664 = vmatprep.mubr.bf16.mxu0 0
        %2665 = vmatmul.mubr.bf16.gmra.mrb[0].mxu0 %v1696
        %v2666 = vpop.f32.mrb[0].mxu0
        %v2667 = vadd.f32 %v1785, %v2666
        %v2668 = vpop.f32.mrb[0].mxu0
        %v2669 = vadd.f32 %v1789, %v2668
        %v2670 = vpop.f32.mrb[0].mxu0
        %v2671 = vadd.f32 %v1785, %v2670
        %v2672 = vpop.f32.mrb[0].mxu0
        %v2673 = vadd.f32 %v1789, %v2672
        %2674 = vmatprep.mubr.bf16.mxu0 0
        %2675 = vmatmul.mubr.bf16.gmra.mrb[0].mxu0 %v1697
        %v2676 = vpop.f32.mrb[0].mxu0
        %v2677 = vadd.f32 %v1785, %v2676
        %v2678 = vpop.f32.mrb[0].mxu0
        %v2679 = vadd.f32 %v1789, %v2678
        %v2680 = vpop.f32.mrb[0].mxu0
        %v2681 = vadd.f32 %v1785, %v2680
        %v2682 = vpop.f32.mrb[0].mxu0
        %v2683 = vadd.f32 %v1789, %v2682
        %2684 = vmatprep.mubr.bf16.mxu0 0
        %2685 = vmatmul.mubr.bf16.gmra.mrb[0].mxu0 %v1698
        %v2686 = vpop.f32.mrb[0].mxu0
        %v2687 = vadd.f32 %v1785, %v2686
        %v2688 = vpop.f32.mrb[0].mxu0
        %v2689 = vadd.f32 %v1789, %v2688
        %v2690 = vpop.f32.mrb[0].mxu0
        %v2691 = vadd.f32 %v1785, %v2690
        %v2692 = vpop.f32.mrb[0].mxu0
        %v2693 = vadd.f32 %v1789, %v2692
        %2694 = vmatprep.mubr.bf16.mxu0 0
        %2695 = vmatmul.mubr.bf16.gmra.mrb[0].mxu0 %v1699
        %v2696 = vpop.f32.mrb[0].mxu0
        %v2697 = vadd.f32 %v1785, %v2696
        %v2698 = vpop.f32.mrb[0].mxu0
        %v2699 = vadd.f32 %v1789, %v2698
        %v2700 = vpop.f32.mrb[0].mxu0
        %v2701 = vadd.f32 %v1785, %v2700
        %v2702 = vpop.f32.mrb[0].mxu0
        %v2703 = vadd.f32 %v1789, %v2702
        %2704 = vdwg.mxu0
        %2705 = vmatprep.subr.bf16.mxu0 %v2005
        %2706 = vmatpush1.bf16.msra.mxu0 %v2004
        %2707 = vmatprep.subr.bf16.mxu0 %v2013
        %2708 = vmatpush1.bf16.msra.mxu0 %v2012
        %2709 = vmatprep.subr.bf16.mxu0 %v2021
        %2710 = vmatpush1.bf16.msra.mxu0 %v2020
        %2711 = vmatprep.subr.bf16.mxu0 %v2029
        %2712 = vmatpush1.bf16.msra.mxu0 %v2028
        %2713 = vmatprep.subr.bf16.mxu0 %v2037
        %2714 = vmatpush1.bf16.msra.mxu0 %v2036
        %2715 = vmatprep.subr.bf16.mxu0 %v2045
        %2716 = vmatpush1.bf16.msra.mxu0 %v2044
        %2717 = vmatprep.subr.bf16.mxu0 %v2053
        %2718 = vmatpush1.bf16.msra.mxu0 %v2052
        %2719 = vmatprep.subr.bf16.mxu0 %v2061
        %2720 = vmatpush1.bf16.msra.mxu0 %v2060
        %2721 = vmatprep.subr.bf16.mxu0 0
        %2722 = vmatpush1.bf16.msra.mxu0 0
        %2723 = vmatprep.subr.bf16.mxu0 0
        %2724 = vmatpush1.bf16.msra.mxu0 0
        %2725 = vmatprep.subr.bf16.mxu0 0
        %2726 = vmatpush1.bf16.msra.mxu0 0
        %2727 = vmatprep.subr.bf16.mxu0 0
        %2728 = vmatpush1.bf16.msra.mxu0 0
        %2729 = vmatprep.subr.bf16.mxu0 0
        %2730 = vmatpush1.bf16.msra.mxu0 0
        %2731 = vmatprep.subr.bf16.mxu0 0
        %2732 = vmatpush1.bf16.msra.mxu0 0
        %2733 = vmatprep.subr.bf16.mxu0 0
        %2734 = vmatpush1.bf16.msra.mxu0 0
        %2735 = vmatprep.subr.bf16.mxu0 0
        %2736 = vmatpush1.bf16.msra.mxu0 0
        %2737 = vmatprep.mubr.bf16.mxu0 0
        %2738 = vmatmul.mubr.bf16.gmra.mrb[0].mxu0 %v1684
        %v2739 = vpop.f32.mrb[0].mxu0
        %v2740 = vadd.f32 %v1793, %v2739
        %v2741 = vpop.f32.mrb[0].mxu0
        %v2742 = vadd.f32 %v1797, %v2741
        %v2743 = vpop.f32.mrb[0].mxu0
        %v2744 = vadd.f32 %v1793, %v2743
        %v2745 = vpop.f32.mrb[0].mxu0
        %v2746 = vadd.f32 %v1797, %v2745
        %2747 = vmatprep.mubr.bf16.mxu0 0
        %2748 = vmatmul.mubr.bf16.gmra.mrb[0].mxu0 %v1685
        %v2749 = vpop.f32.mrb[0].mxu0
        %v2750 = vadd.f32 %v1793, %v2749
        %v2751 = vpop.f32.mrb[0].mxu0
        %v2752 = vadd.f32 %v1797, %v2751
        %v2753 = vpop.f32.mrb[0].mxu0
        %v2754 = vadd.f32 %v1793, %v2753
        %v2755 = vpop.f32.mrb[0].mxu0
        %v2756 = vadd.f32 %v1797, %v2755
        %2757 = vmatprep.mubr.bf16.mxu0 0
        %2758 = vmatmul.mubr.bf16.gmra.mrb[0].mxu0 %v1686
        %v2759 = vpop.f32.mrb[0].mxu0
        %v2760 = vadd.f32 %v1793, %v2759
        %v2761 = vpop.f32.mrb[0].mxu0
        %v2762 = vadd.f32 %v1797, %v2761
        %v2763 = vpop.f32.mrb[0].mxu0
        %v2764 = vadd.f32 %v1793, %v2763
        %v2765 = vpop.f32.mrb[0].mxu0
        %v2766 = vadd.f32 %v1797, %v2765
        %2767 = vmatprep.mubr.bf16.mxu0 0
        %2768 = vmatmul.mubr.bf16.gmra.mrb[0].mxu0 %v1687
        %v2769 = vpop.f32.mrb[0].mxu0
        %v2770 = vadd.f32 %v1793, %v2769
        %v2771 = vpop.f32.mrb[0].mxu0
        %v2772 = vadd.f32 %v1797, %v2771
        %v2773 = vpop.f32.mrb[0].mxu0
        %v2774 = vadd.f32 %v1793, %v2773
        %v2775 = vpop.f32.mrb[0].mxu0
        %v2776 = vadd.f32 %v1797, %v2775
        %2777 = vmatprep.mubr.bf16.mxu0 0
        %2778 = vmatmul.mubr.bf16.gmra.mrb[0].mxu0 %v1688
        %v2779 = vpop.f32.mrb[0].mxu0
        %v2780 = vadd.f32 %v1793, %v2779
        %v2781 = vpop.f32.mrb[0].mxu0
        %v2782 = vadd.f32 %v1797, %v2781
        %v2783 = vpop.f32.mrb[0].mxu0
        %v2784 = vadd.f32 %v1793, %v2783
        %v2785 = vpop.f32.mrb[0].mxu0
        %v2786 = vadd.f32 %v1797, %v2785
        %2787 = vmatprep.mubr.bf16.mxu0 0
        %2788 = vmatmul.mubr.bf16.gmra.mrb[0].mxu0 %v1689
        %v2789 = vpop.f32.mrb[0].mxu0
        %v2790 = vadd.f32 %v1793, %v2789
        %v2791 = vpop.f32.mrb[0].mxu0
        %v2792 = vadd.f32 %v1797, %v2791
        %v2793 = vpop.f32.mrb[0].mxu0
        %v2794 = vadd.f32 %v1793, %v2793
        %v2795 = vpop.f32.mrb[0].mxu0
        %v2796 = vadd.f32 %v1797, %v2795
        %2797 = vmatprep.mubr.bf16.mxu0 0
        %2798 = vmatmul.mubr.bf16.gmra.mrb[0].mxu0 %v1690
        %v2799 = vpop.f32.mrb[0].mxu0
        %v2800 = vadd.f32 %v1793, %v2799
        %v2801 = vpop.f32.mrb[0].mxu0
        %v2802 = vadd.f32 %v1797, %v2801
        %v2803 = vpop.f32.mrb[0].mxu0
        %v2804 = vadd.f32 %v1793, %v2803
        %v2805 = vpop.f32.mrb[0].mxu0
        %v2806 = vadd.f32 %v1797, %v2805
        %2807 = vmatprep.mubr.bf16.mxu0 0
        %2808 = vmatmul.mubr.bf16.gmra.mrb[0].mxu0 %v1691
        %v2809 = vpop.f32.mrb[0].mxu0
        %v2810 = vadd.f32 %v1793, %v2809
        %v2811 = vpop.f32.mrb[0].mxu0
        %v2812 = vadd.f32 %v1797, %v2811
        %v2813 = vpop.f32.mrb[0].mxu0
        %v2814 = vadd.f32 %v1793, %v2813
        %v2815 = vpop.f32.mrb[0].mxu0
        %v2816 = vadd.f32 %v1797, %v2815
        %2817 = vmatprep.mubr.bf16.mxu0 0
        %2818 = vmatmul.mubr.bf16.gmra.mrb[0].mxu0 %v1692
        %v2819 = vpop.f32.mrb[0].mxu0
        %v2820 = vadd.f32 %v1793, %v2819
        %v2821 = vpop.f32.mrb[0].mxu0
        %v2822 = vadd.f32 %v1797, %v2821
        %v2823 = vpop.f32.mrb[0].mxu0
        %v2824 = vadd.f32 %v1793, %v2823
        %v2825 = vpop.f32.mrb[0].mxu0
        %v2826 = vadd.f32 %v1797, %v2825
        %2827 = vmatprep.mubr.bf16.mxu0 0
        %2828 = vmatmul.mubr.bf16.gmra.mrb[0].mxu0 %v1693
        %v2829 = vpop.f32.mrb[0].mxu0
        %v2830 = vadd.f32 %v1793, %v2829
        %v2831 = vpop.f32.mrb[0].mxu0
        %v2832 = vadd.f32 %v1797, %v2831
        %v2833 = vpop.f32.mrb[0].mxu0
        %v2834 = vadd.f32 %v1793, %v2833
        %v2835 = vpop.f32.mrb[0].mxu0
        %v2836 = vadd.f32 %v1797, %v2835
        %2837 = vmatprep.mubr.bf16.mxu0 0
        %2838 = vmatmul.mubr.bf16.gmra.mrb[0].mxu0 %v1694
        %v2839 = vpop.f32.mrb[0].mxu0
        %v2840 = vadd.f32 %v1793, %v2839
        %v2841 = vpop.f32.mrb[0].mxu0
        %v2842 = vadd.f32 %v1797, %v2841
        %v2843 = vpop.f32.mrb[0].mxu0
        %v2844 = vadd.f32 %v1793, %v2843
        %v2845 = vpop.f32.mrb[0].mxu0
        %v2846 = vadd.f32 %v1797, %v2845
        %2847 = vmatprep.mubr.bf16.mxu0 0
        %2848 = vmatmul.mubr.bf16.gmra.mrb[0].mxu0 %v1695
        %v2849 = vpop.f32.mrb[0].mxu0
        %v2850 = vadd.f32 %v1793, %v2849
        %v2851 = vpop.f32.mrb[0].mxu0
        %v2852 = vadd.f32 %v1797, %v2851
        %v2853 = vpop.f32.mrb[0].mxu0
        %v2854 = vadd.f32 %v1793, %v2853
        %v2855 = vpop.f32.mrb[0].mxu0
        %v2856 = vadd.f32 %v1797, %v2855
        %2857 = vmatprep.mubr.bf16.mxu0 0
        %2858 = vmatmul.mubr.bf16.gmra.mrb[0].mxu0 %v1696
        %v2859 = vpop.f32.mrb[0].mxu0
        %v2860 = vadd.f32 %v1793, %v2859
        %v2861 = vpop.f32.mrb[0].mxu0
        %v2862 = vadd.f32 %v1797, %v2861
        %v2863 = vpop.f32.mrb[0].mxu0
        %v2864 = vadd.f32 %v1793, %v2863
        %v2865 = vpop.f32.mrb[0].mxu0
        %v2866 = vadd.f32 %v1797, %v2865
        %2867 = vmatprep.mubr.bf16.mxu0 0
        %2868 = vmatmul.mubr.bf16.gmra.mrb[0].mxu0 %v1697
        %v2869 = vpop.f32.mrb[0].mxu0
        %v2870 = vadd.f32 %v1793, %v2869
        %v2871 = vpop.f32.mrb[0].mxu0
        %v2872 = vadd.f32 %v1797, %v2871
        %v2873 = vpop.f32.mrb[0].mxu0
        %v2874 = vadd.f32 %v1793, %v2873
        %v2875 = vpop.f32.mrb[0].mxu0
        %v2876 = vadd.f32 %v1797, %v2875
        %2877 = vmatprep.mubr.bf16.mxu0 0
        %2878 = vmatmul.mubr.bf16.gmra.mrb[0].mxu0 %v1698
        %v2879 = vpop.f32.mrb[0].mxu0
        %v2880 = vadd.f32 %v1793, %v2879
        %v2881 = vpop.f32.mrb[0].mxu0
        %v2882 = vadd.f32 %v1797, %v2881
        %v2883 = vpop.f32.mrb[0].mxu0
        %v2884 = vadd.f32 %v1793, %v2883
        %v2885 = vpop.f32.mrb[0].mxu0
        %v2886 = vadd.f32 %v1797, %v2885
        %2887 = vmatprep.mubr.bf16.mxu0 0
        %2888 = vmatmul.mubr.bf16.gmra.mrb[0].mxu0 %v1699
        %v2889 = vpop.f32.mrb[0].mxu0
        %v2890 = vadd.f32 %v1793, %v2889
        %v2891 = vpop.f32.mrb[0].mxu0
        %v2892 = vadd.f32 %v1797, %v2891
        %v2893 = vpop.f32.mrb[0].mxu0
        %v2894 = vadd.f32 %v1793, %v2893
        %v2895 = vpop.f32.mrb[0].mxu0
        %v2896 = vadd.f32 %v1797, %v2895
        %2897 = vdwg.mxu0
        %v2898 = vmax.f32 %v2161, %v2165
        %v2899 = vmax.f32 %v2898, %v2171
        %v2900 = vmax.f32 %v2899, %v2175
        %v2901 = vmax.f32 %v2900, %v2181
        %v2902 = vmax.f32 %v2901, %v2185
        %v2903 = vmax.f32 %v2902, %v2191
        %v2904 = vmax.f32 %v2903, %v2195
        %v2905 = vmax.f32 %v2904, %v2201
        %v2906 = vmax.f32 %v2905, %v2205
        %v2907 = vmax.f32 %v2906, %v2211
        %v2908 = vmax.f32 %v2907, %v2215
        %v2909 = vmax.f32 %v2908, %v2221
        %v2910 = vmax.f32 %v2909, %v2225
        %v2911 = vmax.f32 %v2910, %v2231
        %v2912 = vmax.f32 %v2911, %v2235
        %v2913 = vmax.f32 %v2912, %v2241
        %v2914 = vmax.f32 %v2913, %v2245
        %v2915 = vmax.f32 %v2914, %v2251
        %v2916 = vmax.f32 %v2915, %v2255
        %v2917 = vmax.f32 %v2916, %v2261
        %v2918 = vmax.f32 %v2917, %v2265
        %v2919 = vmax.f32 %v2918, %v2271
        %v2920 = vmax.f32 %v2919, %v2275
        %v2921 = vmax.f32 %v2920, %v2281
        %v2922 = vmax.f32 %v2921, %v2285
        %v2923 = vmax.f32 %v2922, %v2291
        %v2924 = vmax.f32 %v2923, %v2295
        %v2925 = vmax.f32 %v2924, %v2301
        %v2926 = vmax.f32 %v2925, %v2305
        %v2927 = vmax.f32 %v2926, %v2311
        %v2928 = vmax.f32 %v2927, %v2315
        %v2929 = vrot.slane %v2928, 4
        %v2930 = vmax.f32 %v2928, %v2929
        %v2931 = vrot.slane %v2930, 2
        %v2932 = vmax.f32 %v2930, %v2931
        %v2933 = vrot.slane %v2932, 1
        %v2934 = vmax.f32 %v2932, %v2933
        %v2935 = vmax.f32 %v2163, %v2167
        %v2936 = vmax.f32 %v2935, %v2173
        %v2937 = vmax.f32 %v2936, %v2177
        %v2938 = vmax.f32 %v2937, %v2183
        %v2939 = vmax.f32 %v2938, %v2187
        %v2940 = vmax.f32 %v2939, %v2193
        %v2941 = vmax.f32 %v2940, %v2197
        %v2942 = vmax.f32 %v2941, %v2203
        %v2943 = vmax.f32 %v2942, %v2207
        %v2944 = vmax.f32 %v2943, %v2213
        %v2945 = vmax.f32 %v2944, %v2217
        %v2946 = vmax.f32 %v2945, %v2223
        %v2947 = vmax.f32 %v2946, %v2227
        %v2948 = vmax.f32 %v2947, %v2233
        %v2949 = vmax.f32 %v2948, %v2237
        %v2950 = vmax.f32 %v2949, %v2243
        %v2951 = vmax.f32 %v2950, %v2247
        %v2952 = vmax.f32 %v2951, %v2253
        %v2953 = vmax.f32 %v2952, %v2257
        %v2954 = vmax.f32 %v2953, %v2263
        %v2955 = vmax.f32 %v2954, %v2267
        %v2956 = vmax.f32 %v2955, %v2273
        %v2957 = vmax.f32 %v2956, %v2277
        %v2958 = vmax.f32 %v2957, %v2283
        %v2959 = vmax.f32 %v2958, %v2287
        %v2960 = vmax.f32 %v2959, %v2293
        %v2961 = vmax.f32 %v2960, %v2297
        %v2962 = vmax.f32 %v2961, %v2303
        %v2963 = vmax.f32 %v2962, %v2307
        %v2964 = vmax.f32 %v2963, %v2313
        %v2965 = vmax.f32 %v2964, %v2317
        %v2966 = vrot.slane %v2965, 4
        %v2967 = vmax.f32 %v2965, %v2966
        %v2968 = vrot.slane %v2967, 2
        %v2969 = vmax.f32 %v2967, %v2968
        %v2970 = vrot.slane %v2969, 1
        %v2971 = vmax.f32 %v2969, %v2970
        %v2972 = vmax.f32 %v2354, %v2358
        %v2973 = vmax.f32 %v2972, %v2364
        %v2974 = vmax.f32 %v2973, %v2368
        %v2975 = vmax.f32 %v2974, %v2374
        %v2976 = vmax.f32 %v2975, %v2378
        %v2977 = vmax.f32 %v2976, %v2384
        %v2978 = vmax.f32 %v2977, %v2388
        %v2979 = vmax.f32 %v2978, %v2394
        %v2980 = vmax.f32 %v2979, %v2398
        %v2981 = vmax.f32 %v2980, %v2404
        %v2982 = vmax.f32 %v2981, %v2408
        %v2983 = vmax.f32 %v2982, %v2414
        %v2984 = vmax.f32 %v2983, %v2418
        %v2985 = vmax.f32 %v2984, %v2424
        %v2986 = vmax.f32 %v2985, %v2428
        %v2987 = vmax.f32 %v2986, %v2434
        %v2988 = vmax.f32 %v2987, %v2438
        %v2989 = vmax.f32 %v2988, %v2444
        %v2990 = vmax.f32 %v2989, %v2448
        %v2991 = vmax.f32 %v2990, %v2454
        %v2992 = vmax.f32 %v2991, %v2458
        %v2993 = vmax.f32 %v2992, %v2464
        %v2994 = vmax.f32 %v2993, %v2468
        %v2995 = vmax.f32 %v2994, %v2474
        %v2996 = vmax.f32 %v2995, %v2478
        %v2997 = vmax.f32 %v2996, %v2484
        %v2998 = vmax.f32 %v2997, %v2488
        %v2999 = vmax.f32 %v2998, %v2494
        %v3000 = vmax.f32 %v2999, %v2498
        %v3001 = vmax.f32 %v3000, %v2504
        %v3002 = vmax.f32 %v3001, %v2508
        %v3003 = vrot.slane %v3002, 4
        %v3004 = vmax.f32 %v3002, %v3003
        %v3005 = vrot.slane %v3004, 2
        %v3006 = vmax.f32 %v3004, %v3005
        %v3007 = vrot.slane %v3006, 1
        %v3008 = vmax.f32 %v3006, %v3007
        %v3009 = vmax.f32 %v2356, %v2360
        %v3010 = vmax.f32 %v3009, %v2366
        %v3011 = vmax.f32 %v3010, %v2370
        %v3012 = vmax.f32 %v3011, %v2376
        %v3013 = vmax.f32 %v3012, %v2380
        %v3014 = vmax.f32 %v3013, %v2386
        %v3015 = vmax.f32 %v3014, %v2390
        %v3016 = vmax.f32 %v3015, %v2396
        %v3017 = vmax.f32 %v3016, %v2400
        %v3018 = vmax.f32 %v3017, %v2406
        %v3019 = vmax.f32 %v3018, %v2410
        %v3020 = vmax.f32 %v3019, %v2416
        %v3021 = vmax.f32 %v3020, %v2420
        %v3022 = vmax.f32 %v3021, %v2426
        %v3023 = vmax.f32 %v3022, %v2430
        %v3024 = vmax.f32 %v3023, %v2436
        %v3025 = vmax.f32 %v3024, %v2440
        %v3026 = vmax.f32 %v3025, %v2446
        %v3027 = vmax.f32 %v3026, %v2450
        %v3028 = vmax.f32 %v3027, %v2456
        %v3029 = vmax.f32 %v3028, %v2460
        %v3030 = vmax.f32 %v3029, %v2466
        %v3031 = vmax.f32 %v3030, %v2470
        %v3032 = vmax.f32 %v3031, %v2476
        %v3033 = vmax.f32 %v3032, %v2480
        %v3034 = vmax.f32 %v3033, %v2486
        %v3035 = vmax.f32 %v3034, %v2490
        %v3036 = vmax.f32 %v3035, %v2496
        %v3037 = vmax.f32 %v3036, %v2500
        %v3038 = vmax.f32 %v3037, %v2506
        %v3039 = vmax.f32 %v3038, %v2510
        %v3040 = vrot.slane %v3039, 4
        %v3041 = vmax.f32 %v3039, %v3040
        %v3042 = vrot.slane %v3041, 2
        %v3043 = vmax.f32 %v3041, %v3042
        %v3044 = vrot.slane %v3043, 1
        %v3045 = vmax.f32 %v3043, %v3044
        %v3046 = vmax.f32 %v2547, %v2551
        %v3047 = vmax.f32 %v3046, %v2557
        %v3048 = vmax.f32 %v3047, %v2561
        %v3049 = vmax.f32 %v3048, %v2567
        %v3050 = vmax.f32 %v3049, %v2571
        %v3051 = vmax.f32 %v3050, %v2577
        %v3052 = vmax.f32 %v3051, %v2581
        %v3053 = vmax.f32 %v3052, %v2587
        %v3054 = vmax.f32 %v3053, %v2591
        %v3055 = vmax.f32 %v3054, %v2597
        %v3056 = vmax.f32 %v3055, %v2601
        %v3057 = vmax.f32 %v3056, %v2607
        %v3058 = vmax.f32 %v3057, %v2611
        %v3059 = vmax.f32 %v3058, %v2617
        %v3060 = vmax.f32 %v3059, %v2621
        %v3061 = vmax.f32 %v3060, %v2627
        %v3062 = vmax.f32 %v3061, %v2631
        %v3063 = vmax.f32 %v3062, %v2637
        %v3064 = vmax.f32 %v3063, %v2641
        %v3065 = vmax.f32 %v3064, %v2647
        %v3066 = vmax.f32 %v3065, %v2651
        %v3067 = vmax.f32 %v3066, %v2657
        %v3068 = vmax.f32 %v3067, %v2661
        %v3069 = vmax.f32 %v3068, %v2667
        %v3070 = vmax.f32 %v3069, %v2671
        %v3071 = vmax.f32 %v3070, %v2677
        %v3072 = vmax.f32 %v3071, %v2681
        %v3073 = vmax.f32 %v3072, %v2687
        %v3074 = vmax.f32 %v3073, %v2691
        %v3075 = vmax.f32 %v3074, %v2697
        %v3076 = vmax.f32 %v3075, %v2701
        %v3077 = vrot.slane %v3076, 4
        %v3078 = vmax.f32 %v3076, %v3077
        %v3079 = vrot.slane %v3078, 2
        %v3080 = vmax.f32 %v3078, %v3079
        %v3081 = vrot.slane %v3080, 1
        %v3082 = vmax.f32 %v3080, %v3081
        %v3083 = vmax.f32 %v2549, %v2553
        %v3084 = vmax.f32 %v3083, %v2559
        %v3085 = vmax.f32 %v3084, %v2563
        %v3086 = vmax.f32 %v3085, %v2569
        %v3087 = vmax.f32 %v3086, %v2573
        %v3088 = vmax.f32 %v3087, %v2579
        %v3089 = vmax.f32 %v3088, %v2583
        %v3090 = vmax.f32 %v3089, %v2589
        %v3091 = vmax.f32 %v3090, %v2593
        %v3092 = vmax.f32 %v3091, %v2599
        %v3093 = vmax.f32 %v3092, %v2603
        %v3094 = vmax.f32 %v3093, %v2609
        %v3095 = vmax.f32 %v3094, %v2613
        %v3096 = vmax.f32 %v3095, %v2619
        %v3097 = vmax.f32 %v3096, %v2623
        %v3098 = vmax.f32 %v3097, %v2629
        %v3099 = vmax.f32 %v3098, %v2633
        %v3100 = vmax.f32 %v3099, %v2639
        %v3101 = vmax.f32 %v3100, %v2643
        %v3102 = vmax.f32 %v3101, %v2649
        %v3103 = vmax.f32 %v3102, %v2653
        %v3104 = vmax.f32 %v3103, %v2659
        %v3105 = vmax.f32 %v3104, %v2663
        %v3106 = vmax.f32 %v3105, %v2669
        %v3107 = vmax.f32 %v3106, %v2673
        %v3108 = vmax.f32 %v3107, %v2679
        %v3109 = vmax.f32 %v3108, %v2683
        %v3110 = vmax.f32 %v3109, %v2689
        %v3111 = vmax.f32 %v3110, %v2693
        %v3112 = vmax.f32 %v3111, %v2699
        %v3113 = vmax.f32 %v3112, %v2703
        %v3114 = vrot.slane %v3113, 4
        %v3115 = vmax.f32 %v3113, %v3114
        %v3116 = vrot.slane %v3115, 2
        %v3117 = vmax.f32 %v3115, %v3116
        %v3118 = vrot.slane %v3117, 1
        %v3119 = vmax.f32 %v3117, %v3118
        %v3120 = vmax.f32 %v2740, %v2744
        %v3121 = vmax.f32 %v3120, %v2750
        %v3122 = vmax.f32 %v3121, %v2754
        %v3123 = vmax.f32 %v3122, %v2760
        %v3124 = vmax.f32 %v3123, %v2764
        %v3125 = vmax.f32 %v3124, %v2770
        %v3126 = vmax.f32 %v3125, %v2774
        %v3127 = vmax.f32 %v3126, %v2780
        %v3128 = vmax.f32 %v3127, %v2784
        %v3129 = vmax.f32 %v3128, %v2790
        %v3130 = vmax.f32 %v3129, %v2794
        %v3131 = vmax.f32 %v3130, %v2800
        %v3132 = vmax.f32 %v3131, %v2804
        %v3133 = vmax.f32 %v3132, %v2810
        %v3134 = vmax.f32 %v3133, %v2814
        %v3135 = vmax.f32 %v3134, %v2820
        %v3136 = vmax.f32 %v3135, %v2824
        %v3137 = vmax.f32 %v3136, %v2830
        %v3138 = vmax.f32 %v3137, %v2834
        %v3139 = vmax.f32 %v3138, %v2840
        %v3140 = vmax.f32 %v3139, %v2844
        %v3141 = vmax.f32 %v3140, %v2850
        %v3142 = vmax.f32 %v3141, %v2854
        %v3143 = vmax.f32 %v3142, %v2860
        %v3144 = vmax.f32 %v3143, %v2864
        %v3145 = vmax.f32 %v3144, %v2870
        %v3146 = vmax.f32 %v3145, %v2874
        %v3147 = vmax.f32 %v3146, %v2880
        %v3148 = vmax.f32 %v3147, %v2884
        %v3149 = vmax.f32 %v3148, %v2890
        %v3150 = vmax.f32 %v3149, %v2894
        %v3151 = vrot.slane %v3150, 4
        %v3152 = vmax.f32 %v3150, %v3151
        %v3153 = vrot.slane %v3152, 2
        %v3154 = vmax.f32 %v3152, %v3153
        %v3155 = vrot.slane %v3154, 1
        %v3156 = vmax.f32 %v3154, %v3155
        %v3157 = vmax.f32 %v2742, %v2746
        %v3158 = vmax.f32 %v3157, %v2752
        %v3159 = vmax.f32 %v3158, %v2756
        %v3160 = vmax.f32 %v3159, %v2762
        %v3161 = vmax.f32 %v3160, %v2766
        %v3162 = vmax.f32 %v3161, %v2772
        %v3163 = vmax.f32 %v3162, %v2776
        %v3164 = vmax.f32 %v3163, %v2782
        %v3165 = vmax.f32 %v3164, %v2786
        %v3166 = vmax.f32 %v3165, %v2792
        %v3167 = vmax.f32 %v3166, %v2796
        %v3168 = vmax.f32 %v3167, %v2802
        %v3169 = vmax.f32 %v3168, %v2806
        %v3170 = vmax.f32 %v3169, %v2812
        %v3171 = vmax.f32 %v3170, %v2816
        %v3172 = vmax.f32 %v3171, %v2822
        %v3173 = vmax.f32 %v3172, %v2826
        %v3174 = vmax.f32 %v3173, %v2832
        %v3175 = vmax.f32 %v3174, %v2836
        %v3176 = vmax.f32 %v3175, %v2842
        %v3177 = vmax.f32 %v3176, %v2846
        %v3178 = vmax.f32 %v3177, %v2852
        %v3179 = vmax.f32 %v3178, %v2856
        %v3180 = vmax.f32 %v3179, %v2862
        %v3181 = vmax.f32 %v3180, %v2866
        %v3182 = vmax.f32 %v3181, %v2872
        %v3183 = vmax.f32 %v3182, %v2876
        %v3184 = vmax.f32 %v3183, %v2882
        %v3185 = vmax.f32 %v3184, %v2886
        %v3186 = vmax.f32 %v3185, %v2892
        %v3187 = vmax.f32 %v3186, %v2896
        %v3188 = vrot.slane %v3187, 4
        %v3189 = vmax.f32 %v3187, %v3188
        %v3190 = vrot.slane %v3189, 2
        %v3191 = vmax.f32 %v3189, %v3190
        %v3192 = vrot.slane %v3191, 1
        %v3193 = vmax.f32 %v3191, %v3192
        %v3194 = vpack.c.bf16 %v2934, %v2934
        %v3195 = vpack.c.bf16 %v2971, %v2971
        %v3196 = vpack.c.bf16 %v3008, %v3008
        %v3197 = vpack.c.bf16 %v3045, %v3045
        %v3198 = vpack.c.bf16 %v3082, %v3082
        %v3199 = vpack.c.bf16 %v3119, %v3119
        %v3200 = vpack.c.bf16 %v3156, %v3156
        %v3201 = vpack.c.bf16 %v3193, %v3193
        %v3202 = vld [vmem:[%s8] sm:$0xf]
        %v3203 = vld [vmem:[%s8 + $0x4] sm:$0xf]
        %v3204 = vld [vmem:[%s8 + $0x8] sm:$0xf]
        %v3205 = vld [vmem:[%s8 + $0xc] sm:$0xf]
        %v3206 = vld [vmem:[%s8 + $0x10] sm:$0xf]
        %v3207 = vld [vmem:[%s8 + $0x14] sm:$0xf]
        %v3208 = vld [vmem:[%s8 + $0x18] sm:$0xf]
        %v3209 = vld [vmem:[%s8 + $0x1c] sm:$0xf]
        %v3210 = vld [vmem:[%s8 + $0x20] sm:$0xf]
        %v3211 = vld [vmem:[%s8 + $0x24] sm:$0xf]
        %v3212 = vld [vmem:[%s8 + $0x28] sm:$0xf]
        %v3213 = vld [vmem:[%s8 + $0x2c] sm:$0xf]
        %v3214 = vld [vmem:[%s8 + $0x30] sm:$0xf]
        %v3215 = vld [vmem:[%s8 + $0x34] sm:$0xf]
        %v3216 = vld [vmem:[%s8 + $0x38] sm:$0xf]
        %v3217 = vld [vmem:[%s8 + $0x3c] sm:$0xf]
        %v3218 = vld [vmem:[%s8 + $0x40] sm:$0xf]
        %v3219 = vld [vmem:[%s8 + $0x44] sm:$0xf]
        %v3220 = vld [vmem:[%s8 + $0x48] sm:$0xf]
        %v3221 = vld [vmem:[%s8 + $0x4c] sm:$0xf]
        %v3222 = vld [vmem:[%s8 + $0x50] sm:$0xf]
        %v3223 = vld [vmem:[%s8 + $0x54] sm:$0xf]
        %v3224 = vld [vmem:[%s8 + $0x58] sm:$0xf]
        %v3225 = vld [vmem:[%s8 + $0x5c] sm:$0xf]
        %v3226 = vld [vmem:[%s8 + $0x60] sm:$0xf]
        %v3227 = vld [vmem:[%s8 + $0x64] sm:$0xf]
        %v3228 = vld [vmem:[%s8 + $0x68] sm:$0xf]
        %v3229 = vld [vmem:[%s8 + $0x6c] sm:$0xf]
        %v3230 = vld [vmem:[%s8 + $0x70] sm:$0xf]
        %v3231 = vld [vmem:[%s8 + $0x74] sm:$0xf]
        %v3232 = vld [vmem:[%s8 + $0x78] sm:$0xf]
        %v3233 = vld [vmem:[%s8 + $0x7c] sm:$0xf]
        %v3234 = vld [vmem:[%s8 + $0x80] sm:$0xf]
        %v3235 = vld [vmem:[%s8 + $0x84] sm:$0xf]
        %v3236 = vld [vmem:[%s8 + $0x88] sm:$0xf]
        %v3237 = vld [vmem:[%s8 + $0x8c] sm:$0xf]
        %v3238 = vld [vmem:[%s8 + $0x90] sm:$0xf]
        %v3239 = vld [vmem:[%s8 + $0x94] sm:$0xf]
        %v3240 = vld [vmem:[%s8 + $0x98] sm:$0xf]
        %v3241 = vld [vmem:[%s8 + $0x9c] sm:$0xf]
        %v3242 = vld [vmem:[%s8 + $0xa0] sm:$0xf]
        %v3243 = vld [vmem:[%s8 + $0xa4] sm:$0xf]
        %v3244 = vld [vmem:[%s8 + $0xa8] sm:$0xf]
        %v3245 = vld [vmem:[%s8 + $0xac] sm:$0xf]
        %v3246 = vld [vmem:[%s8 + $0xb0] sm:$0xf]
        %v3247 = vld [vmem:[%s8 + $0xb4] sm:$0xf]
        %v3248 = vld [vmem:[%s8 + $0xb8] sm:$0xf]
        %v3249 = vld [vmem:[%s8 + $0xbc] sm:$0xf]
        %v3250 = vld [vmem:[%s8 + $0xc0] sm:$0xf]
        %v3251 = vld [vmem:[%s8 + $0xc4] sm:$0xf]
        %v3252 = vld [vmem:[%s8 + $0xc8] sm:$0xf]
        %v3253 = vld [vmem:[%s8 + $0xcc] sm:$0xf]
        %v3254 = vld [vmem:[%s8 + $0xd0] sm:$0xf]
        %v3255 = vld [vmem:[%s8 + $0xd4] sm:$0xf]
        %v3256 = vld [vmem:[%s8 + $0xd8] sm:$0xf]
        %v3257 = vld [vmem:[%s8 + $0xdc] sm:$0xf]
        %v3258 = vld [vmem:[%s8 + $0xe0] sm:$0xf]
        %v3259 = vld [vmem:[%s8 + $0xe4] sm:$0xf]
        %v3260 = vld [vmem:[%s8 + $0xe8] sm:$0xf]
        %v3261 = vld [vmem:[%s8 + $0xec] sm:$0xf]
        %v3262 = vld [vmem:[%s8 + $0xf0] sm:$0xf]
        %v3263 = vld [vmem:[%s8 + $0xf4] sm:$0xf]
        %v3264 = vld [vmem:[%s8 + $0xf8] sm:$0xf]
        %v3265 = vld [vmem:[%s8 + $0xfc] sm:$0xf]
        %v3266 = vld [vmem:[%s8 + $0x100] sm:$0xf]
        %v3267 = vld [vmem:[%s8 + $0x104] sm:$0xf]
        %v3268 = vld [vmem:[%s8 + $0x108] sm:$0xf]
        %v3269 = vld [vmem:[%s8 + $0x10c] sm:$0xf]
        %v3270 = vld [vmem:[%s8 + $0x110] sm:$0xf]
        %v3271 = vld [vmem:[%s8 + $0x114] sm:$0xf]
        %v3272 = vld [vmem:[%s8 + $0x118] sm:$0xf]
        %v3273 = vld [vmem:[%s8 + $0x11c] sm:$0xf]
        %v3274 = vld [vmem:[%s8 + $0x120] sm:$0xf]
        %v3275 = vld [vmem:[%s8 + $0x124] sm:$0xf]
        %v3276 = vld [vmem:[%s8 + $0x128] sm:$0xf]
        %v3277 = vld [vmem:[%s8 + $0x12c] sm:$0xf]
        %v3278 = vld [vmem:[%s8 + $0x130] sm:$0xf]
        %v3279 = vld [vmem:[%s8 + $0x134] sm:$0xf]
        %v3280 = vld [vmem:[%s8 + $0x138] sm:$0xf]
        %v3281 = vld [vmem:[%s8 + $0x13c] sm:$0xf]
        %v3282 = vld [vmem:[%s8 + $0x140] sm:$0xf]
        %v3283 = vld [vmem:[%s8 + $0x144] sm:$0xf]
        %v3284 = vld [vmem:[%s8 + $0x148] sm:$0xf]
        %v3285 = vld [vmem:[%s8 + $0x14c] sm:$0xf]
        %v3286 = vld [vmem:[%s8 + $0x150] sm:$0xf]
        %v3287 = vld [vmem:[%s8 + $0x154] sm:$0xf]
        %v3288 = vld [vmem:[%s8 + $0x158] sm:$0xf]
        %v3289 = vld [vmem:[%s8 + $0x15c] sm:$0xf]
        %v3290 = vld [vmem:[%s8 + $0x160] sm:$0xf]
        %v3291 = vld [vmem:[%s8 + $0x164] sm:$0xf]
        %v3292 = vld [vmem:[%s8 + $0x168] sm:$0xf]
        %v3293 = vld [vmem:[%s8 + $0x16c] sm:$0xf]
        %v3294 = vld [vmem:[%s8 + $0x170] sm:$0xf]
        %v3295 = vld [vmem:[%s8 + $0x174] sm:$0xf]
        %v3296 = vld [vmem:[%s8 + $0x178] sm:$0xf]
        %v3297 = vld [vmem:[%s8 + $0x17c] sm:$0xf]
        %v3298 = vld [vmem:[%s8 + $0x180] sm:$0xf]
        %v3299 = vld [vmem:[%s8 + $0x184] sm:$0xf]
        %v3300 = vld [vmem:[%s8 + $0x188] sm:$0xf]
        %v3301 = vld [vmem:[%s8 + $0x18c] sm:$0xf]
        %v3302 = vld [vmem:[%s8 + $0x190] sm:$0xf]
        %v3303 = vld [vmem:[%s8 + $0x194] sm:$0xf]
        %v3304 = vld [vmem:[%s8 + $0x198] sm:$0xf]
        %v3305 = vld [vmem:[%s8 + $0x19c] sm:$0xf]
        %v3306 = vld [vmem:[%s8 + $0x1a0] sm:$0xf]
        %v3307 = vld [vmem:[%s8 + $0x1a4] sm:$0xf]
        %v3308 = vld [vmem:[%s8 + $0x1a8] sm:$0xf]
        %v3309 = vld [vmem:[%s8 + $0x1ac] sm:$0xf]
        %v3310 = vld [vmem:[%s8 + $0x1b0] sm:$0xf]
        %v3311 = vld [vmem:[%s8 + $0x1b4] sm:$0xf]
        %v3312 = vld [vmem:[%s8 + $0x1b8] sm:$0xf]
        %v3313 = vld [vmem:[%s8 + $0x1bc] sm:$0xf]
        %v3314 = vld [vmem:[%s8 + $0x1c0] sm:$0xf]
        %v3315 = vld [vmem:[%s8 + $0x1c4] sm:$0xf]
        %v3316 = vld [vmem:[%s8 + $0x1c8] sm:$0xf]
        %v3317 = vld [vmem:[%s8 + $0x1cc] sm:$0xf]
        %v3318 = vld [vmem:[%s8 + $0x1d0] sm:$0xf]
        %v3319 = vld [vmem:[%s8 + $0x1d4] sm:$0xf]
        %v3320 = vld [vmem:[%s8 + $0x1d8] sm:$0xf]
        %v3321 = vld [vmem:[%s8 + $0x1dc] sm:$0xf]
        %v3322 = vld [vmem:[%s8 + $0x1e0] sm:$0xf]
        %v3323 = vld [vmem:[%s8 + $0x1e4] sm:$0xf]
        %v3324 = vld [vmem:[%s8 + $0x1e8] sm:$0xf]
        %v3325 = vld [vmem:[%s8 + $0x1ec] sm:$0xf]
        %v3326 = vld [vmem:[%s8 + $0x1f0] sm:$0xf]
        %v3327 = vld [vmem:[%s8 + $0x1f4] sm:$0xf]
        %v3328 = vld [vmem:[%s8 + $0x1f8] sm:$0xf]
        %v3329 = vld [vmem:[%s8 + $0x1fc] sm:$0xf]
        %v3330 = vld [vmem:[%s9] sm:$0x1]
        %v3459 = vunpack.c.l.b16 %v3202
        %v3460 = vunpack.c.l.b16 %v3203
        %v3461 = vunpack.c.l.b16 %v3204
        %v3462 = vunpack.c.l.b16 %v3205
        %v3463 = vunpack.c.l.b16 %v3206
        %v3464 = vunpack.c.l.b16 %v3207
        %v3465 = vunpack.c.l.b16 %v3208
        %v3466 = vunpack.c.l.b16 %v3209
        %v3467 = vunpack.c.l.b16 %v3210
        %v3468 = vunpack.c.l.b16 %v3211
        %v3469 = vunpack.c.l.b16 %v3212
        %v3470 = vunpack.c.l.b16 %v3213
        %v3471 = vunpack.c.l.b16 %v3214
        %v3472 = vunpack.c.l.b16 %v3215
        %v3473 = vunpack.c.l.b16 %v3216
        %v3474 = vunpack.c.l.b16 %v3217
        %v3475 = vunpack.c.l.b16 %v3218
        %v3476 = vunpack.c.l.b16 %v3219
        %v3477 = vunpack.c.l.b16 %v3220
        %v3478 = vunpack.c.l.b16 %v3221
        %v3479 = vunpack.c.l.b16 %v3222
        %v3480 = vunpack.c.l.b16 %v3223
        %v3481 = vunpack.c.l.b16 %v3224
        %v3482 = vunpack.c.l.b16 %v3225
        %v3483 = vunpack.c.l.b16 %v3226
        %v3484 = vunpack.c.l.b16 %v3227
        %v3485 = vunpack.c.l.b16 %v3228
        %v3486 = vunpack.c.l.b16 %v3229
        %v3487 = vunpack.c.l.b16 %v3230
        %v3488 = vunpack.c.l.b16 %v3231
        %v3489 = vunpack.c.l.b16 %v3232
        %v3490 = vunpack.c.l.b16 %v3233
        %v3491 = vunpack.c.l.b16 %v3234
        %v3492 = vunpack.c.l.b16 %v3235
        %v3493 = vunpack.c.l.b16 %v3236
        %v3494 = vunpack.c.l.b16 %v3237
        %v3495 = vunpack.c.l.b16 %v3238
        %v3496 = vunpack.c.l.b16 %v3239
        %v3497 = vunpack.c.l.b16 %v3240
        %v3498 = vunpack.c.l.b16 %v3241
        %v3499 = vunpack.c.l.b16 %v3242
        %v3500 = vunpack.c.l.b16 %v3243
        %v3501 = vunpack.c.l.b16 %v3244
        %v3502 = vunpack.c.l.b16 %v3245
        %v3503 = vunpack.c.l.b16 %v3246
        %v3504 = vunpack.c.l.b16 %v3247
        %v3505 = vunpack.c.l.b16 %v3248
        %v3506 = vunpack.c.l.b16 %v3249
        %v3507 = vunpack.c.l.b16 %v3250
        %v3508 = vunpack.c.l.b16 %v3251
        %v3509 = vunpack.c.l.b16 %v3252
        %v3510 = vunpack.c.l.b16 %v3253
        %v3511 = vunpack.c.l.b16 %v3254
        %v3512 = vunpack.c.l.b16 %v3255
        %v3513 = vunpack.c.l.b16 %v3256
        %v3514 = vunpack.c.l.b16 %v3257
        %v3515 = vunpack.c.l.b16 %v3258
        %v3516 = vunpack.c.l.b16 %v3259
        %v3517 = vunpack.c.l.b16 %v3260
        %v3518 = vunpack.c.l.b16 %v3261
        %v3519 = vunpack.c.l.b16 %v3262
        %v3520 = vunpack.c.l.b16 %v3263
        %v3521 = vunpack.c.l.b16 %v3264
        %v3522 = vunpack.c.l.b16 %v3265
        %v3523 = vunpack.c.l.b16 %v3266
        %v3524 = vunpack.c.l.b16 %v3267
        %v3525 = vunpack.c.l.b16 %v3268
        %v3526 = vunpack.c.l.b16 %v3269
        %v3527 = vunpack.c.l.b16 %v3270
        %v3528 = vunpack.c.l.b16 %v3271
        %v3529 = vunpack.c.l.b16 %v3272
        %v3530 = vunpack.c.l.b16 %v3273
        %v3531 = vunpack.c.l.b16 %v3274
        %v3532 = vunpack.c.l.b16 %v3275
        %v3533 = vunpack.c.l.b16 %v3276
        %v3534 = vunpack.c.l.b16 %v3277
        %v3535 = vunpack.c.l.b16 %v3278
        %v3536 = vunpack.c.l.b16 %v3279
        %v3537 = vunpack.c.l.b16 %v3280
        %v3538 = vunpack.c.l.b16 %v3281
        %v3539 = vunpack.c.l.b16 %v3282
        %v3540 = vunpack.c.l.b16 %v3283
        %v3541 = vunpack.c.l.b16 %v3284
        %v3542 = vunpack.c.l.b16 %v3285
        %v3543 = vunpack.c.l.b16 %v3286
        %v3544 = vunpack.c.l.b16 %v3287
        %v3545 = vunpack.c.l.b16 %v3288
        %v3546 = vunpack.c.l.b16 %v3289
        %v3547 = vunpack.c.l.b16 %v3290
        %v3548 = vunpack.c.l.b16 %v3291
        %v3549 = vunpack.c.l.b16 %v3292
        %v3550 = vunpack.c.l.b16 %v3293
        %v3551 = vunpack.c.l.b16 %v3294
        %v3552 = vunpack.c.l.b16 %v3295
        %v3553 = vunpack.c.l.b16 %v3296
        %v3554 = vunpack.c.l.b16 %v3297
        %v3555 = vunpack.c.l.b16 %v3298
        %v3556 = vunpack.c.l.b16 %v3299
        %v3557 = vunpack.c.l.b16 %v3300
        %v3558 = vunpack.c.l.b16 %v3301
        %v3559 = vunpack.c.l.b16 %v3302
        %v3560 = vunpack.c.l.b16 %v3303
        %v3561 = vunpack.c.l.b16 %v3304
        %v3562 = vunpack.c.l.b16 %v3305
        %v3563 = vunpack.c.l.b16 %v3306
        %v3564 = vunpack.c.l.b16 %v3307
        %v3565 = vunpack.c.l.b16 %v3308
        %v3566 = vunpack.c.l.b16 %v3309
        %v3567 = vunpack.c.l.b16 %v3310
        %v3568 = vunpack.c.l.b16 %v3311
        %v3569 = vunpack.c.l.b16 %v3312
        %v3570 = vunpack.c.l.b16 %v3313
        %v3571 = vunpack.c.l.b16 %v3314
        %v3572 = vunpack.c.l.b16 %v3315
        %v3573 = vunpack.c.l.b16 %v3316
        %v3574 = vunpack.c.l.b16 %v3317
        %v3575 = vunpack.c.l.b16 %v3318
        %v3576 = vunpack.c.l.b16 %v3319
        %v3577 = vunpack.c.l.b16 %v3320
        %v3578 = vunpack.c.l.b16 %v3321
        %v3579 = vunpack.c.l.b16 %v3322
        %v3580 = vunpack.c.l.b16 %v3323
        %v3581 = vunpack.c.l.b16 %v3324
        %v3582 = vunpack.c.l.b16 %v3325
        %v3583 = vunpack.c.l.b16 %v3326
        %v3584 = vunpack.c.l.b16 %v3327
        %v3585 = vunpack.c.l.b16 %v3328
        %v3586 = vunpack.c.l.b16 %v3329
        %v3587 = vpack.c.b16 %v3460, %v3459
        %v3588 = vpack.c.b16 %v3462, %v3461
        %v3589 = vpack.c.b16 %v3464, %v3463
        %v3590 = vpack.c.b16 %v3466, %v3465
        %v3591 = vpack.c.b16 %v3468, %v3467
        %v3592 = vpack.c.b16 %v3470, %v3469
        %v3593 = vpack.c.b16 %v3472, %v3471
        %v3594 = vpack.c.b16 %v3474, %v3473
        %v3595 = vpack.c.b16 %v3476, %v3475
        %v3596 = vpack.c.b16 %v3478, %v3477
        %v3597 = vpack.c.b16 %v3480, %v3479
        %v3598 = vpack.c.b16 %v3482, %v3481
        %v3599 = vpack.c.b16 %v3484, %v3483
        %v3600 = vpack.c.b16 %v3486, %v3485
        %v3601 = vpack.c.b16 %v3488, %v3487
        %v3602 = vpack.c.b16 %v3490, %v3489
        %v3603 = vpack.c.b16 %v3492, %v3491
        %v3604 = vpack.c.b16 %v3494, %v3493
        %v3605 = vpack.c.b16 %v3496, %v3495
        %v3606 = vpack.c.b16 %v3498, %v3497
        %v3607 = vpack.c.b16 %v3500, %v3499
        %v3608 = vpack.c.b16 %v3502, %v3501
        %v3609 = vpack.c.b16 %v3504, %v3503
        %v3610 = vpack.c.b16 %v3506, %v3505
        %v3611 = vpack.c.b16 %v3508, %v3507
        %v3612 = vpack.c.b16 %v3510, %v3509
        %v3613 = vpack.c.b16 %v3512, %v3511
        %v3614 = vpack.c.b16 %v3514, %v3513
        %v3615 = vpack.c.b16 %v3516, %v3515
        %v3616 = vpack.c.b16 %v3518, %v3517
        %v3617 = vpack.c.b16 %v3520, %v3519
        %v3618 = vpack.c.b16 %v3522, %v3521
        %v3619 = vpack.c.b16 %v3524, %v3523
        %v3620 = vpack.c.b16 %v3526, %v3525
        %v3621 = vpack.c.b16 %v3528, %v3527
        %v3622 = vpack.c.b16 %v3530, %v3529
        %v3623 = vpack.c.b16 %v3532, %v3531
        %v3624 = vpack.c.b16 %v3534, %v3533
        %v3625 = vpack.c.b16 %v3536, %v3535
        %v3626 = vpack.c.b16 %v3538, %v3537
        %v3627 = vpack.c.b16 %v3540, %v3539
        %v3628 = vpack.c.b16 %v3542, %v3541
        %v3629 = vpack.c.b16 %v3544, %v3543
        %v3630 = vpack.c.b16 %v3546, %v3545
        %v3631 = vpack.c.b16 %v3548, %v3547
        %v3632 = vpack.c.b16 %v3550, %v3549
        %v3633 = vpack.c.b16 %v3552, %v3551
        %v3634 = vpack.c.b16 %v3554, %v3553
        %v3635 = vpack.c.b16 %v3556, %v3555
        %v3636 = vpack.c.b16 %v3558, %v3557
        %v3637 = vpack.c.b16 %v3560, %v3559
        %v3638 = vpack.c.b16 %v3562, %v3561
        %v3639 = vpack.c.b16 %v3564, %v3563
        %v3640 = vpack.c.b16 %v3566, %v3565
        %v3641 = vpack.c.b16 %v3568, %v3567
        %v3642 = vpack.c.b16 %v3570, %v3569
        %v3643 = vpack.c.b16 %v3572, %v3571
        %v3644 = vpack.c.b16 %v3574, %v3573
        %v3645 = vpack.c.b16 %v3576, %v3575
        %v3646 = vpack.c.b16 %v3578, %v3577
        %v3647 = vpack.c.b16 %v3580, %v3579
        %v3648 = vpack.c.b16 %v3582, %v3581
        %v3649 = vpack.c.b16 %v3584, %v3583
        %v3650 = vpack.c.b16 %v3586, %v3585
        %3715 = vmatprep.subr.bf16.mxu0 0
        %3716 = vmatpush1.bf16.msra.mxu0 %v3587
        %3717 = vmatprep.subr.bf16.mxu0 0
        %3718 = vmatpush1.bf16.msra.mxu0 %v3588
        %3719 = vmatprep.subr.bf16.mxu0 0
        %3720 = vmatpush1.bf16.msra.mxu0 %v3589
        %3721 = vmatprep.subr.bf16.mxu0 0
        %3722 = vmatpush1.bf16.msra.mxu0 %v3590
        %3723 = vmatprep.subr.bf16.mxu0 0
        %3724 = vmatpush1.bf16.msra.mxu0 %v3591
        %3725 = vmatprep.subr.bf16.mxu0 0
        %3726 = vmatpush1.bf16.msra.mxu0 %v3592
        %3727 = vmatprep.subr.bf16.mxu0 0
        %3728 = vmatpush1.bf16.msra.mxu0 %v3593
        %3729 = vmatprep.subr.bf16.mxu0 0
        %3730 = vmatpush1.bf16.msra.mxu0 %v3594
        %3731 = vmatprep.subr.bf16.mxu0 0
        %3732 = vmatpush1.bf16.msra.mxu0 %v3595
        %3733 = vmatprep.subr.bf16.mxu0 0
        %3734 = vmatpush1.bf16.msra.mxu0 %v3596
        %3735 = vmatprep.subr.bf16.mxu0 0
        %3736 = vmatpush1.bf16.msra.mxu0 %v3597
        %3737 = vmatprep.subr.bf16.mxu0 0
        %3738 = vmatpush1.bf16.msra.mxu0 %v3598
        %3739 = vmatprep.subr.bf16.mxu0 0
        %3740 = vmatpush1.bf16.msra.mxu0 %v3599
        %3741 = vmatprep.subr.bf16.mxu0 0
        %3742 = vmatpush1.bf16.msra.mxu0 %v3600
        %3743 = vmatprep.subr.bf16.mxu0 0
        %3744 = vmatpush1.bf16.msra.mxu0 %v3601
        %3745 = vmatprep.subr.bf16.mxu0 0
        %3746 = vmatpush1.bf16.msra.mxu0 %v3602
        %3747 = vmatprep.mubr.bf16.mxu0 %v3195
        %3748 = vmatmul.mubr.bf16.gmra.mrb[0].mxu0 %v3194
        %v3749 = vpop.f32.mrb[0].mxu0
        %v3750 = vadd.f32 %v3330, %v3749
        %v3751 = vpop.f32.mrb[0].mxu0
        %v3752 = vpop.f32.mrb[0].mxu0
        %v3753 = vpop.f32.mrb[0].mxu0
        %3754 = vdwg.mxu0
        %3755 = vmatprep.subr.bf16.mxu0 0
        %3756 = vmatpush1.bf16.msra.mxu0 %v3603
        %3757 = vmatprep.subr.bf16.mxu0 0
        %3758 = vmatpush1.bf16.msra.mxu0 %v3604
        %3759 = vmatprep.subr.bf16.mxu0 0
        %3760 = vmatpush1.bf16.msra.mxu0 %v3605
        %3761 = vmatprep.subr.bf16.mxu0 0
        %3762 = vmatpush1.bf16.msra.mxu0 %v3606
        %3763 = vmatprep.subr.bf16.mxu0 0
        %3764 = vmatpush1.bf16.msra.mxu0 %v3607
        %3765 = vmatprep.subr.bf16.mxu0 0
        %3766 = vmatpush1.bf16.msra.mxu0 %v3608
        %3767 = vmatprep.subr.bf16.mxu0 0
        %3768 = vmatpush1.bf16.msra.mxu0 %v3609
        %3769 = vmatprep.subr.bf16.mxu0 0
        %3770 = vmatpush1.bf16.msra.mxu0 %v3610
        %3771 = vmatprep.subr.bf16.mxu0 0
        %3772 = vmatpush1.bf16.msra.mxu0 %v3611
        %3773 = vmatprep.subr.bf16.mxu0 0
        %3774 = vmatpush1.bf16.msra.mxu0 %v3612
        %3775 = vmatprep.subr.bf16.mxu0 0
        %3776 = vmatpush1.bf16.msra.mxu0 %v3613
        %3777 = vmatprep.subr.bf16.mxu0 0
        %3778 = vmatpush1.bf16.msra.mxu0 %v3614
        %3779 = vmatprep.subr.bf16.mxu0 0
        %3780 = vmatpush1.bf16.msra.mxu0 %v3615
        %3781 = vmatprep.subr.bf16.mxu0 0
        %3782 = vmatpush1.bf16.msra.mxu0 %v3616
        %3783 = vmatprep.subr.bf16.mxu0 0
        %3784 = vmatpush1.bf16.msra.mxu0 %v3617
        %3785 = vmatprep.subr.bf16.mxu0 0
        %3786 = vmatpush1.bf16.msra.mxu0 %v3618
        %3787 = vmatprep.mubr.bf16.mxu0 %v3197
        %3788 = vmatmul.mubr.bf16.gmra.mrb[0].mxu0 %v3196
        %v3789 = vpop.f32.mrb[0].mxu0
        %v3790 = vadd.f32 %v3750, %v3789
        %v3791 = vpop.f32.mrb[0].mxu0
        %v3792 = vpop.f32.mrb[0].mxu0
        %v3793 = vpop.f32.mrb[0].mxu0
        %3794 = vdwg.mxu0
        %3795 = vmatprep.subr.bf16.mxu0 0
        %3796 = vmatpush1.bf16.msra.mxu0 %v3619
        %3797 = vmatprep.subr.bf16.mxu0 0
        %3798 = vmatpush1.bf16.msra.mxu0 %v3620
        %3799 = vmatprep.subr.bf16.mxu0 0
        %3800 = vmatpush1.bf16.msra.mxu0 %v3621
        %3801 = vmatprep.subr.bf16.mxu0 0
        %3802 = vmatpush1.bf16.msra.mxu0 %v3622
        %3803 = vmatprep.subr.bf16.mxu0 0
        %3804 = vmatpush1.bf16.msra.mxu0 %v3623
        %3805 = vmatprep.subr.bf16.mxu0 0
        %3806 = vmatpush1.bf16.msra.mxu0 %v3624
        %3807 = vmatprep.subr.bf16.mxu0 0
        %3808 = vmatpush1.bf16.msra.mxu0 %v3625
        %3809 = vmatprep.subr.bf16.mxu0 0
        %3810 = vmatpush1.bf16.msra.mxu0 %v3626
        %3811 = vmatprep.subr.bf16.mxu0 0
        %3812 = vmatpush1.bf16.msra.mxu0 %v3627
        %3813 = vmatprep.subr.bf16.mxu0 0
        %3814 = vmatpush1.bf16.msra.mxu0 %v3628
        %3815 = vmatprep.subr.bf16.mxu0 0
        %3816 = vmatpush1.bf16.msra.mxu0 %v3629
        %3817 = vmatprep.subr.bf16.mxu0 0
        %3818 = vmatpush1.bf16.msra.mxu0 %v3630
        %3819 = vmatprep.subr.bf16.mxu0 0
        %3820 = vmatpush1.bf16.msra.mxu0 %v3631
        %3821 = vmatprep.subr.bf16.mxu0 0
        %3822 = vmatpush1.bf16.msra.mxu0 %v3632
        %3823 = vmatprep.subr.bf16.mxu0 0
        %3824 = vmatpush1.bf16.msra.mxu0 %v3633
        %3825 = vmatprep.subr.bf16.mxu0 0
        %3826 = vmatpush1.bf16.msra.mxu0 %v3634
        %3827 = vmatprep.mubr.bf16.mxu0 %v3199
        %3828 = vmatmul.mubr.bf16.gmra.mrb[0].mxu0 %v3198
        %v3829 = vpop.f32.mrb[0].mxu0
        %v3830 = vadd.f32 %v3790, %v3829
        %v3831 = vpop.f32.mrb[0].mxu0
        %v3832 = vpop.f32.mrb[0].mxu0
        %v3833 = vpop.f32.mrb[0].mxu0
        %3834 = vdwg.mxu0
        %3835 = vmatprep.subr.bf16.mxu0 0
        %3836 = vmatpush1.bf16.msra.mxu0 %v3635
        %3837 = vmatprep.subr.bf16.mxu0 0
        %3838 = vmatpush1.bf16.msra.mxu0 %v3636
        %3839 = vmatprep.subr.bf16.mxu0 0
        %3840 = vmatpush1.bf16.msra.mxu0 %v3637
        %3841 = vmatprep.subr.bf16.mxu0 0
        %3842 = vmatpush1.bf16.msra.mxu0 %v3638
        %3843 = vmatprep.subr.bf16.mxu0 0
        %3844 = vmatpush1.bf16.msra.mxu0 %v3639
        %3845 = vmatprep.subr.bf16.mxu0 0
        %3846 = vmatpush1.bf16.msra.mxu0 %v3640
        %3847 = vmatprep.subr.bf16.mxu0 0
        %3848 = vmatpush1.bf16.msra.mxu0 %v3641
        %3849 = vmatprep.subr.bf16.mxu0 0
        %3850 = vmatpush1.bf16.msra.mxu0 %v3642
        %3851 = vmatprep.subr.bf16.mxu0 0
        %3852 = vmatpush1.bf16.msra.mxu0 %v3643
        %3853 = vmatprep.subr.bf16.mxu0 0
        %3854 = vmatpush1.bf16.msra.mxu0 %v3644
        %3855 = vmatprep.subr.bf16.mxu0 0
        %3856 = vmatpush1.bf16.msra.mxu0 %v3645
        %3857 = vmatprep.subr.bf16.mxu0 0
        %3858 = vmatpush1.bf16.msra.mxu0 %v3646
        %3859 = vmatprep.subr.bf16.mxu0 0
        %3860 = vmatpush1.bf16.msra.mxu0 %v3647
        %3861 = vmatprep.subr.bf16.mxu0 0
        %3862 = vmatpush1.bf16.msra.mxu0 %v3648
        %3863 = vmatprep.subr.bf16.mxu0 0
        %3864 = vmatpush1.bf16.msra.mxu0 %v3649
        %3865 = vmatprep.subr.bf16.mxu0 0
        %3866 = vmatpush1.bf16.msra.mxu0 %v3650
        %3867 = vmatprep.mubr.bf16.mxu0 %v3201
        %3868 = vmatmul.mubr.bf16.gmra.mrb[0].mxu0 %v3200
        %v3869 = vpop.f32.mrb[0].mxu0
        %v3870 = vadd.f32 %v3830, %v3869
        %v3871 = vpop.f32.mrb[0].mxu0
        %v3872 = vpop.f32.mrb[0].mxu0
        %v3873 = vpop.f32.mrb[0].mxu0
        %3874 = vdwg.mxu0
        %v3875 = vmax.f32 %v3870, 0.0
        %v3876 = vpack.c.bf16 %v3875, %v3875
        %v3877 = vld [vmem:[#allocation6] sm:$0xff]
        %v3878 = vld [vmem:[#allocation6 + $0x8] sm:$0xff]
        %v3879 = vld [vmem:[#allocation6 + $0x10] sm:$0xff]
        %v3880 = vld [vmem:[#allocation6 + $0x18] sm:$0xff]
        %v3881 = vld [vmem:[#allocation6 + $0x20] sm:$0xff]
        %v3882 = vld [vmem:[#allocation6 + $0x28] sm:$0xff]
        %v3883 = vld [vmem:[#allocation6 + $0x30] sm:$0xff]
        %v3884 = vld [vmem:[#allocation6 + $0x38] sm:$0xff]
        %v3885 = vld [vmem:[#allocation6 + $0x40] sm:$0xff]
        %v3886 = vld [vmem:[#allocation6 + $0x48] sm:$0xff]
        %v3887 = vld [vmem:[#allocation6 + $0x50] sm:$0xff]
        %v3888 = vld [vmem:[#allocation6 + $0x58] sm:$0xff]
        %v3889 = vld [vmem:[#allocation6 + $0x60] sm:$0xff]
        %v3890 = vld [vmem:[#allocation6 + $0x68] sm:$0xff]
        %v3891 = vld [vmem:[#allocation6 + $0x70] sm:$0xff]
        %v3892 = vld [vmem:[#allocation6 + $0x78] sm:$0xff]
        %v3893 = vld [vmem:[%s12] sm:$0x3]
        %v3910 = vunpack.c.l.b16 %v3877
        %v3911 = vunpack.c.h.b16 %v3877
        %v3912 = vunpack.c.l.b16 %v3878
        %v3913 = vunpack.c.h.b16 %v3878
        %v3914 = vunpack.c.l.b16 %v3879
        %v3915 = vunpack.c.h.b16 %v3879
        %v3916 = vunpack.c.l.b16 %v3880
        %v3917 = vunpack.c.h.b16 %v3880
        %v3918 = vunpack.c.l.b16 %v3881
        %v3919 = vunpack.c.h.b16 %v3881
        %v3920 = vunpack.c.l.b16 %v3882
        %v3921 = vunpack.c.h.b16 %v3882
        %v3922 = vunpack.c.l.b16 %v3883
        %v3923 = vunpack.c.h.b16 %v3883
        %v3924 = vunpack.c.l.b16 %v3884
        %v3925 = vunpack.c.h.b16 %v3884
        %v3926 = vunpack.c.l.b16 %v3885
        %v3927 = vunpack.c.h.b16 %v3885
        %v3928 = vunpack.c.l.b16 %v3886
        %v3929 = vunpack.c.h.b16 %v3886
        %v3930 = vunpack.c.l.b16 %v3887
        %v3931 = vunpack.c.h.b16 %v3887
        %v3932 = vunpack.c.l.b16 %v3888
        %v3933 = vunpack.c.h.b16 %v3888
        %v3934 = vunpack.c.l.b16 %v3889
        %v3935 = vunpack.c.h.b16 %v3889
        %v3936 = vunpack.c.l.b16 %v3890
        %v3937 = vunpack.c.h.b16 %v3890
        %v3938 = vunpack.c.l.b16 %v3891
        %v3939 = vunpack.c.h.b16 %v3891
        %v3940 = vunpack.c.l.b16 %v3892
        %v3941 = vunpack.c.h.b16 %v3892
        %v3942 = vpack.c.b16 %v3912, %v3910
        %v3943 = vpack.c.b16 %v3913, %v3911
        %v3944 = vpack.c.b16 %v3916, %v3914
        %v3945 = vpack.c.b16 %v3917, %v3915
        %v3946 = vpack.c.b16 %v3920, %v3918
        %v3947 = vpack.c.b16 %v3921, %v3919
        %v3948 = vpack.c.b16 %v3924, %v3922
        %v3949 = vpack.c.b16 %v3925, %v3923
        %v3950 = vpack.c.b16 %v3928, %v3926
        %v3951 = vpack.c.b16 %v3929, %v3927
        %v3952 = vpack.c.b16 %v3932, %v3930
        %v3953 = vpack.c.b16 %v3933, %v3931
        %v3954 = vpack.c.b16 %v3936, %v3934
        %v3955 = vpack.c.b16 %v3937, %v3935
        %v3956 = vpack.c.b16 %v3940, %v3938
        %v3957 = vpack.c.b16 %v3941, %v3939
        %v3975 = vlaneseq
        %v3976 = vshrl.u32 %v3975, 7
        %v3977 = vsub.s32 0, %v3976
        %v3978 = vrot.slane %v3893, %v3977
        %v3979 = vlaneseq
        %v3980 = vshrl.u32 %v3979, 7
        %v3981 = vsub.s32 1, %v3980
        %v3982 = vrot.slane %v3893, %v3981
        %3985 = vmatprep.subr.bf16.mxu0 %v3943
        %3986 = vmatpush1.bf16.msra.mxu0 %v3942
        %3987 = vmatprep.subr.bf16.mxu0 %v3945
        %3988 = vmatpush1.bf16.msra.mxu0 %v3944
        %3989 = vmatprep.subr.bf16.mxu0 %v3947
        %3990 = vmatpush1.bf16.msra.mxu0 %v3946
        %3991 = vmatprep.subr.bf16.mxu0 %v3949
        %3992 = vmatpush1.bf16.msra.mxu0 %v3948
        %3993 = vmatprep.subr.bf16.mxu0 %v3951
        %3994 = vmatpush1.bf16.msra.mxu0 %v3950
        %3995 = vmatprep.subr.bf16.mxu0 %v3953
        %3996 = vmatpush1.bf16.msra.mxu0 %v3952
        %3997 = vmatprep.subr.bf16.mxu0 %v3955
        %3998 = vmatpush1.bf16.msra.mxu0 %v3954
        %3999 = vmatprep.subr.bf16.mxu0 %v3957
        %4000 = vmatpush1.bf16.msra.mxu0 %v3956
        %4001 = vmatprep.subr.bf16.mxu0 0
        %4002 = vmatpush1.bf16.msra.mxu0 0
        %4003 = vmatprep.subr.bf16.mxu0 0
        %4004 = vmatpush1.bf16.msra.mxu0 0
        %4005 = vmatprep.subr.bf16.mxu0 0
        %4006 = vmatpush1.bf16.msra.mxu0 0
        %4007 = vmatprep.subr.bf16.mxu0 0
        %4008 = vmatpush1.bf16.msra.mxu0 0
        %4009 = vmatprep.subr.bf16.mxu0 0
        %4010 = vmatpush1.bf16.msra.mxu0 0
        %4011 = vmatprep.subr.bf16.mxu0 0
        %4012 = vmatpush1.bf16.msra.mxu0 0
        %4013 = vmatprep.subr.bf16.mxu0 0
        %4014 = vmatpush1.bf16.msra.mxu0 0
        %4015 = vmatprep.subr.bf16.mxu0 0
        %4016 = vmatpush1.bf16.msra.mxu0 0
        %4017 = vmatprep.mubr.bf16.mxu0 0
        %4018 = vmatmul.mubr.bf16.gmra.mrb[0].mxu0 %v3876
        %v4019 = vpop.f32.mrb[0].mxu0
        %v4020 = vadd.f32 %v3978, %v4019
        %v4021 = vpop.f32.mrb[0].mxu0
        %v4022 = vadd.f32 %v3982, %v4021
        %v4023 = vpop.f32.mrb[0].mxu0
        %v4024 = vpop.f32.mrb[0].mxu0
        %4025 = vdwg.mxu0
        %v4026 = vld [vmem:[%s686] sm:$0xff]
        %v4027 = vld [vmem:[%s686 + $0x8] sm:$0xff]
        %v4028 = vld [vmem:[%s686 + $0x10] sm:$0xff]
        %v4029 = vld [vmem:[%s686 + $0x18] sm:$0xff]
        %v4030 = vld [vmem:[%s686 + $0x20] sm:$0xff]
        %v4031 = vld [vmem:[%s686 + $0x28] sm:$0xff]
        %v4032 = vld [vmem:[%s686 + $0x30] sm:$0xff]
        %v4033 = vld [vmem:[%s686 + $0x38] sm:$0xff]
        %v4034 = vld [vmem:[%s686 + $0x40] sm:$0xff]
        %v4035 = vld [vmem:[%s686 + $0x48] sm:$0xff]
        %v4036 = vld [vmem:[%s686 + $0x50] sm:$0xff]
        %v4037 = vld [vmem:[%s686 + $0x58] sm:$0xff]
        %v4038 = vld [vmem:[%s686 + $0x60] sm:$0xff]
        %v4039 = vld [vmem:[%s686 + $0x68] sm:$0xff]
        %v4040 = vld [vmem:[%s686 + $0x70] sm:$0xff]
        %v4041 = vld [vmem:[%s686 + $0x78] sm:$0xff]
        %v4042 = vld [vmem:[%s10] sm:$0xf]
        %4044 = vset.pattern.permute.xlu0 0
        %4045 = vperm.xlu0 %4044, %v4026
        %v4046 = vpop.permute.xlu0 %4045
        %4049 = vset.pattern.permute.xlu0 0
        %4050 = vperm.xlu0 %4049, %v4027
        %v4051 = vpop.permute.xlu0 %4050
        %4054 = vset.pattern.permute.xlu0 0
        %4055 = vperm.xlu0 %4054, %v4028
        %v4056 = vpop.permute.xlu0 %4055
        %4059 = vset.pattern.permute.xlu0 0
        %4060 = vperm.xlu0 %4059, %v4029
        %v4061 = vpop.permute.xlu0 %4060
        %4064 = vset.pattern.permute.xlu0 0
        %4065 = vperm.xlu0 %4064, %v4030
        %v4066 = vpop.permute.xlu0 %4065
        %4069 = vset.pattern.permute.xlu0 0
        %4070 = vperm.xlu0 %4069, %v4031
        %v4071 = vpop.permute.xlu0 %4070
        %4074 = vset.pattern.permute.xlu0 0
        %4075 = vperm.xlu0 %4074, %v4032
        %v4076 = vpop.permute.xlu0 %4075
        %4079 = vset.pattern.permute.xlu0 0
        %4080 = vperm.xlu0 %4079, %v4033
        %v4081 = vpop.permute.xlu0 %4080
        %4084 = vset.pattern.permute.xlu0 0
        %4085 = vperm.xlu0 %4084, %v4034
        %v4086 = vpop.permute.xlu0 %4085
        %4089 = vset.pattern.permute.xlu0 0
        %4090 = vperm.xlu0 %4089, %v4035
        %v4091 = vpop.permute.xlu0 %4090
        %4094 = vset.pattern.permute.xlu0 0
        %4095 = vperm.xlu0 %4094, %v4036
        %v4096 = vpop.permute.xlu0 %4095
        %4099 = vset.pattern.permute.xlu0 0
        %4100 = vperm.xlu0 %4099, %v4037
        %v4101 = vpop.permute.xlu0 %4100
        %4104 = vset.pattern.permute.xlu0 0
        %4105 = vperm.xlu0 %4104, %v4038
        %v4106 = vpop.permute.xlu0 %4105
        %4109 = vset.pattern.permute.xlu0 0
        %4110 = vperm.xlu0 %4109, %v4039
        %v4111 = vpop.permute.xlu0 %4110
        %4114 = vset.pattern.permute.xlu0 0
        %4115 = vperm.xlu0 %4114, %v4040
        %v4116 = vpop.permute.xlu0 %4115
        %4119 = vset.pattern.permute.xlu0 0
        %4120 = vperm.xlu0 %4119, %v4041
        %v4121 = vpop.permute.xlu0 %4120
        %v4124 = vlaneseq
        %v4125 = vshrl.u32 %v4124, 7
        %v4126 = vsub.s32 0, %v4125
        %v4127 = vrot.slane %v4042, %v4126
        %v4128 = vlaneseq
        %v4129 = vshrl.u32 %v4128, 7
        %v4130 = vsub.s32 2, %v4129
        %v4131 = vrot.slane %v4042, %v4130
        %v4134 = vlaneseq
        %v4135 = vshrl.u32 %v4134, 7
        %v4136 = vsub.s32 0, %v4135
        %v4137 = vrot.slane %v4127, %v4136
        %v4138 = vlaneseq
        %v4139 = vshrl.u32 %v4138, 7
        %v4140 = vsub.s32 0, %v4139
        %v4141 = vrot.slane %v4131, %v4140
        %v4142 = vmul.f32 %v4046, %v4137
        %v4143 = vmul.f32 %v4046, %v4141
        %v4144 = vmul.f32 %v4051, %v4137
        %v4145 = vmul.f32 %v4051, %v4141
        %v4146 = vmul.f32 %v4056, %v4137
        %v4147 = vmul.f32 %v4056, %v4141
        %v4148 = vmul.f32 %v4061, %v4137
        %v4149 = vmul.f32 %v4061, %v4141
        %v4150 = vmul.f32 %v4066, %v4137
        %v4151 = vmul.f32 %v4066, %v4141
        %v4152 = vmul.f32 %v4071, %v4137
        %v4153 = vmul.f32 %v4071, %v4141
        %v4154 = vmul.f32 %v4076, %v4137
        %v4155 = vmul.f32 %v4076, %v4141
        %v4156 = vmul.f32 %v4081, %v4137
        %v4157 = vmul.f32 %v4081, %v4141
        %v4158 = vmul.f32 %v4086, %v4137
        %v4159 = vmul.f32 %v4086, %v4141
        %v4160 = vmul.f32 %v4091, %v4137
        %v4161 = vmul.f32 %v4091, %v4141
        %v4162 = vmul.f32 %v4096, %v4137
        %v4163 = vmul.f32 %v4096, %v4141
        %v4164 = vmul.f32 %v4101, %v4137
        %v4165 = vmul.f32 %v4101, %v4141
        %v4166 = vmul.f32 %v4106, %v4137
        %v4167 = vmul.f32 %v4106, %v4141
        %v4168 = vmul.f32 %v4111, %v4137
        %v4169 = vmul.f32 %v4111, %v4141
        %v4170 = vmul.f32 %v4116, %v4137
        %v4171 = vmul.f32 %v4116, %v4141
        %v4172 = vmul.f32 %v4121, %v4137
        %v4173 = vmul.f32 %v4121, %v4141
        %4174 = vset.pattern.permute.xlu0 1
        %4175 = vperm.xlu0 %4174, %v4026
        %v4176 = vpop.permute.xlu0 %4175
        %4178 = vset.pattern.permute.xlu0 1
        %4179 = vperm.xlu0 %4178, %v4027
        %v4180 = vpop.permute.xlu0 %4179
        %4182 = vset.pattern.permute.xlu0 1
        %4183 = vperm.xlu0 %4182, %v4028
        %v4184 = vpop.permute.xlu0 %4183
        %4186 = vset.pattern.permute.xlu0 1
        %4187 = vperm.xlu0 %4186, %v4029
        %v4188 = vpop.permute.xlu0 %4187
        %4190 = vset.pattern.permute.xlu0 1
        %4191 = vperm.xlu0 %4190, %v4030
        %v4192 = vpop.permute.xlu0 %4191
        %4194 = vset.pattern.permute.xlu0 1
        %4195 = vperm.xlu0 %4194, %v4031
        %v4196 = vpop.permute.xlu0 %4195
        %4198 = vset.pattern.permute.xlu0 1
        %4199 = vperm.xlu0 %4198, %v4032
        %v4200 = vpop.permute.xlu0 %4199
        %4202 = vset.pattern.permute.xlu0 1
        %4203 = vperm.xlu0 %4202, %v4033
        %v4204 = vpop.permute.xlu0 %4203
        %4206 = vset.pattern.permute.xlu0 1
        %4207 = vperm.xlu0 %4206, %v4034
        %v4208 = vpop.permute.xlu0 %4207
        %4210 = vset.pattern.permute.xlu0 1
        %4211 = vperm.xlu0 %4210, %v4035
        %v4212 = vpop.permute.xlu0 %4211
        %4214 = vset.pattern.permute.xlu0 1
        %4215 = vperm.xlu0 %4214, %v4036
        %v4216 = vpop.permute.xlu0 %4215
        %4218 = vset.pattern.permute.xlu0 1
        %4219 = vperm.xlu0 %4218, %v4037
        %v4220 = vpop.permute.xlu0 %4219
        %4222 = vset.pattern.permute.xlu0 1
        %4223 = vperm.xlu0 %4222, %v4038
        %v4224 = vpop.permute.xlu0 %4223
        %4226 = vset.pattern.permute.xlu0 1
        %4227 = vperm.xlu0 %4226, %v4039
        %v4228 = vpop.permute.xlu0 %4227
        %4230 = vset.pattern.permute.xlu0 1
        %4231 = vperm.xlu0 %4230, %v4040
        %v4232 = vpop.permute.xlu0 %4231
        %4234 = vset.pattern.permute.xlu0 1
        %4235 = vperm.xlu0 %4234, %v4041
        %v4236 = vpop.permute.xlu0 %4235
        %v4238 = vlaneseq
        %v4239 = vshrl.u32 %v4238, 7
        %v4240 = vsub.s32 1, %v4239
        %v4241 = vrot.slane %v4042, %v4240
        %v4242 = vlaneseq
        %v4243 = vshrl.u32 %v4242, 7
        %v4244 = vsub.s32 3, %v4243
        %v4245 = vrot.slane %v4042, %v4244
        %v4248 = vlaneseq
        %v4249 = vshrl.u32 %v4248, 7
        %v4250 = vsub.s32 1, %v4249
        %v4251 = vrot.slane %v4241, %v4250
        %v4252 = vlaneseq
        %v4253 = vshrl.u32 %v4252, 7
        %v4254 = vsub.s32 1, %v4253
        %v4255 = vrot.slane %v4245, %v4254
        %v4256 = vmul.f32 %v4176, %v4251
        %v4257 = vmul.f32 %v4176, %v4255
        %v4258 = vmul.f32 %v4180, %v4251
        %v4259 = vmul.f32 %v4180, %v4255
        %v4260 = vmul.f32 %v4184, %v4251
        %v4261 = vmul.f32 %v4184, %v4255
        %v4262 = vmul.f32 %v4188, %v4251
        %v4263 = vmul.f32 %v4188, %v4255
        %v4264 = vmul.f32 %v4192, %v4251
        %v4265 = vmul.f32 %v4192, %v4255
        %v4266 = vmul.f32 %v4196, %v4251
        %v4267 = vmul.f32 %v4196, %v4255
        %v4268 = vmul.f32 %v4200, %v4251
        %v4269 = vmul.f32 %v4200, %v4255
        %v4270 = vmul.f32 %v4204, %v4251
        %v4271 = vmul.f32 %v4204, %v4255
        %v4272 = vmul.f32 %v4208, %v4251
        %v4273 = vmul.f32 %v4208, %v4255
        %v4274 = vmul.f32 %v4212, %v4251
        %v4275 = vmul.f32 %v4212, %v4255
        %v4276 = vmul.f32 %v4216, %v4251
        %v4277 = vmul.f32 %v4216, %v4255
        %v4278 = vmul.f32 %v4220, %v4251
        %v4279 = vmul.f32 %v4220, %v4255
        %v4280 = vmul.f32 %v4224, %v4251
        %v4281 = vmul.f32 %v4224, %v4255
        %v4282 = vmul.f32 %v4228, %v4251
        %v4283 = vmul.f32 %v4228, %v4255
        %v4284 = vmul.f32 %v4232, %v4251
        %v4285 = vmul.f32 %v4232, %v4255
        %v4286 = vmul.f32 %v4236, %v4251
        %v4287 = vmul.f32 %v4236, %v4255
        %v4288 = vadd.f32 %v4142, %v4256
        %v4289 = vadd.f32 %v4143, %v4257
        %v4290 = vadd.f32 %v4144, %v4258
        %v4291 = vadd.f32 %v4145, %v4259
        %v4292 = vadd.f32 %v4146, %v4260
        %v4293 = vadd.f32 %v4147, %v4261
        %v4294 = vadd.f32 %v4148, %v4262
        %v4295 = vadd.f32 %v4149, %v4263
        %v4296 = vadd.f32 %v4150, %v4264
        %v4297 = vadd.f32 %v4151, %v4265
        %v4298 = vadd.f32 %v4152, %v4266
        %v4299 = vadd.f32 %v4153, %v4267
        %v4300 = vadd.f32 %v4154, %v4268
        %v4301 = vadd.f32 %v4155, %v4269
        %v4302 = vadd.f32 %v4156, %v4270
        %v4303 = vadd.f32 %v4157, %v4271
        %v4304 = vadd.f32 %v4158, %v4272
        %v4305 = vadd.f32 %v4159, %v4273
        %v4306 = vadd.f32 %v4160, %v4274
        %v4307 = vadd.f32 %v4161, %v4275
        %v4308 = vadd.f32 %v4162, %v4276
        %v4309 = vadd.f32 %v4163, %v4277
        %v4310 = vadd.f32 %v4164, %v4278
        %v4311 = vadd.f32 %v4165, %v4279
        %v4312 = vadd.f32 %v4166, %v4280
        %v4313 = vadd.f32 %v4167, %v4281
        %v4314 = vadd.f32 %v4168, %v4282
        %v4315 = vadd.f32 %v4169, %v4283
        %v4316 = vadd.f32 %v4170, %v4284
        %v4317 = vadd.f32 %v4171, %v4285
        %v4318 = vadd.f32 %v4172, %v4286
        %v4319 = vadd.f32 %v4173, %v4287
        %v4320 = vlaneseq
        %v4321 = vshrl.u32 %v4320, 7
        %v4322 = vsub.s32 0, %v4321
        %v4323 = vrot.slane %v4020, %v4322
        %v4324 = vlaneseq
        %v4325 = vshrl.u32 %v4324, 7
        %v4326 = vsub.s32 0, %v4325
        %v4327 = vrot.slane %v4022, %v4326
        %v4328 = vadd.f32 %v4288, %v4323
        %v4329 = vadd.f32 %v4289, %v4327
        %v4330 = vadd.f32 %v4290, %v4323
        %v4331 = vadd.f32 %v4291, %v4327
        %v4332 = vadd.f32 %v4292, %v4323
        %v4333 = vadd.f32 %v4293, %v4327
        %v4334 = vadd.f32 %v4294, %v4323
        %v4335 = vadd.f32 %v4295, %v4327
        %v4336 = vadd.f32 %v4296, %v4323
        %v4337 = vadd.f32 %v4297, %v4327
        %v4338 = vadd.f32 %v4298, %v4323
        %v4339 = vadd.f32 %v4299, %v4327
        %v4340 = vadd.f32 %v4300, %v4323
        %v4341 = vadd.f32 %v4301, %v4327
        %v4342 = vadd.f32 %v4302, %v4323
        %v4343 = vadd.f32 %v4303, %v4327
        %v4344 = vadd.f32 %v4304, %v4323
        %v4345 = vadd.f32 %v4305, %v4327
        %v4346 = vadd.f32 %v4306, %v4323
        %v4347 = vadd.f32 %v4307, %v4327
        %v4348 = vadd.f32 %v4308, %v4323
        %v4349 = vadd.f32 %v4309, %v4327
        %v4350 = vadd.f32 %v4310, %v4323
        %v4351 = vadd.f32 %v4311, %v4327
        %v4352 = vadd.f32 %v4312, %v4323
        %v4353 = vadd.f32 %v4313, %v4327
        %v4354 = vadd.f32 %v4314, %v4323
        %v4355 = vadd.f32 %v4315, %v4327
        %v4356 = vadd.f32 %v4316, %v4323
        %v4357 = vadd.f32 %v4317, %v4327
        %v4358 = vadd.f32 %v4318, %v4323
        %v4359 = vadd.f32 %v4319, %v4327
        %v4360 = vmax.f32 %v4328, 0.0
        %v4361 = vmax.f32 %v4329, 0.0
        %v4362 = vmax.f32 %v4330, 0.0
        %v4363 = vmax.f32 %v4331, 0.0
        %v4364 = vmax.f32 %v4332, 0.0
        %v4365 = vmax.f32 %v4333, 0.0
        %v4366 = vmax.f32 %v4334, 0.0
        %v4367 = vmax.f32 %v4335, 0.0
        %v4368 = vmax.f32 %v4336, 0.0
        %v4369 = vmax.f32 %v4337, 0.0
        %v4370 = vmax.f32 %v4338, 0.0
        %v4371 = vmax.f32 %v4339, 0.0
        %v4372 = vmax.f32 %v4340, 0.0
        %v4373 = vmax.f32 %v4341, 0.0
        %v4374 = vmax.f32 %v4342, 0.0
        %v4375 = vmax.f32 %v4343, 0.0
        %v4376 = vmax.f32 %v4344, 0.0
        %v4377 = vmax.f32 %v4345, 0.0
        %v4378 = vmax.f32 %v4346, 0.0
        %v4379 = vmax.f32 %v4347, 0.0
        %v4380 = vmax.f32 %v4348, 0.0
        %v4381 = vmax.f32 %v4349, 0.0
        %v4382 = vmax.f32 %v4350, 0.0
        %v4383 = vmax.f32 %v4351, 0.0
        %v4384 = vmax.f32 %v4352, 0.0
        %v4385 = vmax.f32 %v4353, 0.0
        %v4386 = vmax.f32 %v4354, 0.0
        %v4387 = vmax.f32 %v4355, 0.0
        %v4388 = vmax.f32 %v4356, 0.0
        %v4389 = vmax.f32 %v4357, 0.0
        %v4390 = vmax.f32 %v4358, 0.0
        %v4391 = vmax.f32 %v4359, 0.0
        %v4392 = vpack.c.bf16 %v4362, %v4360
        %v4393 = vpack.c.bf16 %v4363, %v4361
        %v4394 = vpack.c.bf16 %v4366, %v4364
        %v4395 = vpack.c.bf16 %v4367, %v4365
        %v4396 = vpack.c.bf16 %v4370, %v4368
        %v4397 = vpack.c.bf16 %v4371, %v4369
        %v4398 = vpack.c.bf16 %v4374, %v4372
        %v4399 = vpack.c.bf16 %v4375, %v4373
        %v4400 = vpack.c.bf16 %v4378, %v4376
        %v4401 = vpack.c.bf16 %v4379, %v4377
        %v4402 = vpack.c.bf16 %v4382, %v4380
        %v4403 = vpack.c.bf16 %v4383, %v4381
        %v4404 = vpack.c.bf16 %v4386, %v4384
        %v4405 = vpack.c.bf16 %v4387, %v4385
        %v4406 = vpack.c.bf16 %v4390, %v4388
        %v4407 = vpack.c.bf16 %v4391, %v4389
        %v4408 = vld [vmem:[#allocation7] sm:$0xf]
        %v4409 = vld [vmem:[#allocation7 + $0x4] sm:$0xf]
        %v4410 = vld [vmem:[#allocation7 + $0x8] sm:$0xf]
        %v4411 = vld [vmem:[#allocation7 + $0xc] sm:$0xf]
        %v4412 = vld [vmem:[#allocation7 + $0x10] sm:$0xf]
        %v4413 = vld [vmem:[#allocation7 + $0x14] sm:$0xf]
        %v4414 = vld [vmem:[#allocation7 + $0x18] sm:$0xf]
        %v4415 = vld [vmem:[#allocation7 + $0x1c] sm:$0xf]
        %v4416 = vld [vmem:[#allocation7 + $0x20] sm:$0xf]
        %v4417 = vld [vmem:[#allocation7 + $0x24] sm:$0xf]
        %v4418 = vld [vmem:[#allocation7 + $0x28] sm:$0xf]
        %v4419 = vld [vmem:[#allocation7 + $0x2c] sm:$0xf]
        %v4420 = vld [vmem:[#allocation7 + $0x30] sm:$0xf]
        %v4421 = vld [vmem:[#allocation7 + $0x34] sm:$0xf]
        %v4422 = vld [vmem:[#allocation7 + $0x38] sm:$0xf]
        %v4423 = vld [vmem:[#allocation7 + $0x3c] sm:$0xf]
        %v4424 = vld [vmem:[#allocation7 + $0x40] sm:$0xf]
        %v4425 = vld [vmem:[#allocation7 + $0x44] sm:$0xf]
        %v4426 = vld [vmem:[#allocation7 + $0x48] sm:$0xf]
        %v4427 = vld [vmem:[#allocation7 + $0x4c] sm:$0xf]
        %v4428 = vld [vmem:[#allocation7 + $0x50] sm:$0xf]
        %v4429 = vld [vmem:[#allocation7 + $0x54] sm:$0xf]
        %v4430 = vld [vmem:[#allocation7 + $0x58] sm:$0xf]
        %v4431 = vld [vmem:[#allocation7 + $0x5c] sm:$0xf]
        %v4432 = vld [vmem:[#allocation7 + $0x60] sm:$0xf]
        %v4433 = vld [vmem:[#allocation7 + $0x64] sm:$0xf]
        %v4434 = vld [vmem:[#allocation7 + $0x68] sm:$0xf]
        %v4435 = vld [vmem:[#allocation7 + $0x6c] sm:$0xf]
        %v4436 = vld [vmem:[#allocation7 + $0x70] sm:$0xf]
        %v4437 = vld [vmem:[#allocation7 + $0x74] sm:$0xf]
        %v4438 = vld [vmem:[#allocation7 + $0x78] sm:$0xf]
        %v4439 = vld [vmem:[#allocation7 + $0x7c] sm:$0xf]
        %v4440 = vld [vmem:[%s14] sm:$0x1]
        %v4442 = vlaneseq
        %v4443 = vshrl.u32 %v4442, 7
        %v4444 = vsub.s32 0, %v4443
        %v4445 = vrot.slane %v4440, %v4444
        %v4479 = vunpack.c.l.b16 %v4408
        %v4480 = vunpack.c.l.b16 %v4409
        %v4481 = vunpack.c.l.b16 %v4410
        %v4482 = vunpack.c.l.b16 %v4411
        %v4483 = vunpack.c.l.b16 %v4412
        %v4484 = vunpack.c.l.b16 %v4413
        %v4485 = vunpack.c.l.b16 %v4414
        %v4486 = vunpack.c.l.b16 %v4415
        %v4487 = vunpack.c.l.b16 %v4416
        %v4488 = vunpack.c.l.b16 %v4417
        %v4489 = vunpack.c.l.b16 %v4418
        %v4490 = vunpack.c.l.b16 %v4419
        %v4491 = vunpack.c.l.b16 %v4420
        %v4492 = vunpack.c.l.b16 %v4421
        %v4493 = vunpack.c.l.b16 %v4422
        %v4494 = vunpack.c.l.b16 %v4423
        %v4495 = vunpack.c.l.b16 %v4424
        %v4496 = vunpack.c.l.b16 %v4425
        %v4497 = vunpack.c.l.b16 %v4426
        %v4498 = vunpack.c.l.b16 %v4427
        %v4499 = vunpack.c.l.b16 %v4428
        %v4500 = vunpack.c.l.b16 %v4429
        %v4501 = vunpack.c.l.b16 %v4430
        %v4502 = vunpack.c.l.b16 %v4431
        %v4503 = vunpack.c.l.b16 %v4432
        %v4504 = vunpack.c.l.b16 %v4433
        %v4505 = vunpack.c.l.b16 %v4434
        %v4506 = vunpack.c.l.b16 %v4435
        %v4507 = vunpack.c.l.b16 %v4436
        %v4508 = vunpack.c.l.b16 %v4437
        %v4509 = vunpack.c.l.b16 %v4438
        %v4510 = vunpack.c.l.b16 %v4439
        %v4511 = vpack.c.b16 %v4480, %v4479
        %v4512 = vpack.c.b16 %v4482, %v4481
        %v4513 = vpack.c.b16 %v4484, %v4483
        %v4514 = vpack.c.b16 %v4486, %v4485
        %v4515 = vpack.c.b16 %v4488, %v4487
        %v4516 = vpack.c.b16 %v4490, %v4489
        %v4517 = vpack.c.b16 %v4492, %v4491
        %v4518 = vpack.c.b16 %v4494, %v4493
        %v4519 = vpack.c.b16 %v4496, %v4495
        %v4520 = vpack.c.b16 %v4498, %v4497
        %v4521 = vpack.c.b16 %v4500, %v4499
        %v4522 = vpack.c.b16 %v4502, %v4501
        %v4523 = vpack.c.b16 %v4504, %v4503
        %v4524 = vpack.c.b16 %v4506, %v4505
        %v4525 = vpack.c.b16 %v4508, %v4507
        %v4526 = vpack.c.b16 %v4510, %v4509
        %4543 = vmatprep.subr.bf16.mxu0 0
        %4544 = vmatpush1.bf16.msra.mxu0 %v4511
        %4545 = vmatprep.subr.bf16.mxu0 0
        %4546 = vmatpush1.bf16.msra.mxu0 %v4512
        %4547 = vmatprep.subr.bf16.mxu0 0
        %4548 = vmatpush1.bf16.msra.mxu0 %v4513
        %4549 = vmatprep.subr.bf16.mxu0 0
        %4550 = vmatpush1.bf16.msra.mxu0 %v4514
        %4551 = vmatprep.subr.bf16.mxu0 0
        %4552 = vmatpush1.bf16.msra.mxu0 %v4515
        %4553 = vmatprep.subr.bf16.mxu0 0
        %4554 = vmatpush1.bf16.msra.mxu0 %v4516
        %4555 = vmatprep.subr.bf16.mxu0 0
        %4556 = vmatpush1.bf16.msra.mxu0 %v4517
        %4557 = vmatprep.subr.bf16.mxu0 0
        %4558 = vmatpush1.bf16.msra.mxu0 %v4518
        %4559 = vmatprep.subr.bf16.mxu0 0
        %4560 = vmatpush1.bf16.msra.mxu0 %v4519
        %4561 = vmatprep.subr.bf16.mxu0 0
        %4562 = vmatpush1.bf16.msra.mxu0 %v4520
        %4563 = vmatprep.subr.bf16.mxu0 0
        %4564 = vmatpush1.bf16.msra.mxu0 %v4521
        %4565 = vmatprep.subr.bf16.mxu0 0
        %4566 = vmatpush1.bf16.msra.mxu0 %v4522
        %4567 = vmatprep.subr.bf16.mxu0 0
        %4568 = vmatpush1.bf16.msra.mxu0 %v4523
        %4569 = vmatprep.subr.bf16.mxu0 0
        %4570 = vmatpush1.bf16.msra.mxu0 %v4524
        %4571 = vmatprep.subr.bf16.mxu0 0
        %4572 = vmatpush1.bf16.msra.mxu0 %v4525
        %4573 = vmatprep.subr.bf16.mxu0 0
        %4574 = vmatpush1.bf16.msra.mxu0 %v4526
        %4575 = vmatprep.mubr.bf16.mxu0 %v4393
        %4576 = vmatmul.mubr.bf16.gmra.mrb[0].mxu0 %v4392
        %v4577 = vpop.f32.mrb[0].mxu0
        %v4578 = vadd.f32 %v4445, %v4577
        %v4579 = vpop.f32.mrb[0].mxu0
        %v4580 = vpop.f32.mrb[0].mxu0
        %v4581 = vadd.f32 %v4445, %v4580
        %v4582 = vpop.f32.mrb[0].mxu0
        %4583 = vmatprep.mubr.bf16.mxu0 %v4395
        %4584 = vmatmul.mubr.bf16.gmra.mrb[0].mxu0 %v4394
        %v4585 = vpop.f32.mrb[0].mxu0
        %v4586 = vadd.f32 %v4445, %v4585
        %v4587 = vpop.f32.mrb[0].mxu0
        %v4588 = vpop.f32.mrb[0].mxu0
        %v4589 = vadd.f32 %v4445, %v4588
        %v4590 = vpop.f32.mrb[0].mxu0
        %4591 = vmatprep.mubr.bf16.mxu0 %v4397
        %4592 = vmatmul.mubr.bf16.gmra.mrb[0].mxu0 %v4396
        %v4593 = vpop.f32.mrb[0].mxu0
        %v4594 = vadd.f32 %v4445, %v4593
        %v4595 = vpop.f32.mrb[0].mxu0
        %v4596 = vpop.f32.mrb[0].mxu0
        %v4597 = vadd.f32 %v4445, %v4596
        %v4598 = vpop.f32.mrb[0].mxu0
        %4599 = vmatprep.mubr.bf16.mxu0 %v4399
        %4600 = vmatmul.mubr.bf16.gmra.mrb[0].mxu0 %v4398
        %v4601 = vpop.f32.mrb[0].mxu0
        %v4602 = vadd.f32 %v4445, %v4601
        %v4603 = vpop.f32.mrb[0].mxu0
        %v4604 = vpop.f32.mrb[0].mxu0
        %v4605 = vadd.f32 %v4445, %v4604
        %v4606 = vpop.f32.mrb[0].mxu0
        %4607 = vmatprep.mubr.bf16.mxu0 %v4401
        %4608 = vmatmul.mubr.bf16.gmra.mrb[0].mxu0 %v4400
        %v4609 = vpop.f32.mrb[0].mxu0
        %v4610 = vadd.f32 %v4445, %v4609
        %v4611 = vpop.f32.mrb[0].mxu0
        %v4612 = vpop.f32.mrb[0].mxu0
        %v4613 = vadd.f32 %v4445, %v4612
        %v4614 = vpop.f32.mrb[0].mxu0
        %4615 = vmatprep.mubr.bf16.mxu0 %v4403
        %4616 = vmatmul.mubr.bf16.gmra.mrb[0].mxu0 %v4402
        %v4617 = vpop.f32.mrb[0].mxu0
        %v4618 = vadd.f32 %v4445, %v4617
        %v4619 = vpop.f32.mrb[0].mxu0
        %v4620 = vpop.f32.mrb[0].mxu0
        %v4621 = vadd.f32 %v4445, %v4620
        %v4622 = vpop.f32.mrb[0].mxu0
        %4623 = vmatprep.mubr.bf16.mxu0 %v4405
        %4624 = vmatmul.mubr.bf16.gmra.mrb[0].mxu0 %v4404
        %v4625 = vpop.f32.mrb[0].mxu0
        %v4626 = vadd.f32 %v4445, %v4625
        %v4627 = vpop.f32.mrb[0].mxu0
        %v4628 = vpop.f32.mrb[0].mxu0
        %v4629 = vadd.f32 %v4445, %v4628
        %v4630 = vpop.f32.mrb[0].mxu0
        %4631 = vmatprep.mubr.bf16.mxu0 %v4407
        %4632 = vmatmul.mubr.bf16.gmra.mrb[0].mxu0 %v4406
        %v4633 = vpop.f32.mrb[0].mxu0
        %v4634 = vadd.f32 %v4445, %v4633
        %v4635 = vpop.f32.mrb[0].mxu0
        %v4636 = vpop.f32.mrb[0].mxu0
        %v4637 = vadd.f32 %v4445, %v4636
        %v4638 = vpop.f32.mrb[0].mxu0
        %4639 = vdwg.mxu0
        %v4640 = vmax.f32 %v4578, 0.0
        %v4641 = vmax.f32 %v4581, 0.0
        %v4642 = vmax.f32 %v4586, 0.0
        %v4643 = vmax.f32 %v4589, 0.0
        %v4644 = vmax.f32 %v4594, 0.0
        %v4645 = vmax.f32 %v4597, 0.0
        %v4646 = vmax.f32 %v4602, 0.0
        %v4647 = vmax.f32 %v4605, 0.0
        %v4648 = vmax.f32 %v4610, 0.0
        %v4649 = vmax.f32 %v4613, 0.0
        %v4650 = vmax.f32 %v4618, 0.0
        %v4651 = vmax.f32 %v4621, 0.0
        %v4652 = vmax.f32 %v4626, 0.0
        %v4653 = vmax.f32 %v4629, 0.0
        %v4654 = vmax.f32 %v4634, 0.0
        %v4655 = vmax.f32 %v4637, 0.0
        %v4656 = vpack.c.bf16 %v4641, %v4640
        %v4657 = vpack.c.bf16 %v4643, %v4642
        %v4658 = vpack.c.bf16 %v4645, %v4644
        %v4659 = vpack.c.bf16 %v4647, %v4646
        %v4660 = vpack.c.bf16 %v4649, %v4648
        %v4661 = vpack.c.bf16 %v4651, %v4650
        %v4662 = vpack.c.bf16 %v4653, %v4652
        %v4663 = vpack.c.bf16 %v4655, %v4654
        %v4664 = vld [vmem:[#allocation9] sm:$0xf]
        %v4665 = vld [vmem:[#allocation9 + $0x4] sm:$0xf]
        %v4666 = vld [vmem:[#allocation9 + $0x8] sm:$0xf]
        %v4667 = vld [vmem:[#allocation9 + $0xc] sm:$0xf]
        %v4668 = vld [vmem:[#allocation9 + $0x10] sm:$0xf]
        %v4669 = vld [vmem:[#allocation9 + $0x14] sm:$0xf]
        %v4670 = vld [vmem:[#allocation9 + $0x18] sm:$0xf]
        %v4671 = vld [vmem:[#allocation9 + $0x1c] sm:$0xf]
        %v4672 = vld [vmem:[#allocation9 + $0x20] sm:$0xf]
        %v4673 = vld [vmem:[#allocation9 + $0x24] sm:$0xf]
        %v4674 = vld [vmem:[#allocation9 + $0x28] sm:$0xf]
        %v4675 = vld [vmem:[#allocation9 + $0x2c] sm:$0xf]
        %v4676 = vld [vmem:[#allocation9 + $0x30] sm:$0xf]
        %v4677 = vld [vmem:[#allocation9 + $0x34] sm:$0xf]
        %v4678 = vld [vmem:[#allocation9 + $0x38] sm:$0xf]
        %v4679 = vld [vmem:[#allocation9 + $0x3c] sm:$0xf]
        %v4680 = vld [vmem:[%s16] sm:$0x1]
        %v4682 = vlaneseq
        %v4683 = vshrl.u32 %v4682, 7
        %v4684 = vsub.s32 0, %v4683
        %v4685 = vrot.slane %v4680, %v4684
        %v4703 = vunpack.c.l.b16 %v4664
        %v4704 = vunpack.c.l.b16 %v4665
        %v4705 = vunpack.c.l.b16 %v4666
        %v4706 = vunpack.c.l.b16 %v4667
        %v4707 = vunpack.c.l.b16 %v4668
        %v4708 = vunpack.c.l.b16 %v4669
        %v4709 = vunpack.c.l.b16 %v4670
        %v4710 = vunpack.c.l.b16 %v4671
        %v4711 = vunpack.c.l.b16 %v4672
        %v4712 = vunpack.c.l.b16 %v4673
        %v4713 = vunpack.c.l.b16 %v4674
        %v4714 = vunpack.c.l.b16 %v4675
        %v4715 = vunpack.c.l.b16 %v4676
        %v4716 = vunpack.c.l.b16 %v4677
        %v4717 = vunpack.c.l.b16 %v4678
        %v4718 = vunpack.c.l.b16 %v4679
        %v4719 = vpack.c.b16 %v4704, %v4703
        %v4720 = vpack.c.b16 %v4706, %v4705
        %v4721 = vpack.c.b16 %v4708, %v4707
        %v4722 = vpack.c.b16 %v4710, %v4709
        %v4723 = vpack.c.b16 %v4712, %v4711
        %v4724 = vpack.c.b16 %v4714, %v4713
        %v4725 = vpack.c.b16 %v4716, %v4715
        %v4726 = vpack.c.b16 %v4718, %v4717
        %4735 = vmatprep.subr.bf16.mxu0 0
        %4736 = vmatpush1.bf16.msra.mxu0 %v4719
        %4737 = vmatprep.subr.bf16.mxu0 0
        %4738 = vmatpush1.bf16.msra.mxu0 %v4720
        %4739 = vmatprep.subr.bf16.mxu0 0
        %4740 = vmatpush1.bf16.msra.mxu0 %v4721
        %4741 = vmatprep.subr.bf16.mxu0 0
        %4742 = vmatpush1.bf16.msra.mxu0 %v4722
        %4743 = vmatprep.subr.bf16.mxu0 0
        %4744 = vmatpush1.bf16.msra.mxu0 %v4723
        %4745 = vmatprep.subr.bf16.mxu0 0
        %4746 = vmatpush1.bf16.msra.mxu0 %v4724
        %4747 = vmatprep.subr.bf16.mxu0 0
        %4748 = vmatpush1.bf16.msra.mxu0 %v4725
        %4749 = vmatprep.subr.bf16.mxu0 0
        %4750 = vmatpush1.bf16.msra.mxu0 %v4726
        %4751 = vmatprep.subr.bf16.mxu0 0
        %4752 = vmatpush1.bf16.msra.mxu0 0
        %4753 = vmatprep.subr.bf16.mxu0 0
        %4754 = vmatpush1.bf16.msra.mxu0 0
        %4755 = vmatprep.subr.bf16.mxu0 0
        %4756 = vmatpush1.bf16.msra.mxu0 0
        %4757 = vmatprep.subr.bf16.mxu0 0
        %4758 = vmatpush1.bf16.msra.mxu0 0
        %4759 = vmatprep.subr.bf16.mxu0 0
        %4760 = vmatpush1.bf16.msra.mxu0 0
        %4761 = vmatprep.subr.bf16.mxu0 0
        %4762 = vmatpush1.bf16.msra.mxu0 0
        %4763 = vmatprep.subr.bf16.mxu0 0
        %4764 = vmatpush1.bf16.msra.mxu0 0
        %4765 = vmatprep.subr.bf16.mxu0 0
        %4766 = vmatpush1.bf16.msra.mxu0 0
        %4767 = vmatprep.mubr.bf16.mxu0 0
        %4768 = vmatmul.mubr.bf16.gmra.mrb[0].mxu0 %v4656
        %v4769 = vpop.f32.mrb[0].mxu0
        %v4770 = vadd.f32 %v4685, %v4769
        %v4771 = vpop.f32.mrb[0].mxu0
        %v4772 = vpop.f32.mrb[0].mxu0
        %v4773 = vadd.f32 %v4685, %v4772
        %v4774 = vpop.f32.mrb[0].mxu0
        %4775 = vmatprep.mubr.bf16.mxu0 0
        %4776 = vmatmul.mubr.bf16.gmra.mrb[0].mxu0 %v4657
        %v4777 = vpop.f32.mrb[0].mxu0
        %v4778 = vadd.f32 %v4685, %v4777
        %v4779 = vpop.f32.mrb[0].mxu0
        %v4780 = vpop.f32.mrb[0].mxu0
        %v4781 = vadd.f32 %v4685, %v4780
        %v4782 = vpop.f32.mrb[0].mxu0
        %4783 = vmatprep.mubr.bf16.mxu0 0
        %4784 = vmatmul.mubr.bf16.gmra.mrb[0].mxu0 %v4658
        %v4785 = vpop.f32.mrb[0].mxu0
        %v4786 = vadd.f32 %v4685, %v4785
        %v4787 = vpop.f32.mrb[0].mxu0
        %v4788 = vpop.f32.mrb[0].mxu0
        %v4789 = vadd.f32 %v4685, %v4788
        %v4790 = vpop.f32.mrb[0].mxu0
        %4791 = vmatprep.mubr.bf16.mxu0 0
        %4792 = vmatmul.mubr.bf16.gmra.mrb[0].mxu0 %v4659
        %v4793 = vpop.f32.mrb[0].mxu0
        %v4794 = vadd.f32 %v4685, %v4793
        %v4795 = vpop.f32.mrb[0].mxu0
        %v4796 = vpop.f32.mrb[0].mxu0
        %v4797 = vadd.f32 %v4685, %v4796
        %v4798 = vpop.f32.mrb[0].mxu0
        %4799 = vmatprep.mubr.bf16.mxu0 0
        %4800 = vmatmul.mubr.bf16.gmra.mrb[0].mxu0 %v4660
        %v4801 = vpop.f32.mrb[0].mxu0
        %v4802 = vadd.f32 %v4685, %v4801
        %v4803 = vpop.f32.mrb[0].mxu0
        %v4804 = vpop.f32.mrb[0].mxu0
        %v4805 = vadd.f32 %v4685, %v4804
        %v4806 = vpop.f32.mrb[0].mxu0
        %4807 = vmatprep.mubr.bf16.mxu0 0
        %4808 = vmatmul.mubr.bf16.gmra.mrb[0].mxu0 %v4661
        %v4809 = vpop.f32.mrb[0].mxu0
        %v4810 = vadd.f32 %v4685, %v4809
        %v4811 = vpop.f32.mrb[0].mxu0
        %v4812 = vpop.f32.mrb[0].mxu0
        %v4813 = vadd.f32 %v4685, %v4812
        %v4814 = vpop.f32.mrb[0].mxu0
        %4815 = vmatprep.mubr.bf16.mxu0 0
        %4816 = vmatmul.mubr.bf16.gmra.mrb[0].mxu0 %v4662
        %v4817 = vpop.f32.mrb[0].mxu0
        %v4818 = vadd.f32 %v4685, %v4817
        %v4819 = vpop.f32.mrb[0].mxu0
        %v4820 = vpop.f32.mrb[0].mxu0
        %v4821 = vadd.f32 %v4685, %v4820
        %v4822 = vpop.f32.mrb[0].mxu0
        %4823 = vmatprep.mubr.bf16.mxu0 0
        %4824 = vmatmul.mubr.bf16.gmra.mrb[0].mxu0 %v4663
        %v4825 = vpop.f32.mrb[0].mxu0
        %v4826 = vadd.f32 %v4685, %v4825
        %v4827 = vpop.f32.mrb[0].mxu0
        %v4828 = vpop.f32.mrb[0].mxu0
        %v4829 = vadd.f32 %v4685, %v4828
        %v4830 = vpop.f32.mrb[0].mxu0
        %4831 = vdwg.mxu0
        %v4832 = vmax.f32 %v4770, 0.0
        %v4833 = vmax.f32 %v4773, 0.0
        %v4834 = vmax.f32 %v4778, 0.0
        %v4835 = vmax.f32 %v4781, 0.0
        %v4836 = vmax.f32 %v4786, 0.0
        %v4837 = vmax.f32 %v4789, 0.0
        %v4838 = vmax.f32 %v4794, 0.0
        %v4839 = vmax.f32 %v4797, 0.0
        %v4840 = vmax.f32 %v4802, 0.0
        %v4841 = vmax.f32 %v4805, 0.0
        %v4842 = vmax.f32 %v4810, 0.0
        %v4843 = vmax.f32 %v4813, 0.0
        %v4844 = vmax.f32 %v4818, 0.0
        %v4845 = vmax.f32 %v4821, 0.0
        %v4846 = vmax.f32 %v4826, 0.0
        %v4847 = vmax.f32 %v4829, 0.0
        %v4848 = vld [vmem:[%s17] sm:$0x7]
        %v4849 = vld [vmem:[%s18] sm:$0x7]
        %4851 = vset.pattern.permute.xlu0 0
        %4852 = vperm.xlu0 %4851, %v4849
        %v4853 = vpop.permute.xlu0 %4852
        %4855 = vmatprep.subr.mxu0 0.0
        %4856 = vmatpush1.xpose.msra.mxu0 %v4832
        %4857 = vmatprep.subr.mxu0 0.0
        %4858 = vmatpush1.xpose.msra.mxu0 %v4833
        %4859 = vmatprep.subr.mxu0 0.0
        %4860 = vmatpush1.xpose.msra.mxu0 %v4834
        %4861 = vmatprep.subr.mxu0 0.0
        %4862 = vmatpush1.xpose.msra.mxu0 %v4835
        %4863 = vmatprep.subr.mxu0 0.0
        %4864 = vmatpush1.xpose.msra.mxu0 %v4836
        %4865 = vmatprep.subr.mxu0 0.0
        %4866 = vmatpush1.xpose.msra.mxu0 %v4837
        %4867 = vmatprep.subr.mxu0 0.0
        %4868 = vmatpush1.xpose.msra.mxu0 %v4838
        %4869 = vmatprep.subr.mxu0 0.0
        %4870 = vmatpush1.xpose.msra.mxu0 %v4839
        %4871 = vmatprep.subr.mxu0 0.0
        %4872 = vmatpush1.xpose.msra.mxu0 %v4840
        %4873 = vmatprep.subr.mxu0 0.0
        %4874 = vmatpush1.xpose.msra.mxu0 %v4841
        %4875 = vmatprep.subr.mxu0 0.0
        %4876 = vmatpush1.xpose.msra.mxu0 %v4842
        %4877 = vmatprep.subr.mxu0 0.0
        %4878 = vmatpush1.xpose.msra.mxu0 %v4843
        %4879 = vmatprep.subr.mxu0 0.0
        %4880 = vmatpush1.xpose.msra.mxu0 %v4844
        %4881 = vmatprep.subr.mxu0 0.0
        %4882 = vmatpush1.xpose.msra.mxu0 %v4845
        %4883 = vmatprep.subr.mxu0 0.0
        %4884 = vmatpush1.xpose.msra.mxu0 %v4846
        %4885 = vmatprep.subr.mxu0 0.0
        %4886 = vmatpush1.xpose.msra.mxu0 %v4847
        %4887 = vmatprep.subr.mxu0 0.0
        %4888 = vmatpush1.xpose.msra.mxu0 0.0
        %4889 = vmatprep.subr.mxu0 0.0
        %4890 = vmatpush1.xpose.msra.mxu0 0.0
        %4891 = vmatprep.subr.mxu0 0.0
        %4892 = vmatpush1.xpose.msra.mxu0 0.0
        %4893 = vmatprep.subr.mxu0 0.0
        %4894 = vmatpush1.xpose.msra.mxu0 0.0
        %4895 = vmatprep.subr.mxu0 0.0
        %4896 = vmatpush1.xpose.msra.mxu0 0.0
        %4897 = vmatprep.subr.mxu0 0.0
        %4898 = vmatpush1.xpose.msra.mxu0 0.0
        %4899 = vmatprep.subr.mxu0 0.0
        %4900 = vmatpush1.xpose.msra.mxu0 0.0
        %4901 = vmatprep.subr.mxu0 0.0
        %4902 = vmatpush1.xpose.msra.mxu0 0.0
        %4903 = vmatprep.subr.mxu0 0.0
        %4904 = vmatpush1.xpose.msra.mxu0 0.0
        %4905 = vmatprep.subr.mxu0 0.0
        %4906 = vmatpush1.xpose.msra.mxu0 0.0
        %4907 = vmatprep.subr.mxu0 0.0
        %4908 = vmatpush1.xpose.msra.mxu0 0.0
        %4909 = vmatprep.subr.mxu0 0.0
        %4910 = vmatpush1.xpose.msra.mxu0 0.0
        %4911 = vmatprep.subr.mxu0 0.0
        %4912 = vmatpush1.xpose.msra.mxu0 0.0
        %4913 = vmatprep.subr.mxu0 0.0
        %4914 = vmatpush1.xpose.msra.mxu0 0.0
        %4915 = vmatprep.subr.mxu0 0.0
        %4916 = vmatpush1.xpose.msra.mxu0 0.0
        %4917 = vmatprep.subr.mxu0 0.0
        %4918 = vmatpush1.xpose.msra.mxu0 0.0
        %4919 = vmatprep.mubr.f32.mxu0 0.0
        %4920 = vmatmul.mubr.f32.gmra.mrb[0].mxu0 %v4848
        %v4921 = vpop.f32.mrb[0].mxu0
        %v4922 = vadd.f32 %v4853, %v4921
        %v4923 = vpop.f32.mrb[0].mxu0
        %4924 = vdwg.mxu0
        %v4925 = vtanh.pop %v4922
        %4926 = vst [vmem:[%s691] sm:$0x7] %v4925
        %s4927 = scalar_lea.vmem [#allocation6], 128
        %v4928 = vld [vmem:[%s4927] sm:$0xff]
        %v4929 = vld [vmem:[%s4927 + $0x8] sm:$0xff]
        %v4930 = vld [vmem:[%s4927 + $0x10] sm:$0xff]
        %v4931 = vld [vmem:[%s4927 + $0x18] sm:$0xff]
        %v4932 = vld [vmem:[%s4927 + $0x20] sm:$0xff]
        %v4933 = vld [vmem:[%s4927 + $0x28] sm:$0xff]
        %v4934 = vld [vmem:[%s4927 + $0x30] sm:$0xff]
        %v4935 = vld [vmem:[%s4927 + $0x38] sm:$0xff]
        %v4936 = vld [vmem:[%s4927 + $0x40] sm:$0xff]
        %v4937 = vld [vmem:[%s4927 + $0x48] sm:$0xff]
        %v4938 = vld [vmem:[%s4927 + $0x50] sm:$0xff]
        %v4939 = vld [vmem:[%s4927 + $0x58] sm:$0xff]
        %v4940 = vld [vmem:[%s4927 + $0x60] sm:$0xff]
        %v4941 = vld [vmem:[%s4927 + $0x68] sm:$0xff]
        %v4942 = vld [vmem:[%s4927 + $0x70] sm:$0xff]
        %v4943 = vld [vmem:[%s4927 + $0x78] sm:$0xff]
        %s4944 = scalar_lea.vmem %s12, 2
        %v4945 = vld [vmem:[%s4944] sm:$0x3]
        %v4962 = vunpack.c.l.b16 %v4928
        %v4963 = vunpack.c.h.b16 %v4928
        %v4964 = vunpack.c.l.b16 %v4929
        %v4965 = vunpack.c.h.b16 %v4929
        %v4966 = vunpack.c.l.b16 %v4930
        %v4967 = vunpack.c.h.b16 %v4930
        %v4968 = vunpack.c.l.b16 %v4931
        %v4969 = vunpack.c.h.b16 %v4931
        %v4970 = vunpack.c.l.b16 %v4932
        %v4971 = vunpack.c.h.b16 %v4932
        %v4972 = vunpack.c.l.b16 %v4933
        %v4973 = vunpack.c.h.b16 %v4933
        %v4974 = vunpack.c.l.b16 %v4934
        %v4975 = vunpack.c.h.b16 %v4934
        %v4976 = vunpack.c.l.b16 %v4935
        %v4977 = vunpack.c.h.b16 %v4935
        %v4978 = vunpack.c.l.b16 %v4936
        %v4979 = vunpack.c.h.b16 %v4936
        %v4980 = vunpack.c.l.b16 %v4937
        %v4981 = vunpack.c.h.b16 %v4937
        %v4982 = vunpack.c.l.b16 %v4938
        %v4983 = vunpack.c.h.b16 %v4938
        %v4984 = vunpack.c.l.b16 %v4939
        %v4985 = vunpack.c.h.b16 %v4939
        %v4986 = vunpack.c.l.b16 %v4940
        %v4987 = vunpack.c.h.b16 %v4940
        %v4988 = vunpack.c.l.b16 %v4941
        %v4989 = vunpack.c.h.b16 %v4941
        %v4990 = vunpack.c.l.b16 %v4942
        %v4991 = vunpack.c.h.b16 %v4942
        %v4992 = vunpack.c.l.b16 %v4943
        %v4993 = vunpack.c.h.b16 %v4943
        %v4994 = vpack.c.b16 %v4964, %v4962
        %v4995 = vpack.c.b16 %v4965, %v4963
        %v4996 = vpack.c.b16 %v4968, %v4966
        %v4997 = vpack.c.b16 %v4969, %v4967
        %v4998 = vpack.c.b16 %v4972, %v4970
        %v4999 = vpack.c.b16 %v4973, %v4971
        %v5000 = vpack.c.b16 %v4976, %v4974
        %v5001 = vpack.c.b16 %v4977, %v4975
        %v5002 = vpack.c.b16 %v4980, %v4978
        %v5003 = vpack.c.b16 %v4981, %v4979
        %v5004 = vpack.c.b16 %v4984, %v4982
        %v5005 = vpack.c.b16 %v4985, %v4983
        %v5006 = vpack.c.b16 %v4988, %v4986
        %v5007 = vpack.c.b16 %v4989, %v4987
        %v5008 = vpack.c.b16 %v4992, %v4990
        %v5009 = vpack.c.b16 %v4993, %v4991
        %v5027 = vlaneseq
        %v5028 = vshrl.u32 %v5027, 7
        %v5029 = vsub.s32 0, %v5028
        %v5030 = vrot.slane %v4945, %v5029
        %v5031 = vlaneseq
        %v5032 = vshrl.u32 %v5031, 7
        %v5033 = vsub.s32 1, %v5032
        %v5034 = vrot.slane %v4945, %v5033
        %5037 = vmatprep.subr.bf16.mxu0 %v4995
        %5038 = vmatpush1.bf16.msra.mxu0 %v4994
        %5039 = vmatprep.subr.bf16.mxu0 %v4997
        %5040 = vmatpush1.bf16.msra.mxu0 %v4996
        %5041 = vmatprep.subr.bf16.mxu0 %v4999
        %5042 = vmatpush1.bf16.msra.mxu0 %v4998
        %5043 = vmatprep.subr.bf16.mxu0 %v5001
        %5044 = vmatpush1.bf16.msra.mxu0 %v5000
        %5045 = vmatprep.subr.bf16.mxu0 %v5003
        %5046 = vmatpush1.bf16.msra.mxu0 %v5002
        %5047 = vmatprep.subr.bf16.mxu0 %v5005
        %5048 = vmatpush1.bf16.msra.mxu0 %v5004
        %5049 = vmatprep.subr.bf16.mxu0 %v5007
        %5050 = vmatpush1.bf16.msra.mxu0 %v5006
        %5051 = vmatprep.subr.bf16.mxu0 %v5009
        %5052 = vmatpush1.bf16.msra.mxu0 %v5008
        %5053 = vmatprep.subr.bf16.mxu0 0
        %5054 = vmatpush1.bf16.msra.mxu0 0
        %5055 = vmatprep.subr.bf16.mxu0 0
        %5056 = vmatpush1.bf16.msra.mxu0 0
        %5057 = vmatprep.subr.bf16.mxu0 0
        %5058 = vmatpush1.bf16.msra.mxu0 0
        %5059 = vmatprep.subr.bf16.mxu0 0
        %5060 = vmatpush1.bf16.msra.mxu0 0
        %5061 = vmatprep.subr.bf16.mxu0 0
        %5062 = vmatpush1.bf16.msra.mxu0 0
        %5063 = vmatprep.subr.bf16.mxu0 0
        %5064 = vmatpush1.bf16.msra.mxu0 0
        %5065 = vmatprep.subr.bf16.mxu0 0
        %5066 = vmatpush1.bf16.msra.mxu0 0
        %5067 = vmatprep.subr.bf16.mxu0 0
        %5068 = vmatpush1.bf16.msra.mxu0 0
        %5069 = vmatprep.mubr.bf16.mxu0 0
        %5070 = vmatmul.mubr.bf16.gmra.mrb[0].mxu0 %v3876
        %v5071 = vpop.f32.mrb[0].mxu0
        %v5072 = vadd.f32 %v5030, %v5071
        %v5073 = vpop.f32.mrb[0].mxu0
        %v5074 = vadd.f32 %v5034, %v5073
        %v5075 = vpop.f32.mrb[0].mxu0
        %v5076 = vpop.f32.mrb[0].mxu0
        %5077 = vdwg.mxu0
        %s5078 = scalar_lea.vmem %s686, 128
        %v5079 = vld [vmem:[%s5078] sm:$0xff]
        %v5080 = vld [vmem:[%s5078 + $0x8] sm:$0xff]
        %v5081 = vld [vmem:[%s5078 + $0x10] sm:$0xff]
        %v5082 = vld [vmem:[%s5078 + $0x18] sm:$0xff]
        %v5083 = vld [vmem:[%s5078 + $0x20] sm:$0xff]
        %v5084 = vld [vmem:[%s5078 + $0x28] sm:$0xff]
        %v5085 = vld [vmem:[%s5078 + $0x30] sm:$0xff]
        %v5086 = vld [vmem:[%s5078 + $0x38] sm:$0xff]
        %v5087 = vld [vmem:[%s5078 + $0x40] sm:$0xff]
        %v5088 = vld [vmem:[%s5078 + $0x48] sm:$0xff]
        %v5089 = vld [vmem:[%s5078 + $0x50] sm:$0xff]
        %v5090 = vld [vmem:[%s5078 + $0x58] sm:$0xff]
        %v5091 = vld [vmem:[%s5078 + $0x60] sm:$0xff]
        %v5092 = vld [vmem:[%s5078 + $0x68] sm:$0xff]
        %v5093 = vld [vmem:[%s5078 + $0x70] sm:$0xff]
        %v5094 = vld [vmem:[%s5078 + $0x78] sm:$0xff]
        %s5095 = scalar_lea.vmem %s10, 4
        %v5096 = vld [vmem:[%s5095] sm:$0xf]
        %5098 = vset.pattern.permute.xlu0 0
        %5099 = vperm.xlu0 %5098, %v5079
        %v5100 = vpop.permute.xlu0 %5099
        %5103 = vset.pattern.permute.xlu0 0
        %5104 = vperm.xlu0 %5103, %v5080
        %v5105 = vpop.permute.xlu0 %5104
        %5108 = vset.pattern.permute.xlu0 0
        %5109 = vperm.xlu0 %5108, %v5081
        %v5110 = vpop.permute.xlu0 %5109
        %5113 = vset.pattern.permute.xlu0 0
        %5114 = vperm.xlu0 %5113, %v5082
        %v5115 = vpop.permute.xlu0 %5114
        %5118 = vset.pattern.permute.xlu0 0
        %5119 = vperm.xlu0 %5118, %v5083
        %v5120 = vpop.permute.xlu0 %5119
        %5123 = vset.pattern.permute.xlu0 0
        %5124 = vperm.xlu0 %5123, %v5084
        %v5125 = vpop.permute.xlu0 %5124
        %5128 = vset.pattern.permute.xlu0 0
        %5129 = vperm.xlu0 %5128, %v5085
        %v5130 = vpop.permute.xlu0 %5129
        %5133 = vset.pattern.permute.xlu0 0
        %5134 = vperm.xlu0 %5133, %v5086
        %v5135 = vpop.permute.xlu0 %5134
        %5138 = vset.pattern.permute.xlu0 0
        %5139 = vperm.xlu0 %5138, %v5087
        %v5140 = vpop.permute.xlu0 %5139
        %5143 = vset.pattern.permute.xlu0 0
        %5144 = vperm.xlu0 %5143, %v5088
        %v5145 = vpop.permute.xlu0 %5144
        %5148 = vset.pattern.permute.xlu0 0
        %5149 = vperm.xlu0 %5148, %v5089
        %v5150 = vpop.permute.xlu0 %5149
        %5153 = vset.pattern.permute.xlu0 0
        %5154 = vperm.xlu0 %5153, %v5090
        %v5155 = vpop.permute.xlu0 %5154
        %5158 = vset.pattern.permute.xlu0 0
        %5159 = vperm.xlu0 %5158, %v5091
        %v5160 = vpop.permute.xlu0 %5159
        %5163 = vset.pattern.permute.xlu0 0
        %5164 = vperm.xlu0 %5163, %v5092
        %v5165 = vpop.permute.xlu0 %5164
        %5168 = vset.pattern.permute.xlu0 0
        %5169 = vperm.xlu0 %5168, %v5093
        %v5170 = vpop.permute.xlu0 %5169
        %5173 = vset.pattern.permute.xlu0 0
        %5174 = vperm.xlu0 %5173, %v5094
        %v5175 = vpop.permute.xlu0 %5174
        %v5178 = vlaneseq
        %v5179 = vshrl.u32 %v5178, 7
        %v5180 = vsub.s32 0, %v5179
        %v5181 = vrot.slane %v5096, %v5180
        %v5182 = vlaneseq
        %v5183 = vshrl.u32 %v5182, 7
        %v5184 = vsub.s32 2, %v5183
        %v5185 = vrot.slane %v5096, %v5184
        %v5188 = vlaneseq
        %v5189 = vshrl.u32 %v5188, 7
        %v5190 = vsub.s32 0, %v5189
        %v5191 = vrot.slane %v5181, %v5190
        %v5192 = vlaneseq
        %v5193 = vshrl.u32 %v5192, 7
        %v5194 = vsub.s32 0, %v5193
        %v5195 = vrot.slane %v5185, %v5194
        %v5196 = vmul.f32 %v5100, %v5191
        %v5197 = vmul.f32 %v5100, %v5195
        %v5198 = vmul.f32 %v5105, %v5191
        %v5199 = vmul.f32 %v5105, %v5195
        %v5200 = vmul.f32 %v5110, %v5191
        %v5201 = vmul.f32 %v5110, %v5195
        %v5202 = vmul.f32 %v5115, %v5191
        %v5203 = vmul.f32 %v5115, %v5195
        %v5204 = vmul.f32 %v5120, %v5191
        %v5205 = vmul.f32 %v5120, %v5195
        %v5206 = vmul.f32 %v5125, %v5191
        %v5207 = vmul.f32 %v5125, %v5195
        %v5208 = vmul.f32 %v5130, %v5191
        %v5209 = vmul.f32 %v5130, %v5195
        %v5210 = vmul.f32 %v5135, %v5191
        %v5211 = vmul.f32 %v5135, %v5195
        %v5212 = vmul.f32 %v5140, %v5191
        %v5213 = vmul.f32 %v5140, %v5195
        %v5214 = vmul.f32 %v5145, %v5191
        %v5215 = vmul.f32 %v5145, %v5195
        %v5216 = vmul.f32 %v5150, %v5191
        %v5217 = vmul.f32 %v5150, %v5195
        %v5218 = vmul.f32 %v5155, %v5191
        %v5219 = vmul.f32 %v5155, %v5195
        %v5220 = vmul.f32 %v5160, %v5191
        %v5221 = vmul.f32 %v5160, %v5195
        %v5222 = vmul.f32 %v5165, %v5191
        %v5223 = vmul.f32 %v5165, %v5195
        %v5224 = vmul.f32 %v5170, %v5191
        %v5225 = vmul.f32 %v5170, %v5195
        %v5226 = vmul.f32 %v5175, %v5191
        %v5227 = vmul.f32 %v5175, %v5195
        %5228 = vset.pattern.permute.xlu0 1
        %5229 = vperm.xlu0 %5228, %v5079
        %v5230 = vpop.permute.xlu0 %5229
        %5232 = vset.pattern.permute.xlu0 1
        %5233 = vperm.xlu0 %5232, %v5080
        %v5234 = vpop.permute.xlu0 %5233
        %5236 = vset.pattern.permute.xlu0 1
        %5237 = vperm.xlu0 %5236, %v5081
        %v5238 = vpop.permute.xlu0 %5237
        %5240 = vset.pattern.permute.xlu0 1
        %5241 = vperm.xlu0 %5240, %v5082
        %v5242 = vpop.permute.xlu0 %5241
        %5244 = vset.pattern.permute.xlu0 1
        %5245 = vperm.xlu0 %5244, %v5083
        %v5246 = vpop.permute.xlu0 %5245
        %5248 = vset.pattern.permute.xlu0 1
        %5249 = vperm.xlu0 %5248, %v5084
        %v5250 = vpop.permute.xlu0 %5249
        %5252 = vset.pattern.permute.xlu0 1
        %5253 = vperm.xlu0 %5252, %v5085
        %v5254 = vpop.permute.xlu0 %5253
        %5256 = vset.pattern.permute.xlu0 1
        %5257 = vperm.xlu0 %5256, %v5086
        %v5258 = vpop.permute.xlu0 %5257
        %5260 = vset.pattern.permute.xlu0 1
        %5261 = vperm.xlu0 %5260, %v5087
        %v5262 = vpop.permute.xlu0 %5261
        %5264 = vset.pattern.permute.xlu0 1
        %5265 = vperm.xlu0 %5264, %v5088
        %v5266 = vpop.permute.xlu0 %5265
        %5268 = vset.pattern.permute.xlu0 1
        %5269 = vperm.xlu0 %5268, %v5089
        %v5270 = vpop.permute.xlu0 %5269
        %5272 = vset.pattern.permute.xlu0 1
        %5273 = vperm.xlu0 %5272, %v5090
        %v5274 = vpop.permute.xlu0 %5273
        %5276 = vset.pattern.permute.xlu0 1
        %5277 = vperm.xlu0 %5276, %v5091
        %v5278 = vpop.permute.xlu0 %5277
        %5280 = vset.pattern.permute.xlu0 1
        %5281 = vperm.xlu0 %5280, %v5092
        %v5282 = vpop.permute.xlu0 %5281
        %5284 = vset.pattern.permute.xlu0 1
        %5285 = vperm.xlu0 %5284, %v5093
        %v5286 = vpop.permute.xlu0 %5285
        %5288 = vset.pattern.permute.xlu0 1
        %5289 = vperm.xlu0 %5288, %v5094
        %v5290 = vpop.permute.xlu0 %5289
        %v5292 = vlaneseq
        %v5293 = vshrl.u32 %v5292, 7
        %v5294 = vsub.s32 1, %v5293
        %v5295 = vrot.slane %v5096, %v5294
        %v5296 = vlaneseq
        %v5297 = vshrl.u32 %v5296, 7
        %v5298 = vsub.s32 3, %v5297
        %v5299 = vrot.slane %v5096, %v5298
        %v5302 = vlaneseq
        %v5303 = vshrl.u32 %v5302, 7
        %v5304 = vsub.s32 1, %v5303
        %v5305 = vrot.slane %v5295, %v5304
        %v5306 = vlaneseq
        %v5307 = vshrl.u32 %v5306, 7
        %v5308 = vsub.s32 1, %v5307
        %v5309 = vrot.slane %v5299, %v5308
        %v5310 = vmul.f32 %v5230, %v5305
        %v5311 = vmul.f32 %v5230, %v5309
        %v5312 = vmul.f32 %v5234, %v5305
        %v5313 = vmul.f32 %v5234, %v5309
        %v5314 = vmul.f32 %v5238, %v5305
        %v5315 = vmul.f32 %v5238, %v5309
        %v5316 = vmul.f32 %v5242, %v5305
        %v5317 = vmul.f32 %v5242, %v5309
        %v5318 = vmul.f32 %v5246, %v5305
        %v5319 = vmul.f32 %v5246, %v5309
        %v5320 = vmul.f32 %v5250, %v5305
        %v5321 = vmul.f32 %v5250, %v5309
        %v5322 = vmul.f32 %v5254, %v5305
        %v5323 = vmul.f32 %v5254, %v5309
        %v5324 = vmul.f32 %v5258, %v5305
        %v5325 = vmul.f32 %v5258, %v5309
        %v5326 = vmul.f32 %v5262, %v5305
        %v5327 = vmul.f32 %v5262, %v5309
        %v5328 = vmul.f32 %v5266, %v5305
        %v5329 = vmul.f32 %v5266, %v5309
        %v5330 = vmul.f32 %v5270, %v5305
        %v5331 = vmul.f32 %v5270, %v5309
        %v5332 = vmul.f32 %v5274, %v5305
        %v5333 = vmul.f32 %v5274, %v5309
        %v5334 = vmul.f32 %v5278, %v5305
        %v5335 = vmul.f32 %v5278, %v5309
        %v5336 = vmul.f32 %v5282, %v5305
        %v5337 = vmul.f32 %v5282, %v5309
        %v5338 = vmul.f32 %v5286, %v5305
        %v5339 = vmul.f32 %v5286, %v5309
        %v5340 = vmul.f32 %v5290, %v5305
        %v5341 = vmul.f32 %v5290, %v5309
        %v5342 = vadd.f32 %v5196, %v5310
        %v5343 = vadd.f32 %v5197, %v5311
        %v5344 = vadd.f32 %v5198, %v5312
        %v5345 = vadd.f32 %v5199, %v5313
        %v5346 = vadd.f32 %v5200, %v5314
        %v5347 = vadd.f32 %v5201, %v5315
        %v5348 = vadd.f32 %v5202, %v5316
        %v5349 = vadd.f32 %v5203, %v5317
        %v5350 = vadd.f32 %v5204, %v5318
        %v5351 = vadd.f32 %v5205, %v5319
        %v5352 = vadd.f32 %v5206, %v5320
        %v5353 = vadd.f32 %v5207, %v5321
        %v5354 = vadd.f32 %v5208, %v5322
        %v5355 = vadd.f32 %v5209, %v5323
        %v5356 = vadd.f32 %v5210, %v5324
        %v5357 = vadd.f32 %v5211, %v5325
        %v5358 = vadd.f32 %v5212, %v5326
        %v5359 = vadd.f32 %v5213, %v5327
        %v5360 = vadd.f32 %v5214, %v5328
        %v5361 = vadd.f32 %v5215, %v5329
        %v5362 = vadd.f32 %v5216, %v5330
        %v5363 = vadd.f32 %v5217, %v5331
        %v5364 = vadd.f32 %v5218, %v5332
        %v5365 = vadd.f32 %v5219, %v5333
        %v5366 = vadd.f32 %v5220, %v5334
        %v5367 = vadd.f32 %v5221, %v5335
        %v5368 = vadd.f32 %v5222, %v5336
        %v5369 = vadd.f32 %v5223, %v5337
        %v5370 = vadd.f32 %v5224, %v5338
        %v5371 = vadd.f32 %v5225, %v5339
        %v5372 = vadd.f32 %v5226, %v5340
        %v5373 = vadd.f32 %v5227, %v5341
        %v5374 = vlaneseq
        %v5375 = vshrl.u32 %v5374, 7
        %v5376 = vsub.s32 0, %v5375
        %v5377 = vrot.slane %v5072, %v5376
        %v5378 = vlaneseq
        %v5379 = vshrl.u32 %v5378, 7
        %v5380 = vsub.s32 0, %v5379
        %v5381 = vrot.slane %v5074, %v5380
        %v5382 = vadd.f32 %v5342, %v5377
        %v5383 = vadd.f32 %v5343, %v5381
        %v5384 = vadd.f32 %v5344, %v5377
        %v5385 = vadd.f32 %v5345, %v5381
        %v5386 = vadd.f32 %v5346, %v5377
        %v5387 = vadd.f32 %v5347, %v5381
        %v5388 = vadd.f32 %v5348, %v5377
        %v5389 = vadd.f32 %v5349, %v5381
        %v5390 = vadd.f32 %v5350, %v5377
        %v5391 = vadd.f32 %v5351, %v5381
        %v5392 = vadd.f32 %v5352, %v5377
        %v5393 = vadd.f32 %v5353, %v5381
        %v5394 = vadd.f32 %v5354, %v5377
        %v5395 = vadd.f32 %v5355, %v5381
        %v5396 = vadd.f32 %v5356, %v5377
        %v5397 = vadd.f32 %v5357, %v5381
        %v5398 = vadd.f32 %v5358, %v5377
        %v5399 = vadd.f32 %v5359, %v5381
        %v5400 = vadd.f32 %v5360, %v5377
        %v5401 = vadd.f32 %v5361, %v5381
        %v5402 = vadd.f32 %v5362, %v5377
        %v5403 = vadd.f32 %v5363, %v5381
        %v5404 = vadd.f32 %v5364, %v5377
        %v5405 = vadd.f32 %v5365, %v5381
        %v5406 = vadd.f32 %v5366, %v5377
        %v5407 = vadd.f32 %v5367, %v5381
        %v5408 = vadd.f32 %v5368, %v5377
        %v5409 = vadd.f32 %v5369, %v5381
        %v5410 = vadd.f32 %v5370, %v5377
        %v5411 = vadd.f32 %v5371, %v5381
        %v5412 = vadd.f32 %v5372, %v5377
        %v5413 = vadd.f32 %v5373, %v5381
        %v5414 = vmax.f32 %v5382, 0.0
        %v5415 = vmax.f32 %v5383, 0.0
        %v5416 = vmax.f32 %v5384, 0.0
        %v5417 = vmax.f32 %v5385, 0.0
        %v5418 = vmax.f32 %v5386, 0.0
        %v5419 = vmax.f32 %v5387, 0.0
        %v5420 = vmax.f32 %v5388, 0.0
        %v5421 = vmax.f32 %v5389, 0.0
        %v5422 = vmax.f32 %v5390, 0.0
        %v5423 = vmax.f32 %v5391, 0.0
        %v5424 = vmax.f32 %v5392, 0.0
        %v5425 = vmax.f32 %v5393, 0.0
        %v5426 = vmax.f32 %v5394, 0.0
        %v5427 = vmax.f32 %v5395, 0.0
        %v5428 = vmax.f32 %v5396, 0.0
        %v5429 = vmax.f32 %v5397, 0.0
        %v5430 = vmax.f32 %v5398, 0.0
        %v5431 = vmax.f32 %v5399, 0.0
        %v5432 = vmax.f32 %v5400, 0.0
        %v5433 = vmax.f32 %v5401, 0.0
        %v5434 = vmax.f32 %v5402, 0.0
        %v5435 = vmax.f32 %v5403, 0.0
        %v5436 = vmax.f32 %v5404, 0.0
        %v5437 = vmax.f32 %v5405, 0.0
        %v5438 = vmax.f32 %v5406, 0.0
        %v5439 = vmax.f32 %v5407, 0.0
        %v5440 = vmax.f32 %v5408, 0.0
        %v5441 = vmax.f32 %v5409, 0.0
        %v5442 = vmax.f32 %v5410, 0.0
        %v5443 = vmax.f32 %v5411, 0.0
        %v5444 = vmax.f32 %v5412, 0.0
        %v5445 = vmax.f32 %v5413, 0.0
        %v5446 = vpack.c.bf16 %v5416, %v5414
        %v5447 = vpack.c.bf16 %v5417, %v5415
        %v5448 = vpack.c.bf16 %v5420, %v5418
        %v5449 = vpack.c.bf16 %v5421, %v5419
        %v5450 = vpack.c.bf16 %v5424, %v5422
        %v5451 = vpack.c.bf16 %v5425, %v5423
        %v5452 = vpack.c.bf16 %v5428, %v5426
        %v5453 = vpack.c.bf16 %v5429, %v5427
        %v5454 = vpack.c.bf16 %v5432, %v5430
        %v5455 = vpack.c.bf16 %v5433, %v5431
        %v5456 = vpack.c.bf16 %v5436, %v5434
        %v5457 = vpack.c.bf16 %v5437, %v5435
        %v5458 = vpack.c.bf16 %v5440, %v5438
        %v5459 = vpack.c.bf16 %v5441, %v5439
        %v5460 = vpack.c.bf16 %v5444, %v5442
        %v5461 = vpack.c.bf16 %v5445, %v5443
        %s5462 = scalar_lea.vmem [#allocation7], 128
        %v5463 = vld [vmem:[%s5462] sm:$0xf]
        %v5464 = vld [vmem:[%s5462 + $0x4] sm:$0xf]
        %v5465 = vld [vmem:[%s5462 + $0x8] sm:$0xf]
        %v5466 = vld [vmem:[%s5462 + $0xc] sm:$0xf]
        %v5467 = vld [vmem:[%s5462 + $0x10] sm:$0xf]
        %v5468 = vld [vmem:[%s5462 + $0x14] sm:$0xf]
        %v5469 = vld [vmem:[%s5462 + $0x18] sm:$0xf]
        %v5470 = vld [vmem:[%s5462 + $0x1c] sm:$0xf]
        %v5471 = vld [vmem:[%s5462 + $0x20] sm:$0xf]
        %v5472 = vld [vmem:[%s5462 + $0x24] sm:$0xf]
        %v5473 = vld [vmem:[%s5462 + $0x28] sm:$0xf]
        %v5474 = vld [vmem:[%s5462 + $0x2c] sm:$0xf]
        %v5475 = vld [vmem:[%s5462 + $0x30] sm:$0xf]
        %v5476 = vld [vmem:[%s5462 + $0x34] sm:$0xf]
        %v5477 = vld [vmem:[%s5462 + $0x38] sm:$0xf]
        %v5478 = vld [vmem:[%s5462 + $0x3c] sm:$0xf]
        %v5479 = vld [vmem:[%s5462 + $0x40] sm:$0xf]
        %v5480 = vld [vmem:[%s5462 + $0x44] sm:$0xf]
        %v5481 = vld [vmem:[%s5462 + $0x48] sm:$0xf]
        %v5482 = vld [vmem:[%s5462 + $0x4c] sm:$0xf]
        %v5483 = vld [vmem:[%s5462 + $0x50] sm:$0xf]
        %v5484 = vld [vmem:[%s5462 + $0x54] sm:$0xf]
        %v5485 = vld [vmem:[%s5462 + $0x58] sm:$0xf]
        %v5486 = vld [vmem:[%s5462 + $0x5c] sm:$0xf]
        %v5487 = vld [vmem:[%s5462 + $0x60] sm:$0xf]
        %v5488 = vld [vmem:[%s5462 + $0x64] sm:$0xf]
        %v5489 = vld [vmem:[%s5462 + $0x68] sm:$0xf]
        %v5490 = vld [vmem:[%s5462 + $0x6c] sm:$0xf]
        %v5491 = vld [vmem:[%s5462 + $0x70] sm:$0xf]
        %v5492 = vld [vmem:[%s5462 + $0x74] sm:$0xf]
        %v5493 = vld [vmem:[%s5462 + $0x78] sm:$0xf]
        %v5494 = vld [vmem:[%s5462 + $0x7c] sm:$0xf]
        %s5495 = scalar_lea.vmem %s14, 1
        %v5496 = vld [vmem:[%s5495] sm:$0x1]
        %v5498 = vlaneseq
        %v5499 = vshrl.u32 %v5498, 7
        %v5500 = vsub.s32 0, %v5499
        %v5501 = vrot.slane %v5496, %v5500
        %v5535 = vunpack.c.l.b16 %v5463
        %v5536 = vunpack.c.l.b16 %v5464
        %v5537 = vunpack.c.l.b16 %v5465
        %v5538 = vunpack.c.l.b16 %v5466
        %v5539 = vunpack.c.l.b16 %v5467
        %v5540 = vunpack.c.l.b16 %v5468
        %v5541 = vunpack.c.l.b16 %v5469
        %v5542 = vunpack.c.l.b16 %v5470
        %v5543 = vunpack.c.l.b16 %v5471
        %v5544 = vunpack.c.l.b16 %v5472
        %v5545 = vunpack.c.l.b16 %v5473
        %v5546 = vunpack.c.l.b16 %v5474
        %v5547 = vunpack.c.l.b16 %v5475
        %v5548 = vunpack.c.l.b16 %v5476
        %v5549 = vunpack.c.l.b16 %v5477
        %v5550 = vunpack.c.l.b16 %v5478
        %v5551 = vunpack.c.l.b16 %v5479
        %v5552 = vunpack.c.l.b16 %v5480
        %v5553 = vunpack.c.l.b16 %v5481
        %v5554 = vunpack.c.l.b16 %v5482
        %v5555 = vunpack.c.l.b16 %v5483
        %v5556 = vunpack.c.l.b16 %v5484
        %v5557 = vunpack.c.l.b16 %v5485
        %v5558 = vunpack.c.l.b16 %v5486
        %v5559 = vunpack.c.l.b16 %v5487
        %v5560 = vunpack.c.l.b16 %v5488
        %v5561 = vunpack.c.l.b16 %v5489
        %v5562 = vunpack.c.l.b16 %v5490
        %v5563 = vunpack.c.l.b16 %v5491
        %v5564 = vunpack.c.l.b16 %v5492
        %v5565 = vunpack.c.l.b16 %v5493
        %v5566 = vunpack.c.l.b16 %v5494
        %v5567 = vpack.c.b16 %v5536, %v5535
        %v5568 = vpack.c.b16 %v5538, %v5537
        %v5569 = vpack.c.b16 %v5540, %v5539
        %v5570 = vpack.c.b16 %v5542, %v5541
        %v5571 = vpack.c.b16 %v5544, %v5543
        %v5572 = vpack.c.b16 %v5546, %v5545
        %v5573 = vpack.c.b16 %v5548, %v5547
        %v5574 = vpack.c.b16 %v5550, %v5549
        %v5575 = vpack.c.b16 %v5552, %v5551
        %v5576 = vpack.c.b16 %v5554, %v5553
        %v5577 = vpack.c.b16 %v5556, %v5555
        %v5578 = vpack.c.b16 %v5558, %v5557
        %v5579 = vpack.c.b16 %v5560, %v5559
        %v5580 = vpack.c.b16 %v5562, %v5561
        %v5581 = vpack.c.b16 %v5564, %v5563
        %v5582 = vpack.c.b16 %v5566, %v5565
        %5599 = vmatprep.subr.bf16.mxu0 0
        %5600 = vmatpush1.bf16.msra.mxu0 %v5567
        %5601 = vmatprep.subr.bf16.mxu0 0
        %5602 = vmatpush1.bf16.msra.mxu0 %v5568
        %5603 = vmatprep.subr.bf16.mxu0 0
        %5604 = vmatpush1.bf16.msra.mxu0 %v5569
        %5605 = vmatprep.subr.bf16.mxu0 0
        %5606 = vmatpush1.bf16.msra.mxu0 %v5570
        %5607 = vmatprep.subr.bf16.mxu0 0
        %5608 = vmatpush1.bf16.msra.mxu0 %v5571
        %5609 = vmatprep.subr.bf16.mxu0 0
        %5610 = vmatpush1.bf16.msra.mxu0 %v5572
        %5611 = vmatprep.subr.bf16.mxu0 0
        %5612 = vmatpush1.bf16.msra.mxu0 %v5573
        %5613 = vmatprep.subr.bf16.mxu0 0
        %5614 = vmatpush1.bf16.msra.mxu0 %v5574
        %5615 = vmatprep.subr.bf16.mxu0 0
        %5616 = vmatpush1.bf16.msra.mxu0 %v5575
        %5617 = vmatprep.subr.bf16.mxu0 0
        %5618 = vmatpush1.bf16.msra.mxu0 %v5576
        %5619 = vmatprep.subr.bf16.mxu0 0
        %5620 = vmatpush1.bf16.msra.mxu0 %v5577
        %5621 = vmatprep.subr.bf16.mxu0 0
        %5622 = vmatpush1.bf16.msra.mxu0 %v5578
        %5623 = vmatprep.subr.bf16.mxu0 0
        %5624 = vmatpush1.bf16.msra.mxu0 %v5579
        %5625 = vmatprep.subr.bf16.mxu0 0
        %5626 = vmatpush1.bf16.msra.mxu0 %v5580
        %5627 = vmatprep.subr.bf16.mxu0 0
        %5628 = vmatpush1.bf16.msra.mxu0 %v5581
        %5629 = vmatprep.subr.bf16.mxu0 0
        %5630 = vmatpush1.bf16.msra.mxu0 %v5582
        %5631 = vmatprep.mubr.bf16.mxu0 %v5447
        %5632 = vmatmul.mubr.bf16.gmra.mrb[0].mxu0 %v5446
        %v5633 = vpop.f32.mrb[0].mxu0
        %v5634 = vadd.f32 %v5501, %v5633
        %v5635 = vpop.f32.mrb[0].mxu0
        %v5636 = vpop.f32.mrb[0].mxu0
        %v5637 = vadd.f32 %v5501, %v5636
        %v5638 = vpop.f32.mrb[0].mxu0
        %5639 = vmatprep.mubr.bf16.mxu0 %v5449
        %5640 = vmatmul.mubr.bf16.gmra.mrb[0].mxu0 %v5448
        %v5641 = vpop.f32.mrb[0].mxu0
        %v5642 = vadd.f32 %v5501, %v5641
        %v5643 = vpop.f32.mrb[0].mxu0
        %v5644 = vpop.f32.mrb[0].mxu0
        %v5645 = vadd.f32 %v5501, %v5644
        %v5646 = vpop.f32.mrb[0].mxu0
        %5647 = vmatprep.mubr.bf16.mxu0 %v5451
        %5648 = vmatmul.mubr.bf16.gmra.mrb[0].mxu0 %v5450
        %v5649 = vpop.f32.mrb[0].mxu0
        %v5650 = vadd.f32 %v5501, %v5649
        %v5651 = vpop.f32.mrb[0].mxu0
        %v5652 = vpop.f32.mrb[0].mxu0
        %v5653 = vadd.f32 %v5501, %v5652
        %v5654 = vpop.f32.mrb[0].mxu0
        %5655 = vmatprep.mubr.bf16.mxu0 %v5453
        %5656 = vmatmul.mubr.bf16.gmra.mrb[0].mxu0 %v5452
        %v5657 = vpop.f32.mrb[0].mxu0
        %v5658 = vadd.f32 %v5501, %v5657
        %v5659 = vpop.f32.mrb[0].mxu0
        %v5660 = vpop.f32.mrb[0].mxu0
        %v5661 = vadd.f32 %v5501, %v5660
        %v5662 = vpop.f32.mrb[0].mxu0
        %5663 = vmatprep.mubr.bf16.mxu0 %v5455
        %5664 = vmatmul.mubr.bf16.gmra.mrb[0].mxu0 %v5454
        %v5665 = vpop.f32.mrb[0].mxu0
        %v5666 = vadd.f32 %v5501, %v5665
        %v5667 = vpop.f32.mrb[0].mxu0
        %v5668 = vpop.f32.mrb[0].mxu0
        %v5669 = vadd.f32 %v5501, %v5668
        %v5670 = vpop.f32.mrb[0].mxu0
        %5671 = vmatprep.mubr.bf16.mxu0 %v5457
        %5672 = vmatmul.mubr.bf16.gmra.mrb[0].mxu0 %v5456
        %v5673 = vpop.f32.mrb[0].mxu0
        %v5674 = vadd.f32 %v5501, %v5673
        %v5675 = vpop.f32.mrb[0].mxu0
        %v5676 = vpop.f32.mrb[0].mxu0
        %v5677 = vadd.f32 %v5501, %v5676
        %v5678 = vpop.f32.mrb[0].mxu0
        %5679 = vmatprep.mubr.bf16.mxu0 %v5459
        %5680 = vmatmul.mubr.bf16.gmra.mrb[0].mxu0 %v5458
        %v5681 = vpop.f32.mrb[0].mxu0
        %v5682 = vadd.f32 %v5501, %v5681
        %v5683 = vpop.f32.mrb[0].mxu0
        %v5684 = vpop.f32.mrb[0].mxu0
        %v5685 = vadd.f32 %v5501, %v5684
        %v5686 = vpop.f32.mrb[0].mxu0
        %5687 = vmatprep.mubr.bf16.mxu0 %v5461
        %5688 = vmatmul.mubr.bf16.gmra.mrb[0].mxu0 %v5460
        %v5689 = vpop.f32.mrb[0].mxu0
        %v5690 = vadd.f32 %v5501, %v5689
        %v5691 = vpop.f32.mrb[0].mxu0
        %v5692 = vpop.f32.mrb[0].mxu0
        %v5693 = vadd.f32 %v5501, %v5692
        %v5694 = vpop.f32.mrb[0].mxu0
        %5695 = vdwg.mxu0
        %v5696 = vmax.f32 %v5634, 0.0
        %v5697 = vmax.f32 %v5637, 0.0
        %v5698 = vmax.f32 %v5642, 0.0
        %v5699 = vmax.f32 %v5645, 0.0
        %v5700 = vmax.f32 %v5650, 0.0
        %v5701 = vmax.f32 %v5653, 0.0
        %v5702 = vmax.f32 %v5658, 0.0
        %v5703 = vmax.f32 %v5661, 0.0
        %v5704 = vmax.f32 %v5666, 0.0
        %v5705 = vmax.f32 %v5669, 0.0
        %v5706 = vmax.f32 %v5674, 0.0
        %v5707 = vmax.f32 %v5677, 0.0
        %v5708 = vmax.f32 %v5682, 0.0
        %v5709 = vmax.f32 %v5685, 0.0
        %v5710 = vmax.f32 %v5690, 0.0
        %v5711 = vmax.f32 %v5693, 0.0
        %v5712 = vpack.c.bf16 %v5697, %v5696
        %v5713 = vpack.c.bf16 %v5699, %v5698
        %v5714 = vpack.c.bf16 %v5701, %v5700
        %v5715 = vpack.c.bf16 %v5703, %v5702
        %v5716 = vpack.c.bf16 %v5705, %v5704
        %v5717 = vpack.c.bf16 %v5707, %v5706
        %v5718 = vpack.c.bf16 %v5709, %v5708
        %v5719 = vpack.c.bf16 %v5711, %v5710
        %s5720 = scalar_lea.vmem [#allocation9], 64
        %v5721 = vld [vmem:[%s5720] sm:$0xf]
        %v5722 = vld [vmem:[%s5720 + $0x4] sm:$0xf]
        %v5723 = vld [vmem:[%s5720 + $0x8] sm:$0xf]
        %v5724 = vld [vmem:[%s5720 + $0xc] sm:$0xf]
        %v5725 = vld [vmem:[%s5720 + $0x10] sm:$0xf]
        %v5726 = vld [vmem:[%s5720 + $0x14] sm:$0xf]
        %v5727 = vld [vmem:[%s5720 + $0x18] sm:$0xf]
        %v5728 = vld [vmem:[%s5720 + $0x1c] sm:$0xf]
        %v5729 = vld [vmem:[%s5720 + $0x20] sm:$0xf]
        %v5730 = vld [vmem:[%s5720 + $0x24] sm:$0xf]
        %v5731 = vld [vmem:[%s5720 + $0x28] sm:$0xf]
        %v5732 = vld [vmem:[%s5720 + $0x2c] sm:$0xf]
        %v5733 = vld [vmem:[%s5720 + $0x30] sm:$0xf]
        %v5734 = vld [vmem:[%s5720 + $0x34] sm:$0xf]
        %v5735 = vld [vmem:[%s5720 + $0x38] sm:$0xf]
        %v5736 = vld [vmem:[%s5720 + $0x3c] sm:$0xf]
        %s5737 = scalar_lea.vmem %s16, 1
        %v5738 = vld [vmem:[%s5737] sm:$0x1]
        %v5740 = vlaneseq
        %v5741 = vshrl.u32 %v5740, 7
        %v5742 = vsub.s32 0, %v5741
        %v5743 = vrot.slane %v5738, %v5742
        %v5761 = vunpack.c.l.b16 %v5721
        %v5762 = vunpack.c.l.b16 %v5722
        %v5763 = vunpack.c.l.b16 %v5723
        %v5764 = vunpack.c.l.b16 %v5724
        %v5765 = vunpack.c.l.b16 %v5725
        %v5766 = vunpack.c.l.b16 %v5726
        %v5767 = vunpack.c.l.b16 %v5727
        %v5768 = vunpack.c.l.b16 %v5728
        %v5769 = vunpack.c.l.b16 %v5729
        %v5770 = vunpack.c.l.b16 %v5730
        %v5771 = vunpack.c.l.b16 %v5731
        %v5772 = vunpack.c.l.b16 %v5732
        %v5773 = vunpack.c.l.b16 %v5733
        %v5774 = vunpack.c.l.b16 %v5734
        %v5775 = vunpack.c.l.b16 %v5735
        %v5776 = vunpack.c.l.b16 %v5736
        %v5777 = vpack.c.b16 %v5762, %v5761
        %v5778 = vpack.c.b16 %v5764, %v5763
        %v5779 = vpack.c.b16 %v5766, %v5765
        %v5780 = vpack.c.b16 %v5768, %v5767
        %v5781 = vpack.c.b16 %v5770, %v5769
        %v5782 = vpack.c.b16 %v5772, %v5771
        %v5783 = vpack.c.b16 %v5774, %v5773
        %v5784 = vpack.c.b16 %v5776, %v5775
        %5793 = vmatprep.subr.bf16.mxu0 0
        %5794 = vmatpush1.bf16.msra.mxu0 %v5777
        %5795 = vmatprep.subr.bf16.mxu0 0
        %5796 = vmatpush1.bf16.msra.mxu0 %v5778
        %5797 = vmatprep.subr.bf16.mxu0 0
        %5798 = vmatpush1.bf16.msra.mxu0 %v5779
        %5799 = vmatprep.subr.bf16.mxu0 0
        %5800 = vmatpush1.bf16.msra.mxu0 %v5780
        %5801 = vmatprep.subr.bf16.mxu0 0
        %5802 = vmatpush1.bf16.msra.mxu0 %v5781
        %5803 = vmatprep.subr.bf16.mxu0 0
        %5804 = vmatpush1.bf16.msra.mxu0 %v5782
        %5805 = vmatprep.subr.bf16.mxu0 0
        %5806 = vmatpush1.bf16.msra.mxu0 %v5783
        %5807 = vmatprep.subr.bf16.mxu0 0
        %5808 = vmatpush1.bf16.msra.mxu0 %v5784
        %5809 = vmatprep.subr.bf16.mxu0 0
        %5810 = vmatpush1.bf16.msra.mxu0 0
        %5811 = vmatprep.subr.bf16.mxu0 0
        %5812 = vmatpush1.bf16.msra.mxu0 0
        %5813 = vmatprep.subr.bf16.mxu0 0
        %5814 = vmatpush1.bf16.msra.mxu0 0
        %5815 = vmatprep.subr.bf16.mxu0 0
        %5816 = vmatpush1.bf16.msra.mxu0 0
        %5817 = vmatprep.subr.bf16.mxu0 0
        %5818 = vmatpush1.bf16.msra.mxu0 0
        %5819 = vmatprep.subr.bf16.mxu0 0
        %5820 = vmatpush1.bf16.msra.mxu0 0
        %5821 = vmatprep.subr.bf16.mxu0 0
        %5822 = vmatpush1.bf16.msra.mxu0 0
        %5823 = vmatprep.subr.bf16.mxu0 0
        %5824 = vmatpush1.bf16.msra.mxu0 0
        %5825 = vmatprep.mubr.bf16.mxu0 0
        %5826 = vmatmul.mubr.bf16.gmra.mrb[0].mxu0 %v5712
        %v5827 = vpop.f32.mrb[0].mxu0
        %v5828 = vadd.f32 %v5743, %v5827
        %v5829 = vpop.f32.mrb[0].mxu0
        %v5830 = vpop.f32.mrb[0].mxu0
        %v5831 = vadd.f32 %v5743, %v5830
        %v5832 = vpop.f32.mrb[0].mxu0
        %5833 = vmatprep.mubr.bf16.mxu0 0
        %5834 = vmatmul.mubr.bf16.gmra.mrb[0].mxu0 %v5713
        %v5835 = vpop.f32.mrb[0].mxu0
        %v5836 = vadd.f32 %v5743, %v5835
        %v5837 = vpop.f32.mrb[0].mxu0
        %v5838 = vpop.f32.mrb[0].mxu0
        %v5839 = vadd.f32 %v5743, %v5838
        %v5840 = vpop.f32.mrb[0].mxu0
        %5841 = vmatprep.mubr.bf16.mxu0 0
        %5842 = vmatmul.mubr.bf16.gmra.mrb[0].mxu0 %v5714
        %v5843 = vpop.f32.mrb[0].mxu0
        %v5844 = vadd.f32 %v5743, %v5843
        %v5845 = vpop.f32.mrb[0].mxu0
        %v5846 = vpop.f32.mrb[0].mxu0
        %v5847 = vadd.f32 %v5743, %v5846
        %v5848 = vpop.f32.mrb[0].mxu0
        %5849 = vmatprep.mubr.bf16.mxu0 0
        %5850 = vmatmul.mubr.bf16.gmra.mrb[0].mxu0 %v5715
        %v5851 = vpop.f32.mrb[0].mxu0
        %v5852 = vadd.f32 %v5743, %v5851
        %v5853 = vpop.f32.mrb[0].mxu0
        %v5854 = vpop.f32.mrb[0].mxu0
        %v5855 = vadd.f32 %v5743, %v5854
        %v5856 = vpop.f32.mrb[0].mxu0
        %5857 = vmatprep.mubr.bf16.mxu0 0
        %5858 = vmatmul.mubr.bf16.gmra.mrb[0].mxu0 %v5716
        %v5859 = vpop.f32.mrb[0].mxu0
        %v5860 = vadd.f32 %v5743, %v5859
        %v5861 = vpop.f32.mrb[0].mxu0
        %v5862 = vpop.f32.mrb[0].mxu0
        %v5863 = vadd.f32 %v5743, %v5862
        %v5864 = vpop.f32.mrb[0].mxu0
        %5865 = vmatprep.mubr.bf16.mxu0 0
        %5866 = vmatmul.mubr.bf16.gmra.mrb[0].mxu0 %v5717
        %v5867 = vpop.f32.mrb[0].mxu0
        %v5868 = vadd.f32 %v5743, %v5867
        %v5869 = vpop.f32.mrb[0].mxu0
        %v5870 = vpop.f32.mrb[0].mxu0
        %v5871 = vadd.f32 %v5743, %v5870
        %v5872 = vpop.f32.mrb[0].mxu0
        %5873 = vmatprep.mubr.bf16.mxu0 0
        %5874 = vmatmul.mubr.bf16.gmra.mrb[0].mxu0 %v5718
        %v5875 = vpop.f32.mrb[0].mxu0
        %v5876 = vadd.f32 %v5743, %v5875
        %v5877 = vpop.f32.mrb[0].mxu0
        %v5878 = vpop.f32.mrb[0].mxu0
        %v5879 = vadd.f32 %v5743, %v5878
        %v5880 = vpop.f32.mrb[0].mxu0
        %5881 = vmatprep.mubr.bf16.mxu0 0
        %5882 = vmatmul.mubr.bf16.gmra.mrb[0].mxu0 %v5719
        %v5883 = vpop.f32.mrb[0].mxu0
        %v5884 = vadd.f32 %v5743, %v5883
        %v5885 = vpop.f32.mrb[0].mxu0
        %v5886 = vpop.f32.mrb[0].mxu0
        %v5887 = vadd.f32 %v5743, %v5886
        %v5888 = vpop.f32.mrb[0].mxu0
        %5889 = vdwg.mxu0
        %v5890 = vmax.f32 %v5828, 0.0
        %v5891 = vmax.f32 %v5831, 0.0
        %v5892 = vmax.f32 %v5836, 0.0
        %v5893 = vmax.f32 %v5839, 0.0
        %v5894 = vmax.f32 %v5844, 0.0
        %v5895 = vmax.f32 %v5847, 0.0
        %v5896 = vmax.f32 %v5852, 0.0
        %v5897 = vmax.f32 %v5855, 0.0
        %v5898 = vmax.f32 %v5860, 0.0
        %v5899 = vmax.f32 %v5863, 0.0
        %v5900 = vmax.f32 %v5868, 0.0
        %v5901 = vmax.f32 %v5871, 0.0
        %v5902 = vmax.f32 %v5876, 0.0
        %v5903 = vmax.f32 %v5879, 0.0
        %v5904 = vmax.f32 %v5884, 0.0
        %v5905 = vmax.f32 %v5887, 0.0
        %s5906 = scalar_lea.vmem %s17, 4
        %v5907 = vld [vmem:[%s5906] sm:$0x7]
        %s5908 = scalar_lea.vmem %s18, 4
        %v5909 = vld [vmem:[%s5908] sm:$0x7]
        %5911 = vset.pattern.permute.xlu0 0
        %5912 = vperm.xlu0 %5911, %v5909
        %v5913 = vpop.permute.xlu0 %5912
        %5915 = vmatprep.subr.mxu0 0.0
        %5916 = vmatpush1.xpose.msra.mxu0 %v5890
        %5917 = vmatprep.subr.mxu0 0.0
        %5918 = vmatpush1.xpose.msra.mxu0 %v5891
        %5919 = vmatprep.subr.mxu0 0.0
        %5920 = vmatpush1.xpose.msra.mxu0 %v5892
        %5921 = vmatprep.subr.mxu0 0.0
        %5922 = vmatpush1.xpose.msra.mxu0 %v5893
        %5923 = vmatprep.subr.mxu0 0.0
        %5924 = vmatpush1.xpose.msra.mxu0 %v5894
        %5925 = vmatprep.subr.mxu0 0.0
        %5926 = vmatpush1.xpose.msra.mxu0 %v5895
        %5927 = vmatprep.subr.mxu0 0.0
        %5928 = vmatpush1.xpose.msra.mxu0 %v5896
        %5929 = vmatprep.subr.mxu0 0.0
        %5930 = vmatpush1.xpose.msra.mxu0 %v5897
        %5931 = vmatprep.subr.mxu0 0.0
        %5932 = vmatpush1.xpose.msra.mxu0 %v5898
        %5933 = vmatprep.subr.mxu0 0.0
        %5934 = vmatpush1.xpose.msra.mxu0 %v5899
        %5935 = vmatprep.subr.mxu0 0.0
        %5936 = vmatpush1.xpose.msra.mxu0 %v5900
        %5937 = vmatprep.subr.mxu0 0.0
        %5938 = vmatpush1.xpose.msra.mxu0 %v5901
        %5939 = vmatprep.subr.mxu0 0.0
        %5940 = vmatpush1.xpose.msra.mxu0 %v5902
        %5941 = vmatprep.subr.mxu0 0.0
        %5942 = vmatpush1.xpose.msra.mxu0 %v5903
        %5943 = vmatprep.subr.mxu0 0.0
        %5944 = vmatpush1.xpose.msra.mxu0 %v5904
        %5945 = vmatprep.subr.mxu0 0.0
        %5946 = vmatpush1.xpose.msra.mxu0 %v5905
        %5947 = vmatprep.subr.mxu0 0.0
        %5948 = vmatpush1.xpose.msra.mxu0 0.0
        %5949 = vmatprep.subr.mxu0 0.0
        %5950 = vmatpush1.xpose.msra.mxu0 0.0
        %5951 = vmatprep.subr.mxu0 0.0
        %5952 = vmatpush1.xpose.msra.mxu0 0.0
        %5953 = vmatprep.subr.mxu0 0.0
        %5954 = vmatpush1.xpose.msra.mxu0 0.0
        %5955 = vmatprep.subr.mxu0 0.0
        %5956 = vmatpush1.xpose.msra.mxu0 0.0
        %5957 = vmatprep.subr.mxu0 0.0
        %5958 = vmatpush1.xpose.msra.mxu0 0.0
        %5959 = vmatprep.subr.mxu0 0.0
        %5960 = vmatpush1.xpose.msra.mxu0 0.0
        %5961 = vmatprep.subr.mxu0 0.0
        %5962 = vmatpush1.xpose.msra.mxu0 0.0
        %5963 = vmatprep.subr.mxu0 0.0
        %5964 = vmatpush1.xpose.msra.mxu0 0.0
        %5965 = vmatprep.subr.mxu0 0.0
        %5966 = vmatpush1.xpose.msra.mxu0 0.0
        %5967 = vmatprep.subr.mxu0 0.0
        %5968 = vmatpush1.xpose.msra.mxu0 0.0
        %5969 = vmatprep.subr.mxu0 0.0
        %5970 = vmatpush1.xpose.msra.mxu0 0.0
        %5971 = vmatprep.subr.mxu0 0.0
        %5972 = vmatpush1.xpose.msra.mxu0 0.0
        %5973 = vmatprep.subr.mxu0 0.0
        %5974 = vmatpush1.xpose.msra.mxu0 0.0
        %5975 = vmatprep.subr.mxu0 0.0
        %5976 = vmatpush1.xpose.msra.mxu0 0.0
        %5977 = vmatprep.subr.mxu0 0.0
        %5978 = vmatpush1.xpose.msra.mxu0 0.0
        %5979 = vmatprep.mubr.f32.mxu0 0.0
        %5980 = vmatmul.mubr.f32.gmra.mrb[0].mxu0 %v5907
        %v5981 = vpop.f32.mrb[0].mxu0
        %v5982 = vadd.f32 %v5913, %v5981
        %v5983 = vpop.f32.mrb[0].mxu0
        %5984 = vdwg.mxu0
        %v5985 = vtanh.pop %v5982
        %5986 = vst [vmem:[%s691 + $0x4] sm:$0x7] %v5985
        %p5987 = scmp.lt.s32.totalorder %s33, 1
        %s5988 = scalar_select %p5987, %s33, 1
        %s5989 = smul.addr %s5988, 2
        %s5990 = smul.addr %s5989, 4
        %s5991 = scalar_lea.vmem %s19, %s5990
        // Predicated region
        $region117: #{tpu_custom_call.1} parent=95 // pred_check
          %p5992 = pneg %p460
        $region118: #{tpu_custom_call.1} parent=95 // pred_check_branch
          %5994 = sbr.rel (%p5992) target = $region120
        $region119: #{tpu_custom_call.1} parent=95 // pred_region
          _
        $region120: #{tpu_custom_call.1} parent=95 // pred_fallthru
          _
      $region96: #{tpu_custom_call.1} parent=5 // pred_fallthru
        _
      %p5995 = scmp.le.s32.totalorder 2, %s28
      // Predicated region
      $region121: #{tpu_custom_call.1} parent=5 // pred_check
        %p5996 = pneg %p5995
      $region122: #{tpu_custom_call.1} parent=5 // pred_check_branch
        %5998 = sbr.rel (%p5996) target = $region124
      $region123: #{tpu_custom_call.1} parent=5 // pred_region
        %s5999 = ssub.s32 %s28, 2
        // Predicated region
        $region125: #{tpu_custom_call.1} parent=123 // pred_check
          %p6000 = pneg %p466
        $region126: #{tpu_custom_call.1} parent=123 // pred_check_branch
          %6002 = sbr.rel (%p6000) target = $region128
        $region127: #{tpu_custom_call.1} parent=123 // pred_region
          %p6003 = scmp.lt.s32.totalorder %s34, 1
          %s6004 = scalar_select %p6003, %s34, 1
          %s6005 = smul.addr %s6004, 2
          %s6006 = smul.addr %s6005, 4
          %s6007 = scalar_lea.vmem %s19, %s6006
        $region128: #{tpu_custom_call.1} parent=123 // pred_fallthru
          _
      $region124: #{tpu_custom_call.1} parent=5 // pred_fallthru
        _
    $region6: #{tpu_custom_call.1} parent=1 // loop_footer
      %s32 = sadd.s32 1, %s28
    $region7: #{tpu_custom_call.1} parent=1 // loop_footer_branch
      %27 = sbr.rel target = $region3
    $region8: #{tpu_custom_call.1} parent=1 // loop_exit
      _
    %6008 = vsyncpa [#allocation3], 1
    %s6009 = scalar_lea.sflag [#allocation3], 1
    %6010 = vsyncpa %s6009, 1
    %6011 = vsyncpa [#allocation5], 1
    %6012 = vsyncpa [#allocation8], 1

</llo_original>
